<compile_context>
chip_gen: v5e
topology: v5e:2x2
jax: 0.10.0
libtpu: 0.0.40
codegen_flags: <defaults>
</compile_context>

<pallas_src>
import jax
import jax.numpy as jnp
from jax.experimental import pallas as pl
from jax.experimental.pallas import tpu as pltpu


HIDDEN = 768          # deberta hidden_size
D1 = 512              # head MLP hidden
N_HEADS = 13          # n_supervision
HEADS_PER_STEP = 4    # heads processed per grid step
N_PAD = 16            # 13 padded up to a multiple of HEADS_PER_STEP
N_CHUNKS = N_PAD // HEADS_PER_STEP


def _heads_kernel(x_ref, w1_ref, b1_ref, w2_ref, b2_ref, out_ref):
    """One grid step == one chunk of HEADS_PER_STEP regression heads.

    x_ref   : [B, H]        bf16 CLS embeddings (resident across all steps)
    w1_ref  : [K, H, D1]    bf16 first-layer weights for this chunk (streamed)
    b1_ref  : [C, K, D1]    f32 first-layer biases, all chunks (resident)
    w2_ref  : [C, K, D1]    f32 second-layer weights (Linear(512,1) rows)
    b2_ref  : [C, K, 1]     f32 second-layer biases
    out_ref : [1, K, B]     per-head outputs for the whole batch
    """
    c = pl.program_id(0)
    k_heads = w1_ref.shape[0]

    x = x_ref[...]                     # [B, H] bf16
    b1 = b1_ref[c]                     # [K, D1] f32 (this chunk's rows)
    w2 = w2_ref[c]                     # [K, D1] f32
    b2 = b2_ref[c]                     # [K, 1]  f32

    ys = []
    for k in range(k_heads):           # static unroll over heads in the chunk
        # Layer 1 on the MXU with f32 accumulation: [B,H] @ [H,D1] -> [B,D1].
        h = jnp.dot(x, w1_ref[k], preferred_element_type=jnp.float32)
        h = jnp.maximum(h + b1[k][None, :], 0.0)       # bias + ReLU (VPU)
        # Layer 2: Linear(D1 -> 1) as elementwise multiply + lane reduction,
        # avoiding a degenerate [D1, 1] matmul.
        ys.append(jnp.sum(h * w2[k][None, :], axis=-1)[None, :])   # [1, B]

    y = jnp.concatenate(ys, axis=0)    # [K, B]
    out_ref[0] = (y + b2).astype(out_ref.dtype)


def prepare_head_params(w1, b1, w2, b2, heads_per_step=HEADS_PER_STEP):
    """One-time packing of PyTorch-layout head params for the kernel.

    w1: [n, H, D1] f32, b1: [n, D1], w2: [n, D1], b2: [n, 1].
    Returns (w1p bf16 [n_pad,H,D1], b1p [C,K,D1], w2p [C,K,D1], b2p [C,K,1]).
    """
    n, _, d1 = w1.shape
    n_pad = pl.cdiv(n, heads_per_step) * heads_per_step
    pad = n_pad - n
    c = n_pad // heads_per_step
    w1p = jnp.pad(w1, ((0, pad), (0, 0), (0, 0))).astype(jnp.bfloat16)
    b1p = jnp.pad(b1, ((0, pad), (0, 0))).reshape(c, heads_per_step, d1)
    w2p = jnp.pad(w2, ((0, pad), (0, 0))).reshape(c, heads_per_step, d1)
    b2p = jnp.pad(b2, ((0, pad), (0, 0))).reshape(c, heads_per_step, 1)
    return w1p, b1p, w2p, b2p


def deberta_heads_forward(x, w1p, b1p, w2p, b2p, n_heads=N_HEADS):
    """x: [B, H] f32 CLS embeddings; packed params from prepare_head_params.

    Returns [B, n_heads] f32, matching torch.cat(heads_out, dim=1).
    """
    B, H = x.shape
    n_chunks, k_heads, d1 = b1p.shape

    x_bf = x.astype(jnp.bfloat16)      # halve x bytes; f32 accumulation in-kernel

    out_ckb = pl.pallas_call(
        _heads_kernel,
        out_shape=jax.ShapeDtypeStruct((n_chunks, k_heads, B), jnp.float32),
        grid_spec=pltpu.PrefetchScalarGridSpec(
            num_scalar_prefetch=0,
            grid=(n_chunks,),
            in_specs=[
                pl.BlockSpec((B, H), lambda c: (0, 0)),                 # x (resident)
                pl.BlockSpec((k_heads, H, d1), lambda c: (c, 0, 0)),    # W1 chunk (streamed)
                pl.BlockSpec((n_chunks, k_heads, d1), lambda c: (0, 0, 0)),  # b1 (resident)
                pl.BlockSpec((n_chunks, k_heads, d1), lambda c: (0, 0, 0)),  # w2 (resident)
                pl.BlockSpec((n_chunks, k_heads, 1), lambda c: (0, 0, 0)),   # b2 (resident)
            ],
            out_specs=pl.BlockSpec((1, k_heads, B), lambda c: (c, 0, 0)),
        ),
        compiler_params=pltpu.CompilerParams(
            dimension_semantics=("parallel",),   # head chunks shard across TCs (v7x)
        ),
    )(x_bf, w1p, b1p, w2p, b2p)

    out_hb = out_ckb.reshape(n_chunks * k_heads, B)   # [n_pad, B]
    return out_hb[:n_heads].T                         # [B, n_heads]


def _init_params(key, n_heads, hidden, d1):
    """Deterministic PyTorch-Linear-style init (uniform +-1/sqrt(fan_in))."""
    k1, k2, k3, k4 = jax.random.split(key, 4)
    lim1 = 1.0 / (hidden ** 0.5)
    lim2 = 1.0 / (d1 ** 0.5)
    w1 = jax.random.uniform(k1, (n_heads, hidden, d1), jnp.float32, -lim1, lim1)
    b1 = jax.random.uniform(k2, (n_heads, d1), jnp.float32, -lim1, lim1)
    w2 = jax.random.uniform(k3, (n_heads, d1), jnp.float32, -lim2, lim2)
    b2 = jax.random.uniform(k4, (n_heads, 1), jnp.float32, -lim2, lim2)
    return w1, b1, w2, b2


def _reference(x, w1, b1, w2, b2):
    """Pure-JAX f32 reference matching the PyTorch head loop."""
    outs = []
    for h in range(w1.shape[0]):
        hid = jnp.maximum(x @ w1[h] + b1[h], 0.0)
        outs.append(hid @ w2[h][:, None] + b2[h])    # [B, 1]
    return jnp.concatenate(outs, axis=1)             # [B, n_heads]


if __name__ == "__main__":
    # Shapes implied by the module: hidden_size=768 (deberta), head MLP
    # 768->512->1, n_supervision=13 heads; small batch of CLS embeddings.
    B = 8

    key = jax.random.PRNGKey(0)
    kx, kp = jax.random.split(key)
    # Stand-in for self.deberta(...)[0][:, 0, :] (CLS embeddings).
    model_out = jax.random.normal(kx, (B, HIDDEN), dtype=jnp.float32)
    w1, b1, w2, b2 = _init_params(kp, N_HEADS, HIDDEN, D1)

    # One-time weight packing (bf16 W1 storage, chunk-major small params).
    w1p, b1p, w2p, b2p = prepare_head_params(w1, b1, w2, b2)

    out = deberta_heads_forward(model_out, w1p, b1p, w2p, b2p)
    out = jax.block_until_ready(out)

    ref = _reference(model_out, w1, b1, w2, b2)
    assert out.shape == (B, N_HEADS), out.shape
    # bf16 weight/activation storage (f32 accumulation) vs full-f32 reference.
    assert jnp.allclose(out, ref, atol=3e-2, rtol=3e-2), (
        float(jnp.max(jnp.abs(out - ref))))

    print("KERNEL_OK")
</pallas_src>

<mosaic_0001>
module attributes {stable_mosaic.version = 11 : i64} {
  func.func @_heads_kernel(%arg0: i32, %arg1: memref<8x768xbf16, #tpu.memory_space<vmem>>, %arg2: memref<4x768x512xbf16, #tpu.memory_space<vmem>>, %arg3: memref<4x4x512xf32, #tpu.memory_space<vmem>>, %arg4: memref<4x4x512xf32, #tpu.memory_space<vmem>>, %arg5: memref<4x4x1xf32, #tpu.memory_space<vmem>>, %arg6: memref<1x4x8xf32, #tpu.memory_space<vmem>>) attributes {dimension_semantics = [#tpu.dimension_semantics<parallel>], iteration_bounds = array<i64: 4>, scalar_prefetch = 0 : i64, scratch_operands = 0 : i64, tpu.core_type = #tpu.core_type<tc>, window_params = [{pipeline_mode = #tpu.pipeline_mode<synchronous>, transform_indices = @transform_0, window_bounds = array<i64: 8, 768>}, {transform_indices = @transform_1, window_bounds = array<i64: 4, 768, 512>}, {pipeline_mode = #tpu.pipeline_mode<synchronous>, transform_indices = @transform_2, window_bounds = array<i64: 4, 4, 512>}, {pipeline_mode = #tpu.pipeline_mode<synchronous>, transform_indices = @transform_3, window_bounds = array<i64: 4, 4, 512>}, {pipeline_mode = #tpu.pipeline_mode<synchronous>, transform_indices = @transform_4, window_bounds = array<i64: 4, 4, 1>}, {transform_indices = @transform_5, window_bounds = array<i64: 1, 4, 8>}]} {
    %c0 = arith.constant 0 : index
    %c0_0 = arith.constant 0 : index
    %0 = vector.load %arg1[%c0, %c0_0] : memref<8x768xbf16, #tpu.memory_space<vmem>>, vector<8x768xbf16>
    %1 = arith.index_cast %arg0 : i32 to index
    %c0_1 = arith.constant 0 : index
    %c0_2 = arith.constant 0 : index
    %2 = vector.load %arg3[%1, %c0_1, %c0_2] : memref<4x4x512xf32, #tpu.memory_space<vmem>>, vector<1x4x512xf32>
    %3 = vector.shape_cast %2 : vector<1x4x512xf32> to vector<4x512xf32>
    %4 = arith.index_cast %arg0 : i32 to index
    %c0_3 = arith.constant 0 : index
    %c0_4 = arith.constant 0 : index
    %5 = vector.load %arg4[%4, %c0_3, %c0_4] : memref<4x4x512xf32, #tpu.memory_space<vmem>>, vector<1x4x512xf32>
    %6 = vector.shape_cast %5 : vector<1x4x512xf32> to vector<4x512xf32>
    %7 = arith.index_cast %arg0 : i32 to index
    %c0_5 = arith.constant 0 : index
    %c0_6 = arith.constant 0 : index
    %8 = vector.load %arg5[%7, %c0_5, %c0_6] : memref<4x4x1xf32, #tpu.memory_space<vmem>>, vector<1x4x1xf32>
    %9 = vector.shape_cast %8 : vector<1x4x1xf32> to vector<4x1xf32>
    %c0_7 = arith.constant 0 : index
    %c0_8 = arith.constant 0 : index
    %c0_9 = arith.constant 0 : index
    %10 = vector.load %arg2[%c0_7, %c0_8, %c0_9] : memref<4x768x512xbf16, #tpu.memory_space<vmem>>, vector<1x768x512xbf16>
    %11 = vector.shape_cast %10 : vector<1x768x512xbf16> to vector<768x512xbf16>
    %cst = arith.constant dense<0.000000e+00> : vector<8x512xf32>
    %12 = tpu.matmul %0, %11, %cst {dimension_numbers = #tpu.dot_dimension_numbers<[1], [0], [0], [1], [0, 0, 1, 1], [], []>} : vector<8x768xbf16>, vector<768x512xbf16>, vector<8x512xf32> -> vector<8x512xf32>
    %13 = vector.extract_strided_slice %3 {offsets = [0, 0], sizes = [1, 512], strides = [1, 1]} : vector<4x512xf32> to vector<1x512xf32>
    %14 = vector.shape_cast %13 : vector<1x512xf32> to vector<512xf32>
    %15 = vector.shape_cast %14 : vector<512xf32> to vector<1x512xf32>
    %16 = vector.broadcast %15 : vector<1x512xf32> to vector<8x512xf32>
    %17 = arith.addf %12, %16 : vector<8x512xf32>
    %cst_10 = arith.constant 0.000000e+00 : f32
    %18 = vector.broadcast %cst_10 : f32 to vector<8x512xf32>
    %19 = arith.maximumf %17, %18 : vector<8x512xf32>
    %20 = vector.extract_strided_slice %6 {offsets = [0, 0], sizes = [1, 512], strides = [1, 1]} : vector<4x512xf32> to vector<1x512xf32>
    %21 = vector.shape_cast %20 : vector<1x512xf32> to vector<512xf32>
    %22 = vector.shape_cast %21 : vector<512xf32> to vector<1x512xf32>
    %23 = vector.broadcast %22 : vector<1x512xf32> to vector<8x512xf32>
    %24 = arith.mulf %19, %23 : vector<8x512xf32>
    %cst_11 = arith.constant dense<0.000000e+00> : vector<8xf32>
    %25 = vector.multi_reduction <add>, %24, %cst_11 [1] : vector<8x512xf32> to vector<8xf32>
    %26 = vector.shape_cast %25 : vector<8xf32> to vector<1x8xf32>
    %c1 = arith.constant 1 : index
    %c0_12 = arith.constant 0 : index
    %c0_13 = arith.constant 0 : index
    %27 = vector.load %arg2[%c1, %c0_12, %c0_13] : memref<4x768x512xbf16, #tpu.memory_space<vmem>>, vector<1x768x512xbf16>
    %28 = vector.shape_cast %27 : vector<1x768x512xbf16> to vector<768x512xbf16>
    %cst_14 = arith.constant dense<0.000000e+00> : vector<8x512xf32>
    %29 = tpu.matmul %0, %28, %cst_14 {dimension_numbers = #tpu.dot_dimension_numbers<[1], [0], [0], [1], [0, 0, 1, 1], [], []>} : vector<8x768xbf16>, vector<768x512xbf16>, vector<8x512xf32> -> vector<8x512xf32>
    %30 = vector.extract_strided_slice %3 {offsets = [1, 0], sizes = [1, 512], strides = [1, 1]} : vector<4x512xf32> to vector<1x512xf32>
    %31 = vector.shape_cast %30 : vector<1x512xf32> to vector<512xf32>
    %32 = vector.shape_cast %31 : vector<512xf32> to vector<1x512xf32>
    %33 = vector.broadcast %32 : vector<1x512xf32> to vector<8x512xf32>
    %34 = arith.addf %29, %33 : vector<8x512xf32>
    %cst_15 = arith.constant 0.000000e+00 : f32
    %35 = vector.broadcast %cst_15 : f32 to vector<8x512xf32>
    %36 = arith.maximumf %34, %35 : vector<8x512xf32>
    %37 = vector.extract_strided_slice %6 {offsets = [1, 0], sizes = [1, 512], strides = [1, 1]} : vector<4x512xf32> to vector<1x512xf32>
    %38 = vector.shape_cast %37 : vector<1x512xf32> to vector<512xf32>
    %39 = vector.shape_cast %38 : vector<512xf32> to vector<1x512xf32>
    %40 = vector.broadcast %39 : vector<1x512xf32> to vector<8x512xf32>
    %41 = arith.mulf %36, %40 : vector<8x512xf32>
    %cst_16 = arith.constant dense<0.000000e+00> : vector<8xf32>
    %42 = vector.multi_reduction <add>, %41, %cst_16 [1] : vector<8x512xf32> to vector<8xf32>
    %43 = vector.shape_cast %42 : vector<8xf32> to vector<1x8xf32>
    %c2 = arith.constant 2 : index
    %c0_17 = arith.constant 0 : index
    %c0_18 = arith.constant 0 : index
    %44 = vector.load %arg2[%c2, %c0_17, %c0_18] : memref<4x768x512xbf16, #tpu.memory_space<vmem>>, vector<1x768x512xbf16>
    %45 = vector.shape_cast %44 : vector<1x768x512xbf16> to vector<768x512xbf16>
    %cst_19 = arith.constant dense<0.000000e+00> : vector<8x512xf32>
    %46 = tpu.matmul %0, %45, %cst_19 {dimension_numbers = #tpu.dot_dimension_numbers<[1], [0], [0], [1], [0, 0, 1, 1], [], []>} : vector<8x768xbf16>, vector<768x512xbf16>, vector<8x512xf32> -> vector<8x512xf32>
    %47 = vector.extract_strided_slice %3 {offsets = [2, 0], sizes = [1, 512], strides = [1, 1]} : vector<4x512xf32> to vector<1x512xf32>
    %48 = vector.shape_cast %47 : vector<1x512xf32> to vector<512xf32>
    %49 = vector.shape_cast %48 : vector<512xf32> to vector<1x512xf32>
    %50 = vector.broadcast %49 : vector<1x512xf32> to vector<8x512xf32>
    %51 = arith.addf %46, %50 : vector<8x512xf32>
    %cst_20 = arith.constant 0.000000e+00 : f32
    %52 = vector.broadcast %cst_20 : f32 to vector<8x512xf32>
    %53 = arith.maximumf %51, %52 : vector<8x512xf32>
    %54 = vector.extract_strided_slice %6 {offsets = [2, 0], sizes = [1, 512], strides = [1, 1]} : vector<4x512xf32> to vector<1x512xf32>
    %55 = vector.shape_cast %54 : vector<1x512xf32> to vector<512xf32>
    %56 = vector.shape_cast %55 : vector<512xf32> to vector<1x512xf32>
    %57 = vector.broadcast %56 : vector<1x512xf32> to vector<8x512xf32>
    %58 = arith.mulf %53, %57 : vector<8x512xf32>
    %cst_21 = arith.constant dense<0.000000e+00> : vector<8xf32>
    %59 = vector.multi_reduction <add>, %58, %cst_21 [1] : vector<8x512xf32> to vector<8xf32>
    %60 = vector.shape_cast %59 : vector<8xf32> to vector<1x8xf32>
    %c3 = arith.constant 3 : index
    %c0_22 = arith.constant 0 : index
    %c0_23 = arith.constant 0 : index
    %61 = vector.load %arg2[%c3, %c0_22, %c0_23] : memref<4x768x512xbf16, #tpu.memory_space<vmem>>, vector<1x768x512xbf16>
    %62 = vector.shape_cast %61 : vector<1x768x512xbf16> to vector<768x512xbf16>
    %cst_24 = arith.constant dense<0.000000e+00> : vector<8x512xf32>
    %63 = tpu.matmul %0, %62, %cst_24 {dimension_numbers = #tpu.dot_dimension_numbers<[1], [0], [0], [1], [0, 0, 1, 1], [], []>} : vector<8x768xbf16>, vector<768x512xbf16>, vector<8x512xf32> -> vector<8x512xf32>
    %64 = vector.extract_strided_slice %3 {offsets = [3, 0], sizes = [1, 512], strides = [1, 1]} : vector<4x512xf32> to vector<1x512xf32>
    %65 = vector.shape_cast %64 : vector<1x512xf32> to vector<512xf32>
    %66 = vector.shape_cast %65 : vector<512xf32> to vector<1x512xf32>
    %67 = vector.broadcast %66 : vector<1x512xf32> to vector<8x512xf32>
    %68 = arith.addf %63, %67 : vector<8x512xf32>
    %cst_25 = arith.constant 0.000000e+00 : f32
    %69 = vector.broadcast %cst_25 : f32 to vector<8x512xf32>
    %70 = arith.maximumf %68, %69 : vector<8x512xf32>
    %71 = vector.extract_strided_slice %6 {offsets = [3, 0], sizes = [1, 512], strides = [1, 1]} : vector<4x512xf32> to vector<1x512xf32>
    %72 = vector.shape_cast %71 : vector<1x512xf32> to vector<512xf32>
    %73 = vector.shape_cast %72 : vector<512xf32> to vector<1x512xf32>
    %74 = vector.broadcast %73 : vector<1x512xf32> to vector<8x512xf32>
    %75 = arith.mulf %70, %74 : vector<8x512xf32>
    %cst_26 = arith.constant dense<0.000000e+00> : vector<8xf32>
    %76 = vector.multi_reduction <add>, %75, %cst_26 [1] : vector<8x512xf32> to vector<8xf32>
    %77 = vector.shape_cast %76 : vector<8xf32> to vector<1x8xf32>
    %78 = tpu.concatenate %26, %43, %60, %77 in 0 : vector<1x8xf32>, vector<1x8xf32>, vector<1x8xf32>, vector<1x8xf32> -> vector<4x8xf32>
    %79 = vector.broadcast %9 : vector<4x1xf32> to vector<4x8xf32>
    %80 = arith.addf %78, %79 : vector<4x8xf32>
    %c0_27 = arith.constant 0 : index
    %c0_28 = arith.constant 0 : index
    %c0_29 = arith.constant 0 : index
    %81 = vector.load %arg6[%c0_27, %c0_28, %c0_29] : memref<1x4x8xf32, #tpu.memory_space<vmem>>, vector<1x4x8xf32>
    %82 = vector.shape_cast %81 : vector<1x4x8xf32> to vector<4x8xf32>
    %83 = vector.shape_cast %80 : vector<4x8xf32> to vector<1x4x8xf32>
    tpu.vector_store %arg6[%c0_27, %c0_28, %c0_29], %83 {strides = array<i32>} : memref<1x4x8xf32, #tpu.memory_space<vmem>>, vector<1x4x8xf32>,
    return
  }
  func.func @transform_0(%arg0: i32) -> (i32, i32) {
    %c0_i32 = arith.constant 0 : i32
    %c0_i32_0 = arith.constant 0 : i32
    %c0_i32_1 = arith.constant 0 : i32
    return %c0_i32, %c0_i32_0 : i32, i32
  }
  func.func @transform_1(%arg0: i32) -> (i32, i32, i32) {
    %c0_i32 = arith.constant 0 : i32
    %c0_i32_0 = arith.constant 0 : i32
    %c0_i32_1 = arith.constant 0 : i32
    return %arg0, %c0_i32, %c0_i32_0 : i32, i32, i32
  }
  func.func @transform_2(%arg0: i32) -> (i32, i32, i32) {
    %c0_i32 = arith.constant 0 : i32
    %c0_i32_0 = arith.constant 0 : i32
    %c0_i32_1 = arith.constant 0 : i32
    %c0_i32_2 = arith.constant 0 : i32
    return %c0_i32, %c0_i32_0, %c0_i32_1 : i32, i32, i32
  }
  func.func @transform_3(%arg0: i32) -> (i32, i32, i32) {
    %c0_i32 = arith.constant 0 : i32
    %c0_i32_0 = arith.constant 0 : i32
    %c0_i32_1 = arith.constant 0 : i32
    %c0_i32_2 = arith.constant 0 : i32
    return %c0_i32, %c0_i32_0, %c0_i32_1 : i32, i32, i32
  }
  func.func @transform_4(%arg0: i32) -> (i32, i32, i32) {
    %c0_i32 = arith.constant 0 : i32
    %c0_i32_0 = arith.constant 0 : i32
    %c0_i32_1 = arith.constant 0 : i32
    %c0_i32_2 = arith.constant 0 : i32
    return %c0_i32, %c0_i32_0, %c0_i32_1 : i32, i32, i32
  }
  func.func @transform_5(%arg0: i32) -> (i32, i32, i32) {
    %c0_i32 = arith.constant 0 : i32
    %c0_i32_0 = arith.constant 0 : i32
    %c0_i32_1 = arith.constant 0 : i32
    return %arg0, %c0_i32, %c0_i32_0 : i32, i32, i32
  }
}

</mosaic_0001>

<llo_original>
// kernel: tpu_custom_call.1
$region0: #{tpu_custom_call.1}
  #allocation0 [shape = 'u32[]', space=smem, size = 0x4, offset = 0x4, fixed_abs, tag = 'smem constant byte address 0x4 - core index']
  #allocation1 [shape = 'u32[72,128]{1,0:T(1,128)}', space=vmem, size = 0x9000, scoped, tag = 'internal scratch']
  %s0 = inlined_call_operand.hbm [shape: bf16[8,768], index: 0, kind: input, shape index: {}]
  %s1 = inlined_call_operand.hbm [shape: bf16[16,768,512], index: 1, kind: input, shape index: {}]
  %s2 = inlined_call_operand.hbm [shape: f32[4,4,512], index: 2, kind: input, shape index: {}]
  %s3 = inlined_call_operand.hbm [shape: f32[4,4,512], index: 3, kind: input, shape index: {}]
  %s4 = inlined_call_operand.vmem [shape: f32[4,4,1], index: 4, kind: input, shape index: {}]
  %s5 = inlined_call_operand.hbm [shape: f32[4,4,8], index: 5, kind: output, shape index: {}]
  %s6 = sld [smem:[#allocation0]]
  $region69: #{tpu_custom_call.1} parent=0
    _
  %s8 = ssub.s32 1, %s6
  %s9 = scalar_select 0, %s8, %s6
  $region1: #{tpu_custom_call.1} parent=0
    #allocation2 [shape = 'u8[12288]{0}', space=vmem, size = 0x3000, scoped, tag = 'input window, operand 0, single buffered']
    #allocation3 [shape = 's32[2]{0}', space=sflag, size = 0x8, scoped, tag = 'scoped memory for tpu_custom_call.1']
    #allocation4 [shape = 's32[2]{0}', space=sflag, size = 0x8, scoped, tag = 'scoped memory for tpu_custom_call.1']
    #allocation5 [shape = 'u8[6291456]{0}', space=vmem, size = 0x600000, scoped, tag = 'input window, operand 1']
    #allocation6 [shape = 's32[2]{0}', space=sflag, size = 0x8, scoped, tag = 'scoped memory for tpu_custom_call.1']
    #allocation7 [shape = 'u8[32768]{0}', space=vmem, size = 0x8000, scoped, tag = 'input window, operand 2, single buffered']
    #allocation8 [shape = 'u8[32768]{0}', space=vmem, size = 0x8000, scoped, tag = 'input window, operand 3, single buffered']
    #allocation9 [shape = 's32[1]{0}', space=sflag, size = 0x4, scoped, tag = 'scoped memory for tpu_custom_call.1']
    #allocation10 [shape = 'u8[4096]{0}', space=vmem, size = 0x1000, scoped, tag = 'output window, operand 0']
    %10 = vsyncpa [#allocation3], 0
    %11 = vsyncpa [#allocation6], 0
    %s12 = scalar_lea.sflag [#allocation6], 1
    %13 = vsyncpa %s12, 0
    %14 = vsyncpa [#allocation9], 0
    %15 = vsyncpa [#allocation4], 0
    %s16 = scalar_lea.sflag [#allocation4], 1
    %17 = vsyncpa %s16, 0
    loop: start=0, step=1, limit=6
    $region2: #{tpu_custom_call.1} parent=1 // loop_pre_header
      _
    $region3: #{tpu_custom_call.1} parent=1 // loop_header
      %s19 = sphi 0, %s23
      %p20 = scmp.ge.s32.totalorder %s19, 6
      %s27 = sphi 0, %s27
      %s29 = sphi 0, %s27
      %s30 = sphi 0, %s29
      %s44 = sphi 0, %s30
      %s50 = sphi 0, %s52
      %s53 = sphi 0, %s50
      %s54 = sphi 0, %s53
      %s70 = sphi 0, %s54
      %s74 = sphi 0, %s74
      %s76 = sphi 0, %s74
      %s77 = sphi 0, %s76
      %s91 = sphi 0, %s77
      %s95 = sphi 0, %s95
      %s97 = sphi 0, %s95
      %s98 = sphi 0, %s97
      %s112 = sphi 0, %s98
      %s116 = sphi 0, %s116
      %s118 = sphi 0, %s116
      %s119 = sphi 0, %s118
      %s133 = sphi 0, %s119
      %s139 = sphi 0, %s141
      %s142 = sphi 0, %s139
      %s143 = sphi 0, %s142
      %s159 = sphi 0, %s143
    $region4: #{tpu_custom_call.1} parent=1 // loop_header_branch
      %22 = sbr.rel (%p20) target = $region8
    $region5: #{tpu_custom_call.1} parent=1 // loop_body
      %s24 = ssub.s32 %s19, 1
      %s25 = ssub.s32 %s19, 2
      %s26 = sadd.s32 %s19, 1
      %s28 = sadd.s32 %s27, 1
      %p31 = scmp.eq.s32.totalorder %s19, 3
      %p32 = scmp.ne.s32.totalorder %s27, %s29
      %p33 = scmp.eq.s32.totalorder %s19, 0
      %p34 = por %p32, %p33
      %p35 = scmp.ne.s32.totalorder %s27, %s29
      %p36 = scmp.eq.s32.totalorder %s24, 3
      %p37 = por %p35, %p36
      %p38 = scmp.ne.s32.totalorder %s29, %s30
      %p39 = scmp.eq.s32.totalorder %s24, 0
      %p40 = por %p38, %p39
      %p41 = scmp.ne.s32.totalorder %s29, %s30
      %p42 = scmp.eq.s32.totalorder %s25, 3
      %p43 = por %p41, %p42
      %p45 = scmp.ne.s32.totalorder %s30, %s44
      %p46 = scmp.eq.s32.totalorder %s25, 0
      %p47 = por %p45, %p46
      %s48 = ssub.s32 %s19, %s26
      %p49 = scmp.eq.s32.totalorder %s48, 0
      %s51 = sadd.s32 %s50, 1
      %s52 = scalar_select %p49, %s50, %s51
      %p55 = pneg %p49
      %p56 = scmp.eq.s32.totalorder %s19, 3
      %p57 = por %p55, %p56
      %p58 = scmp.ne.s32.totalorder %s50, %s53
      %p59 = scmp.eq.s32.totalorder %s19, 0
      %p60 = por %p58, %p59
      %p61 = scmp.ne.s32.totalorder %s50, %s53
      %p62 = scmp.eq.s32.totalorder %s24, 3
      %p63 = por %p61, %p62
      %p64 = scmp.ne.s32.totalorder %s53, %s54
      %p65 = scmp.eq.s32.totalorder %s24, 0
      %p66 = por %p64, %p65
      %p67 = scmp.ne.s32.totalorder %s53, %s54
      %p68 = scmp.eq.s32.totalorder %s25, 3
      %p69 = por %p67, %p68
      %p71 = scmp.ne.s32.totalorder %s54, %s70
      %p72 = scmp.eq.s32.totalorder %s25, 0
      %p73 = por %p71, %p72
      %s75 = sadd.s32 %s74, 1
      %p78 = scmp.eq.s32.totalorder %s19, 3
      %p79 = scmp.ne.s32.totalorder %s74, %s76
      %p80 = scmp.eq.s32.totalorder %s19, 0
      %p81 = por %p79, %p80
      %p82 = scmp.ne.s32.totalorder %s74, %s76
      %p83 = scmp.eq.s32.totalorder %s24, 3
      %p84 = por %p82, %p83
      %p85 = scmp.ne.s32.totalorder %s76, %s77
      %p86 = scmp.eq.s32.totalorder %s24, 0
      %p87 = por %p85, %p86
      %p88 = scmp.ne.s32.totalorder %s76, %s77
      %p89 = scmp.eq.s32.totalorder %s25, 3
      %p90 = por %p88, %p89
      %p92 = scmp.ne.s32.totalorder %s77, %s91
      %p93 = scmp.eq.s32.totalorder %s25, 0
      %p94 = por %p92, %p93
      %s96 = sadd.s32 %s95, 1
      %p99 = scmp.eq.s32.totalorder %s19, 3
      %p100 = scmp.ne.s32.totalorder %s95, %s97
      %p101 = scmp.eq.s32.totalorder %s19, 0
      %p102 = por %p100, %p101
      %p103 = scmp.ne.s32.totalorder %s95, %s97
      %p104 = scmp.eq.s32.totalorder %s24, 3
      %p105 = por %p103, %p104
      %p106 = scmp.ne.s32.totalorder %s97, %s98
      %p107 = scmp.eq.s32.totalorder %s24, 0
      %p108 = por %p106, %p107
      %p109 = scmp.ne.s32.totalorder %s97, %s98
      %p110 = scmp.eq.s32.totalorder %s25, 3
      %p111 = por %p109, %p110
      %p113 = scmp.ne.s32.totalorder %s98, %s112
      %p114 = scmp.eq.s32.totalorder %s25, 0
      %p115 = por %p113, %p114
      %s117 = sadd.s32 %s116, 1
      %p120 = scmp.eq.s32.totalorder %s19, 3
      %p121 = scmp.ne.s32.totalorder %s116, %s118
      %p122 = scmp.eq.s32.totalorder %s19, 0
      %p123 = por %p121, %p122
      %p124 = scmp.ne.s32.totalorder %s116, %s118
      %p125 = scmp.eq.s32.totalorder %s24, 3
      %p126 = por %p124, %p125
      %p127 = scmp.ne.s32.totalorder %s118, %s119
      %p128 = scmp.eq.s32.totalorder %s24, 0
      %p129 = por %p127, %p128
      %p130 = scmp.ne.s32.totalorder %s118, %s119
      %p131 = scmp.eq.s32.totalorder %s25, 3
      %p132 = por %p130, %p131
      %p134 = scmp.ne.s32.totalorder %s119, %s133
      %p135 = scmp.eq.s32.totalorder %s25, 0
      %p136 = por %p134, %p135
      %s137 = ssub.s32 %s19, %s26
      %p138 = scmp.eq.s32.totalorder %s137, 0
      %s140 = sadd.s32 %s139, 1
      %s141 = scalar_select %p138, %s139, %s140
      %p144 = pneg %p138
      %p145 = scmp.eq.s32.totalorder %s19, 3
      %p146 = por %p144, %p145
      %p147 = scmp.ne.s32.totalorder %s139, %s142
      %p148 = scmp.eq.s32.totalorder %s19, 0
      %p149 = por %p147, %p148
      %p150 = scmp.ne.s32.totalorder %s139, %s142
      %p151 = scmp.eq.s32.totalorder %s24, 3
      %p152 = por %p150, %p151
      %p153 = scmp.ne.s32.totalorder %s142, %s143
      %p154 = scmp.eq.s32.totalorder %s24, 0
      %p155 = por %p153, %p154
      %p156 = scmp.ne.s32.totalorder %s142, %s143
      %p157 = scmp.eq.s32.totalorder %s25, 3
      %p158 = por %p156, %p157
      %p160 = scmp.ne.s32.totalorder %s143, %s159
      %p161 = scmp.eq.s32.totalorder %s25, 0
      %p162 = por %p160, %p161
      %p163 = scmp.le.s32.totalorder 1, %s19
      %p164 = scmp.lt.s32.totalorder %s19, 5
      %p165 = pnand %p163, %p164
      %p166 = pneg %p165
      // Predicated region
      $region9: #{tpu_custom_call.1} parent=5 // pred_check
        _
      $region10: #{tpu_custom_call.1} parent=5 // pred_check_branch
        %168 = sbr.rel (%p165) target = $region12
      $region11: #{tpu_custom_call.1} parent=5 // pred_region
        %s169 = ssub.s32 %s19, 1
        // Predicated region
        $region13: #{tpu_custom_call.1} parent=11 // pred_check
          %p170 = pneg %p40
        $region14: #{tpu_custom_call.1} parent=11 // pred_check_branch
          %172 = sbr.rel (%p170) target = $region16
        $region15: #{tpu_custom_call.1} parent=11 // pred_region
          %174 = vsyncadd [#allocation3], 0
          %s176 = sshll.u32 %s0, 4
          %s177 = int_to_ptr.hbm [resolvable:$true] %s176
          %s178 = sshll.u32 [#allocation2], 4
          %s179 = int_to_ptr.vmem [resolvable:$true] %s178
          %181 = dma.hbm_to_vmem [thread:$0]  %s177, 384, %s179, [#allocation3]
        $region16: #{tpu_custom_call.1} parent=11 // pred_fallthru
          _
        // Predicated region
        $region17: #{tpu_custom_call.1} parent=11 // pred_check
          %p182 = pneg %p87
        $region18: #{tpu_custom_call.1} parent=11 // pred_check_branch
          %184 = sbr.rel (%p182) target = $region20
        $region19: #{tpu_custom_call.1} parent=11 // pred_region
          %186 = vsyncadd [#allocation6], 0
          %s187 = sshll.u32 %s2, 4
          %s188 = int_to_ptr.hbm [resolvable:$true] %s187
          %s189 = sshll.u32 [#allocation7], 4
          %s190 = int_to_ptr.vmem [resolvable:$true] %s189
          %195 = dma.hbm_to_vmem [thread:$0]  %s188, 1024, %s190, [#allocation6], 256, 256, 16
        $region20: #{tpu_custom_call.1} parent=11 // pred_fallthru
          _
        // Predicated region
        $region21: #{tpu_custom_call.1} parent=11 // pred_check
          %p196 = pneg %p108
        $region22: #{tpu_custom_call.1} parent=11 // pred_check_branch
          %198 = sbr.rel (%p196) target = $region24
        $region23: #{tpu_custom_call.1} parent=11 // pred_region
          %200 = vsyncadd [#allocation9], 0
          %s201 = sshll.u32 %s3, 4
          %s202 = int_to_ptr.hbm [resolvable:$true] %s201
          %s203 = sshll.u32 [#allocation8], 4
          %s204 = int_to_ptr.vmem [resolvable:$true] %s203
          %209 = dma.hbm_to_vmem [thread:$0]  %s202, 1024, %s204, [#allocation9], 256, 256, 16
        $region24: #{tpu_custom_call.1} parent=11 // pred_fallthru
          _
        // Predicated region
        $region25: #{tpu_custom_call.1} parent=11 // pred_check
          %p210 = pneg %p129
        $region26: #{tpu_custom_call.1} parent=11 // pred_check_branch
          %212 = sbr.rel (%p210) target = $region28
        $region27: #{tpu_custom_call.1} parent=11 // pred_region
          _
        $region28: #{tpu_custom_call.1} parent=11 // pred_fallthru
          _
      $region12: #{tpu_custom_call.1} parent=5 // pred_fallthru
        _
      %p213 = scmp.lt.s32.totalorder %s19, 4
      // Predicated region
      $region29: #{tpu_custom_call.1} parent=5 // pred_check
        %p214 = pneg %p213
      $region30: #{tpu_custom_call.1} parent=5 // pred_check_branch
        %216 = sbr.rel (%p214) target = $region32
      $region31: #{tpu_custom_call.1} parent=5 // pred_region
        // Predicated region
        $region33: #{tpu_custom_call.1} parent=31 // pred_check
          %p217 = pneg %p60
        $region34: #{tpu_custom_call.1} parent=31 // pred_check_branch
          %219 = sbr.rel (%p217) target = $region36
        $region35: #{tpu_custom_call.1} parent=31 // pred_region
          %s220 = sand.u32 %s19, 1
          %s221 = scalar_lea.sflag [#allocation6], %s220
          %s222 = sand.u32 %s50, 1
          %s223 = smul.addr %s222, 6144
          %s224 = scalar_lea.vmem [#allocation5], %s223
          %s225 = smul.u32 4, %s19
          %227 = vsyncadd %s221, 0
          %s228 = smul.addr %s225, 384
          %s229 = smul.addr %s228, 4
          %s230 = scalar_lea.hbm %s1, %s229
          %s231 = sshll.u32 %s230, 4
          %s232 = int_to_ptr.hbm [resolvable:$true] %s231
          %s233 = sshll.u32 %s224, 4
          %s234 = int_to_ptr.vmem [resolvable:$true] %s233
          %239 = dma.hbm_to_vmem [thread:$0]  %s232, 98304, %s234, %s221, 256, 256, 16
        $region36: #{tpu_custom_call.1} parent=31 // pred_fallthru
          _
      $region32: #{tpu_custom_call.1} parent=5 // pred_fallthru
        _
      %p240 = scmp.le.s32.totalorder 1, %s19
      %p241 = scmp.lt.s32.totalorder %s19, 5
      %p242 = pnand %p240, %p241
      %p243 = pneg %p242
      // Predicated region
      $region37: #{tpu_custom_call.1} parent=5 // pred_check
        _
      $region38: #{tpu_custom_call.1} parent=5 // pred_check_branch
        %245 = sbr.rel (%p242) target = $region40
      $region39: #{tpu_custom_call.1} parent=5 // pred_region
        %s246 = ssub.s32 %s19, 1
        // Predicated region
        $region41: #{tpu_custom_call.1} parent=39 // pred_check
          %p247 = pneg %p40
        $region42: #{tpu_custom_call.1} parent=39 // pred_check_branch
          %249 = sbr.rel (%p247) target = $region44
        $region43: #{tpu_custom_call.1} parent=39 // pred_region
          %251 = dma.done [#allocation3], 384
        $region44: #{tpu_custom_call.1} parent=39 // pred_fallthru
          _
        %s252 = sand.u32 %s24, 1
        %s253 = scalar_lea.sflag [#allocation6], %s252
        %s254 = sand.u32 %s53, 1
        %s255 = smul.addr %s254, 6144
        %s256 = scalar_lea.vmem [#allocation5], %s255
        // Predicated region
        $region45: #{tpu_custom_call.1} parent=39 // pred_check
          %p257 = pneg %p66
        $region46: #{tpu_custom_call.1} parent=39 // pred_check_branch
          %259 = sbr.rel (%p257) target = $region48
        $region47: #{tpu_custom_call.1} parent=39 // pred_region
          %261 = dma.done %s253, 98304
        $region48: #{tpu_custom_call.1} parent=39 // pred_fallthru
          _
        // Predicated region
        $region49: #{tpu_custom_call.1} parent=39 // pred_check
          %p262 = pneg %p87
        $region50: #{tpu_custom_call.1} parent=39 // pred_check_branch
          %264 = sbr.rel (%p262) target = $region52
        $region51: #{tpu_custom_call.1} parent=39 // pred_region
          %266 = dma.done [#allocation6], 1024
        $region52: #{tpu_custom_call.1} parent=39 // pred_fallthru
          _
        // Predicated region
        $region53: #{tpu_custom_call.1} parent=39 // pred_check
          %p267 = pneg %p108
        $region54: #{tpu_custom_call.1} parent=39 // pred_check_branch
          %269 = sbr.rel (%p267) target = $region56
        $region55: #{tpu_custom_call.1} parent=39 // pred_region
          %271 = dma.done [#allocation9], 1024
        $region56: #{tpu_custom_call.1} parent=39 // pred_fallthru
          _
        %p272 = pneg %p40
        %p273 = pneg %p37
        %s274 = sand.u32 %s24, 1
        %s275 = scalar_lea.sflag [#allocation6], %s274
        %s276 = sand.u32 %s53, 1
        %s277 = smul.addr %s276, 6144
        %s278 = scalar_lea.vmem [#allocation5], %s277
        %p279 = pneg %p66
        %p280 = pneg %p63
        %p281 = pneg %p87
        %p282 = pneg %p84
        %p283 = pneg %p108
        %p284 = pneg %p105
        %p285 = pneg %p129
        %p286 = pneg %p126
        %p287 = pneg %p155
        %p288 = pneg %p152
        %s289 = sand.u32 %s142, 1
        %s290 = scalar_lea.sflag [#allocation4], %s289
        %s291 = sand.u32 %s142, 1
        %s292 = smul.addr %s291, 4
        %s293 = scalar_lea.vmem [#allocation10], %s292
        %s294 = smul.u32 4, %s24
        %v295 = vld [vmem:[#allocation2] sm:$0xff]
        %v296 = vld [vmem:[#allocation2 + $0x8] sm:$0xff]
        %v297 = vld [vmem:[#allocation2 + $0x10] sm:$0xff]
        %s298 = smul.u32 %s24, 4
        %s299 = smul.addr %s298, 4
        %s300 = scalar_lea.vmem [#allocation7], %s299
        %v301 = vld [vmem:[%s300] sm:$0xff]
        %v302 = vld [vmem:[%s300 + $0x8] sm:$0xff]
        %s303 = smul.addr %s298, 4
        %s304 = scalar_lea.vmem [#allocation8], %s303
        %v305 = vld [vmem:[%s304] sm:$0xff]
        %v306 = vld [vmem:[%s304 + $0x8] sm:$0xff]
        %s307 = scalar_lea.vmem %s4, %s298
        %v308 = vld [vmem:[%s307] sm:$0xf]
        %v309 = vld [vmem:[%s256] sm:$0xff]
        %v310 = vld [vmem:[%s256 + $0x8] sm:$0xff]
        %v311 = vld [vmem:[%s256 + $0x10] sm:$0xff]
        %v312 = vld [vmem:[%s256 + $0x18] sm:$0xff]
        %v313 = vld [vmem:[%s256 + $0x20] sm:$0xff]
        %v314 = vld [vmem:[%s256 + $0x28] sm:$0xff]
        %v315 = vld [vmem:[%s256 + $0x30] sm:$0xff]
        %v316 = vld [vmem:[%s256 + $0x38] sm:$0xff]
        %v317 = vld [vmem:[%s256 + $0x40] sm:$0xff]
        %v318 = vld [vmem:[%s256 + $0x48] sm:$0xff]
        %v319 = vld [vmem:[%s256 + $0x50] sm:$0xff]
        %v320 = vld [vmem:[%s256 + $0x58] sm:$0xff]
        %v321 = vld [vmem:[%s256 + $0x60] sm:$0xff]
        %v322 = vld [vmem:[%s256 + $0x68] sm:$0xff]
        %v323 = vld [vmem:[%s256 + $0x70] sm:$0xff]
        %v324 = vld [vmem:[%s256 + $0x78] sm:$0xff]
        %v325 = vld [vmem:[%s256 + $0x80] sm:$0xff]
        %v326 = vld [vmem:[%s256 + $0x88] sm:$0xff]
        %v327 = vld [vmem:[%s256 + $0x90] sm:$0xff]
        %v328 = vld [vmem:[%s256 + $0x98] sm:$0xff]
        %v329 = vld [vmem:[%s256 + $0xa0] sm:$0xff]
        %v330 = vld [vmem:[%s256 + $0xa8] sm:$0xff]
        %v331 = vld [vmem:[%s256 + $0xb0] sm:$0xff]
        %v332 = vld [vmem:[%s256 + $0xb8] sm:$0xff]
        %v333 = vld [vmem:[%s256 + $0xc0] sm:$0xff]
        %v334 = vld [vmem:[%s256 + $0xc8] sm:$0xff]
        %v335 = vld [vmem:[%s256 + $0xd0] sm:$0xff]
        %v336 = vld [vmem:[%s256 + $0xd8] sm:$0xff]
        %v337 = vld [vmem:[%s256 + $0xe0] sm:$0xff]
        %v338 = vld [vmem:[%s256 + $0xe8] sm:$0xff]
        %v339 = vld [vmem:[%s256 + $0xf0] sm:$0xff]
        %v340 = vld [vmem:[%s256 + $0xf8] sm:$0xff]
        %v341 = vld [vmem:[%s256 + $0x100] sm:$0xff]
        %v342 = vld [vmem:[%s256 + $0x108] sm:$0xff]
        %v343 = vld [vmem:[%s256 + $0x110] sm:$0xff]
        %v344 = vld [vmem:[%s256 + $0x118] sm:$0xff]
        %v345 = vld [vmem:[%s256 + $0x120] sm:$0xff]
        %v346 = vld [vmem:[%s256 + $0x128] sm:$0xff]
        %v347 = vld [vmem:[%s256 + $0x130] sm:$0xff]
        %v348 = vld [vmem:[%s256 + $0x138] sm:$0xff]
        %v349 = vld [vmem:[%s256 + $0x140] sm:$0xff]
        %v350 = vld [vmem:[%s256 + $0x148] sm:$0xff]
        %v351 = vld [vmem:[%s256 + $0x150] sm:$0xff]
        %v352 = vld [vmem:[%s256 + $0x158] sm:$0xff]
        %v353 = vld [vmem:[%s256 + $0x160] sm:$0xff]
        %v354 = vld [vmem:[%s256 + $0x168] sm:$0xff]
        %v355 = vld [vmem:[%s256 + $0x170] sm:$0xff]
        %v356 = vld [vmem:[%s256 + $0x178] sm:$0xff]
        %v357 = vld [vmem:[%s256 + $0x180] sm:$0xff]
        %v358 = vld [vmem:[%s256 + $0x188] sm:$0xff]
        %v359 = vld [vmem:[%s256 + $0x190] sm:$0xff]
        %v360 = vld [vmem:[%s256 + $0x198] sm:$0xff]
        %v361 = vld [vmem:[%s256 + $0x1a0] sm:$0xff]
        %v362 = vld [vmem:[%s256 + $0x1a8] sm:$0xff]
        %v363 = vld [vmem:[%s256 + $0x1b0] sm:$0xff]
        %v364 = vld [vmem:[%s256 + $0x1b8] sm:$0xff]
        %v365 = vld [vmem:[%s256 + $0x1c0] sm:$0xff]
        %v366 = vld [vmem:[%s256 + $0x1c8] sm:$0xff]
        %v367 = vld [vmem:[%s256 + $0x1d0] sm:$0xff]
        %v368 = vld [vmem:[%s256 + $0x1d8] sm:$0xff]
        %v369 = vld [vmem:[%s256 + $0x1e0] sm:$0xff]
        %v370 = vld [vmem:[%s256 + $0x1e8] sm:$0xff]
        %v371 = vld [vmem:[%s256 + $0x1f0] sm:$0xff]
        %v372 = vld [vmem:[%s256 + $0x1f8] sm:$0xff]
        %v373 = vld [vmem:[%s256 + $0x200] sm:$0xff]
        %v374 = vld [vmem:[%s256 + $0x208] sm:$0xff]
        %v375 = vld [vmem:[%s256 + $0x210] sm:$0xff]
        %v376 = vld [vmem:[%s256 + $0x218] sm:$0xff]
        %v377 = vld [vmem:[%s256 + $0x220] sm:$0xff]
        %v378 = vld [vmem:[%s256 + $0x228] sm:$0xff]
        %v379 = vld [vmem:[%s256 + $0x230] sm:$0xff]
        %v380 = vld [vmem:[%s256 + $0x238] sm:$0xff]
        %v381 = vld [vmem:[%s256 + $0x240] sm:$0xff]
        %v382 = vld [vmem:[%s256 + $0x248] sm:$0xff]
        %v383 = vld [vmem:[%s256 + $0x250] sm:$0xff]
        %v384 = vld [vmem:[%s256 + $0x258] sm:$0xff]
        %v385 = vld [vmem:[%s256 + $0x260] sm:$0xff]
        %v386 = vld [vmem:[%s256 + $0x268] sm:$0xff]
        %v387 = vld [vmem:[%s256 + $0x270] sm:$0xff]
        %v388 = vld [vmem:[%s256 + $0x278] sm:$0xff]
        %v389 = vld [vmem:[%s256 + $0x280] sm:$0xff]
        %v390 = vld [vmem:[%s256 + $0x288] sm:$0xff]
        %v391 = vld [vmem:[%s256 + $0x290] sm:$0xff]
        %v392 = vld [vmem:[%s256 + $0x298] sm:$0xff]
        %v393 = vld [vmem:[%s256 + $0x2a0] sm:$0xff]
        %v394 = vld [vmem:[%s256 + $0x2a8] sm:$0xff]
        %v395 = vld [vmem:[%s256 + $0x2b0] sm:$0xff]
        %v396 = vld [vmem:[%s256 + $0x2b8] sm:$0xff]
        %v397 = vld [vmem:[%s256 + $0x2c0] sm:$0xff]
        %v398 = vld [vmem:[%s256 + $0x2c8] sm:$0xff]
        %v399 = vld [vmem:[%s256 + $0x2d0] sm:$0xff]
        %v400 = vld [vmem:[%s256 + $0x2d8] sm:$0xff]
        %v401 = vld [vmem:[%s256 + $0x2e0] sm:$0xff]
        %v402 = vld [vmem:[%s256 + $0x2e8] sm:$0xff]
        %v403 = vld [vmem:[%s256 + $0x2f0] sm:$0xff]
        %v404 = vld [vmem:[%s256 + $0x2f8] sm:$0xff]
        %v405 = vld [vmem:[%s256 + $0x300] sm:$0xff]
        %v406 = vld [vmem:[%s256 + $0x308] sm:$0xff]
        %v407 = vld [vmem:[%s256 + $0x310] sm:$0xff]
        %v408 = vld [vmem:[%s256 + $0x318] sm:$0xff]
        %v409 = vld [vmem:[%s256 + $0x320] sm:$0xff]
        %v410 = vld [vmem:[%s256 + $0x328] sm:$0xff]
        %v411 = vld [vmem:[%s256 + $0x330] sm:$0xff]
        %v412 = vld [vmem:[%s256 + $0x338] sm:$0xff]
        %v413 = vld [vmem:[%s256 + $0x340] sm:$0xff]
        %v414 = vld [vmem:[%s256 + $0x348] sm:$0xff]
        %v415 = vld [vmem:[%s256 + $0x350] sm:$0xff]
        %v416 = vld [vmem:[%s256 + $0x358] sm:$0xff]
        %v417 = vld [vmem:[%s256 + $0x360] sm:$0xff]
        %v418 = vld [vmem:[%s256 + $0x368] sm:$0xff]
        %v419 = vld [vmem:[%s256 + $0x370] sm:$0xff]
        %v420 = vld [vmem:[%s256 + $0x378] sm:$0xff]
        %v421 = vld [vmem:[%s256 + $0x380] sm:$0xff]
        %v422 = vld [vmem:[%s256 + $0x388] sm:$0xff]
        %v423 = vld [vmem:[%s256 + $0x390] sm:$0xff]
        %v424 = vld [vmem:[%s256 + $0x398] sm:$0xff]
        %v425 = vld [vmem:[%s256 + $0x3a0] sm:$0xff]
        %v426 = vld [vmem:[%s256 + $0x3a8] sm:$0xff]
        %v427 = vld [vmem:[%s256 + $0x3b0] sm:$0xff]
        %v428 = vld [vmem:[%s256 + $0x3b8] sm:$0xff]
        %v429 = vld [vmem:[%s256 + $0x3c0] sm:$0xff]
        %v430 = vld [vmem:[%s256 + $0x3c8] sm:$0xff]
        %v431 = vld [vmem:[%s256 + $0x3d0] sm:$0xff]
        %v432 = vld [vmem:[%s256 + $0x3d8] sm:$0xff]
        %v433 = vld [vmem:[%s256 + $0x3e0] sm:$0xff]
        %v434 = vld [vmem:[%s256 + $0x3e8] sm:$0xff]
        %v435 = vld [vmem:[%s256 + $0x3f0] sm:$0xff]
        %v436 = vld [vmem:[%s256 + $0x3f8] sm:$0xff]
        %v437 = vld [vmem:[%s256 + $0x400] sm:$0xff]
        %v438 = vld [vmem:[%s256 + $0x408] sm:$0xff]
        %v439 = vld [vmem:[%s256 + $0x410] sm:$0xff]
        %v440 = vld [vmem:[%s256 + $0x418] sm:$0xff]
        %v441 = vld [vmem:[%s256 + $0x420] sm:$0xff]
        %v442 = vld [vmem:[%s256 + $0x428] sm:$0xff]
        %v443 = vld [vmem:[%s256 + $0x430] sm:$0xff]
        %v444 = vld [vmem:[%s256 + $0x438] sm:$0xff]
        %v445 = vld [vmem:[%s256 + $0x440] sm:$0xff]
        %v446 = vld [vmem:[%s256 + $0x448] sm:$0xff]
        %v447 = vld [vmem:[%s256 + $0x450] sm:$0xff]
        %v448 = vld [vmem:[%s256 + $0x458] sm:$0xff]
        %v449 = vld [vmem:[%s256 + $0x460] sm:$0xff]
        %v450 = vld [vmem:[%s256 + $0x468] sm:$0xff]
        %v451 = vld [vmem:[%s256 + $0x470] sm:$0xff]
        %v452 = vld [vmem:[%s256 + $0x478] sm:$0xff]
        %v453 = vld [vmem:[%s256 + $0x480] sm:$0xff]
        %v454 = vld [vmem:[%s256 + $0x488] sm:$0xff]
        %v455 = vld [vmem:[%s256 + $0x490] sm:$0xff]
        %v456 = vld [vmem:[%s256 + $0x498] sm:$0xff]
        %v457 = vld [vmem:[%s256 + $0x4a0] sm:$0xff]
        %v458 = vld [vmem:[%s256 + $0x4a8] sm:$0xff]
        %v459 = vld [vmem:[%s256 + $0x4b0] sm:$0xff]
        %v460 = vld [vmem:[%s256 + $0x4b8] sm:$0xff]
        %v461 = vld [vmem:[%s256 + $0x4c0] sm:$0xff]
        %v462 = vld [vmem:[%s256 + $0x4c8] sm:$0xff]
        %v463 = vld [vmem:[%s256 + $0x4d0] sm:$0xff]
        %v464 = vld [vmem:[%s256 + $0x4d8] sm:$0xff]
        %v465 = vld [vmem:[%s256 + $0x4e0] sm:$0xff]
        %v466 = vld [vmem:[%s256 + $0x4e8] sm:$0xff]
        %v467 = vld [vmem:[%s256 + $0x4f0] sm:$0xff]
        %v468 = vld [vmem:[%s256 + $0x4f8] sm:$0xff]
        %v469 = vld [vmem:[%s256 + $0x500] sm:$0xff]
        %v470 = vld [vmem:[%s256 + $0x508] sm:$0xff]
        %v471 = vld [vmem:[%s256 + $0x510] sm:$0xff]
        %v472 = vld [vmem:[%s256 + $0x518] sm:$0xff]
        %v473 = vld [vmem:[%s256 + $0x520] sm:$0xff]
        %v474 = vld [vmem:[%s256 + $0x528] sm:$0xff]
        %v475 = vld [vmem:[%s256 + $0x530] sm:$0xff]
        %v476 = vld [vmem:[%s256 + $0x538] sm:$0xff]
        %v477 = vld [vmem:[%s256 + $0x540] sm:$0xff]
        %v478 = vld [vmem:[%s256 + $0x548] sm:$0xff]
        %v479 = vld [vmem:[%s256 + $0x550] sm:$0xff]
        %v480 = vld [vmem:[%s256 + $0x558] sm:$0xff]
        %v481 = vld [vmem:[%s256 + $0x560] sm:$0xff]
        %v482 = vld [vmem:[%s256 + $0x568] sm:$0xff]
        %v483 = vld [vmem:[%s256 + $0x570] sm:$0xff]
        %v484 = vld [vmem:[%s256 + $0x578] sm:$0xff]
        %v485 = vld [vmem:[%s256 + $0x580] sm:$0xff]
        %v486 = vld [vmem:[%s256 + $0x588] sm:$0xff]
        %v487 = vld [vmem:[%s256 + $0x590] sm:$0xff]
        %v488 = vld [vmem:[%s256 + $0x598] sm:$0xff]
        %v489 = vld [vmem:[%s256 + $0x5a0] sm:$0xff]
        %v490 = vld [vmem:[%s256 + $0x5a8] sm:$0xff]
        %v491 = vld [vmem:[%s256 + $0x5b0] sm:$0xff]
        %v492 = vld [vmem:[%s256 + $0x5b8] sm:$0xff]
        %v493 = vld [vmem:[%s256 + $0x5c0] sm:$0xff]
        %v494 = vld [vmem:[%s256 + $0x5c8] sm:$0xff]
        %v495 = vld [vmem:[%s256 + $0x5d0] sm:$0xff]
        %v496 = vld [vmem:[%s256 + $0x5d8] sm:$0xff]
        %v497 = vld [vmem:[%s256 + $0x5e0] sm:$0xff]
        %v498 = vld [vmem:[%s256 + $0x5e8] sm:$0xff]
        %v499 = vld [vmem:[%s256 + $0x5f0] sm:$0xff]
        %v500 = vld [vmem:[%s256 + $0x5f8] sm:$0xff]
        %v503 = vperm.slane %v301, 0
        %v504 = vperm.slane %v301, 4
        %v505 = vperm.slane %v302, 0
        %v506 = vperm.slane %v302, 4
        %v511 = vperm.slane %v503, 0
        %v512 = vperm.slane %v504, 0
        %v513 = vperm.slane %v505, 0
        %v514 = vperm.slane %v506, 0
        %v518 = vunpack.c.l.b16 %v295
        %v519 = vunpack.c.h.b16 %v295
        %v520 = vunpack.c.l.b16 %v296
        %v521 = vunpack.c.h.b16 %v296
        %v522 = vunpack.c.l.b16 %v297
        %v523 = vunpack.c.h.b16 %v297
        %v524 = vpack.c.b16 %v518, %v518
        %v525 = vpack.c.b16 %v519, %v519
        %v526 = vpack.c.b16 %v520, %v520
        %v527 = vpack.c.b16 %v521, %v521
        %v528 = vpack.c.b16 %v522, %v522
        %v529 = vpack.c.b16 %v523, %v523
        %v728 = vunpack.c.l.b16 %v309
        %v729 = vunpack.c.h.b16 %v309
        %v730 = vunpack.c.l.b16 %v310
        %v731 = vunpack.c.h.b16 %v310
        %v732 = vunpack.c.l.b16 %v311
        %v733 = vunpack.c.h.b16 %v311
        %v734 = vunpack.c.l.b16 %v312
        %v735 = vunpack.c.h.b16 %v312
        %v736 = vunpack.c.l.b16 %v313
        %v737 = vunpack.c.h.b16 %v313
        %v738 = vunpack.c.l.b16 %v314
        %v739 = vunpack.c.h.b16 %v314
        %v740 = vunpack.c.l.b16 %v315
        %v741 = vunpack.c.h.b16 %v315
        %v742 = vunpack.c.l.b16 %v316
        %v743 = vunpack.c.h.b16 %v316
        %v744 = vunpack.c.l.b16 %v317
        %v745 = vunpack.c.h.b16 %v317
        %v746 = vunpack.c.l.b16 %v318
        %v747 = vunpack.c.h.b16 %v318
        %v748 = vunpack.c.l.b16 %v319
        %v749 = vunpack.c.h.b16 %v319
        %v750 = vunpack.c.l.b16 %v320
        %v751 = vunpack.c.h.b16 %v320
        %v752 = vunpack.c.l.b16 %v321
        %v753 = vunpack.c.h.b16 %v321
        %v754 = vunpack.c.l.b16 %v322
        %v755 = vunpack.c.h.b16 %v322
        %v756 = vunpack.c.l.b16 %v323
        %v757 = vunpack.c.h.b16 %v323
        %v758 = vunpack.c.l.b16 %v324
        %v759 = vunpack.c.h.b16 %v324
        %v760 = vunpack.c.l.b16 %v325
        %v761 = vunpack.c.h.b16 %v325
        %v762 = vunpack.c.l.b16 %v326
        %v763 = vunpack.c.h.b16 %v326
        %v764 = vunpack.c.l.b16 %v327
        %v765 = vunpack.c.h.b16 %v327
        %v766 = vunpack.c.l.b16 %v328
        %v767 = vunpack.c.h.b16 %v328
        %v768 = vunpack.c.l.b16 %v329
        %v769 = vunpack.c.h.b16 %v329
        %v770 = vunpack.c.l.b16 %v330
        %v771 = vunpack.c.h.b16 %v330
        %v772 = vunpack.c.l.b16 %v331
        %v773 = vunpack.c.h.b16 %v331
        %v774 = vunpack.c.l.b16 %v332
        %v775 = vunpack.c.h.b16 %v332
        %v776 = vunpack.c.l.b16 %v333
        %v777 = vunpack.c.h.b16 %v333
        %v778 = vunpack.c.l.b16 %v334
        %v779 = vunpack.c.h.b16 %v334
        %v780 = vunpack.c.l.b16 %v335
        %v781 = vunpack.c.h.b16 %v335
        %v782 = vunpack.c.l.b16 %v336
        %v783 = vunpack.c.h.b16 %v336
        %v784 = vunpack.c.l.b16 %v337
        %v785 = vunpack.c.h.b16 %v337
        %v786 = vunpack.c.l.b16 %v338
        %v787 = vunpack.c.h.b16 %v338
        %v788 = vunpack.c.l.b16 %v339
        %v789 = vunpack.c.h.b16 %v339
        %v790 = vunpack.c.l.b16 %v340
        %v791 = vunpack.c.h.b16 %v340
        %v792 = vunpack.c.l.b16 %v341
        %v793 = vunpack.c.h.b16 %v341
        %v794 = vunpack.c.l.b16 %v342
        %v795 = vunpack.c.h.b16 %v342
        %v796 = vunpack.c.l.b16 %v343
        %v797 = vunpack.c.h.b16 %v343
        %v798 = vunpack.c.l.b16 %v344
        %v799 = vunpack.c.h.b16 %v344
        %v800 = vunpack.c.l.b16 %v345
        %v801 = vunpack.c.h.b16 %v345
        %v802 = vunpack.c.l.b16 %v346
        %v803 = vunpack.c.h.b16 %v346
        %v804 = vunpack.c.l.b16 %v347
        %v805 = vunpack.c.h.b16 %v347
        %v806 = vunpack.c.l.b16 %v348
        %v807 = vunpack.c.h.b16 %v348
        %v808 = vunpack.c.l.b16 %v349
        %v809 = vunpack.c.h.b16 %v349
        %v810 = vunpack.c.l.b16 %v350
        %v811 = vunpack.c.h.b16 %v350
        %v812 = vunpack.c.l.b16 %v351
        %v813 = vunpack.c.h.b16 %v351
        %v814 = vunpack.c.l.b16 %v352
        %v815 = vunpack.c.h.b16 %v352
        %v816 = vunpack.c.l.b16 %v353
        %v817 = vunpack.c.h.b16 %v353
        %v818 = vunpack.c.l.b16 %v354
        %v819 = vunpack.c.h.b16 %v354
        %v820 = vunpack.c.l.b16 %v355
        %v821 = vunpack.c.h.b16 %v355
        %v822 = vunpack.c.l.b16 %v356
        %v823 = vunpack.c.h.b16 %v356
        %v824 = vunpack.c.l.b16 %v357
        %v825 = vunpack.c.h.b16 %v357
        %v826 = vunpack.c.l.b16 %v358
        %v827 = vunpack.c.h.b16 %v358
        %v828 = vunpack.c.l.b16 %v359
        %v829 = vunpack.c.h.b16 %v359
        %v830 = vunpack.c.l.b16 %v360
        %v831 = vunpack.c.h.b16 %v360
        %v832 = vunpack.c.l.b16 %v361
        %v833 = vunpack.c.h.b16 %v361
        %v834 = vunpack.c.l.b16 %v362
        %v835 = vunpack.c.h.b16 %v362
        %v836 = vunpack.c.l.b16 %v363
        %v837 = vunpack.c.h.b16 %v363
        %v838 = vunpack.c.l.b16 %v364
        %v839 = vunpack.c.h.b16 %v364
        %v840 = vunpack.c.l.b16 %v365
        %v841 = vunpack.c.h.b16 %v365
        %v842 = vunpack.c.l.b16 %v366
        %v843 = vunpack.c.h.b16 %v366
        %v844 = vunpack.c.l.b16 %v367
        %v845 = vunpack.c.h.b16 %v367
        %v846 = vunpack.c.l.b16 %v368
        %v847 = vunpack.c.h.b16 %v368
        %v848 = vunpack.c.l.b16 %v369
        %v849 = vunpack.c.h.b16 %v369
        %v850 = vunpack.c.l.b16 %v370
        %v851 = vunpack.c.h.b16 %v370
        %v852 = vunpack.c.l.b16 %v371
        %v853 = vunpack.c.h.b16 %v371
        %v854 = vunpack.c.l.b16 %v372
        %v855 = vunpack.c.h.b16 %v372
        %v856 = vunpack.c.l.b16 %v373
        %v857 = vunpack.c.h.b16 %v373
        %v858 = vunpack.c.l.b16 %v374
        %v859 = vunpack.c.h.b16 %v374
        %v860 = vunpack.c.l.b16 %v375
        %v861 = vunpack.c.h.b16 %v375
        %v862 = vunpack.c.l.b16 %v376
        %v863 = vunpack.c.h.b16 %v376
        %v864 = vunpack.c.l.b16 %v377
        %v865 = vunpack.c.h.b16 %v377
        %v866 = vunpack.c.l.b16 %v378
        %v867 = vunpack.c.h.b16 %v378
        %v868 = vunpack.c.l.b16 %v379
        %v869 = vunpack.c.h.b16 %v379
        %v870 = vunpack.c.l.b16 %v380
        %v871 = vunpack.c.h.b16 %v380
        %v872 = vunpack.c.l.b16 %v381
        %v873 = vunpack.c.h.b16 %v381
        %v874 = vunpack.c.l.b16 %v382
        %v875 = vunpack.c.h.b16 %v382
        %v876 = vunpack.c.l.b16 %v383
        %v877 = vunpack.c.h.b16 %v383
        %v878 = vunpack.c.l.b16 %v384
        %v879 = vunpack.c.h.b16 %v384
        %v880 = vunpack.c.l.b16 %v385
        %v881 = vunpack.c.h.b16 %v385
        %v882 = vunpack.c.l.b16 %v386
        %v883 = vunpack.c.h.b16 %v386
        %v884 = vunpack.c.l.b16 %v387
        %v885 = vunpack.c.h.b16 %v387
        %v886 = vunpack.c.l.b16 %v388
        %v887 = vunpack.c.h.b16 %v388
        %v888 = vunpack.c.l.b16 %v389
        %v889 = vunpack.c.h.b16 %v389
        %v890 = vunpack.c.l.b16 %v390
        %v891 = vunpack.c.h.b16 %v390
        %v892 = vunpack.c.l.b16 %v391
        %v893 = vunpack.c.h.b16 %v391
        %v894 = vunpack.c.l.b16 %v392
        %v895 = vunpack.c.h.b16 %v392
        %v896 = vunpack.c.l.b16 %v393
        %v897 = vunpack.c.h.b16 %v393
        %v898 = vunpack.c.l.b16 %v394
        %v899 = vunpack.c.h.b16 %v394
        %v900 = vunpack.c.l.b16 %v395
        %v901 = vunpack.c.h.b16 %v395
        %v902 = vunpack.c.l.b16 %v396
        %v903 = vunpack.c.h.b16 %v396
        %v904 = vunpack.c.l.b16 %v397
        %v905 = vunpack.c.h.b16 %v397
        %v906 = vunpack.c.l.b16 %v398
        %v907 = vunpack.c.h.b16 %v398
        %v908 = vunpack.c.l.b16 %v399
        %v909 = vunpack.c.h.b16 %v399
        %v910 = vunpack.c.l.b16 %v400
        %v911 = vunpack.c.h.b16 %v400
        %v912 = vunpack.c.l.b16 %v401
        %v913 = vunpack.c.h.b16 %v401
        %v914 = vunpack.c.l.b16 %v402
        %v915 = vunpack.c.h.b16 %v402
        %v916 = vunpack.c.l.b16 %v403
        %v917 = vunpack.c.h.b16 %v403
        %v918 = vunpack.c.l.b16 %v404
        %v919 = vunpack.c.h.b16 %v404
        %v920 = vunpack.c.l.b16 %v405
        %v921 = vunpack.c.h.b16 %v405
        %v922 = vunpack.c.l.b16 %v406
        %v923 = vunpack.c.h.b16 %v406
        %v924 = vunpack.c.l.b16 %v407
        %v925 = vunpack.c.h.b16 %v407
        %v926 = vunpack.c.l.b16 %v408
        %v927 = vunpack.c.h.b16 %v408
        %v928 = vunpack.c.l.b16 %v409
        %v929 = vunpack.c.h.b16 %v409
        %v930 = vunpack.c.l.b16 %v410
        %v931 = vunpack.c.h.b16 %v410
        %v932 = vunpack.c.l.b16 %v411
        %v933 = vunpack.c.h.b16 %v411
        %v934 = vunpack.c.l.b16 %v412
        %v935 = vunpack.c.h.b16 %v412
        %v936 = vunpack.c.l.b16 %v413
        %v937 = vunpack.c.h.b16 %v413
        %v938 = vunpack.c.l.b16 %v414
        %v939 = vunpack.c.h.b16 %v414
        %v940 = vunpack.c.l.b16 %v415
        %v941 = vunpack.c.h.b16 %v415
        %v942 = vunpack.c.l.b16 %v416
        %v943 = vunpack.c.h.b16 %v416
        %v944 = vunpack.c.l.b16 %v417
        %v945 = vunpack.c.h.b16 %v417
        %v946 = vunpack.c.l.b16 %v418
        %v947 = vunpack.c.h.b16 %v418
        %v948 = vunpack.c.l.b16 %v419
        %v949 = vunpack.c.h.b16 %v419
        %v950 = vunpack.c.l.b16 %v420
        %v951 = vunpack.c.h.b16 %v420
        %v952 = vunpack.c.l.b16 %v421
        %v953 = vunpack.c.h.b16 %v421
        %v954 = vunpack.c.l.b16 %v422
        %v955 = vunpack.c.h.b16 %v422
        %v956 = vunpack.c.l.b16 %v423
        %v957 = vunpack.c.h.b16 %v423
        %v958 = vunpack.c.l.b16 %v424
        %v959 = vunpack.c.h.b16 %v424
        %v960 = vunpack.c.l.b16 %v425
        %v961 = vunpack.c.h.b16 %v425
        %v962 = vunpack.c.l.b16 %v426
        %v963 = vunpack.c.h.b16 %v426
        %v964 = vunpack.c.l.b16 %v427
        %v965 = vunpack.c.h.b16 %v427
        %v966 = vunpack.c.l.b16 %v428
        %v967 = vunpack.c.h.b16 %v428
        %v968 = vunpack.c.l.b16 %v429
        %v969 = vunpack.c.h.b16 %v429
        %v970 = vunpack.c.l.b16 %v430
        %v971 = vunpack.c.h.b16 %v430
        %v972 = vunpack.c.l.b16 %v431
        %v973 = vunpack.c.h.b16 %v431
        %v974 = vunpack.c.l.b16 %v432
        %v975 = vunpack.c.h.b16 %v432
        %v976 = vunpack.c.l.b16 %v433
        %v977 = vunpack.c.h.b16 %v433
        %v978 = vunpack.c.l.b16 %v434
        %v979 = vunpack.c.h.b16 %v434
        %v980 = vunpack.c.l.b16 %v435
        %v981 = vunpack.c.h.b16 %v435
        %v982 = vunpack.c.l.b16 %v436
        %v983 = vunpack.c.h.b16 %v436
        %v984 = vunpack.c.l.b16 %v437
        %v985 = vunpack.c.h.b16 %v437
        %v986 = vunpack.c.l.b16 %v438
        %v987 = vunpack.c.h.b16 %v438
        %v988 = vunpack.c.l.b16 %v439
        %v989 = vunpack.c.h.b16 %v439
        %v990 = vunpack.c.l.b16 %v440
        %v991 = vunpack.c.h.b16 %v440
        %v992 = vunpack.c.l.b16 %v441
        %v993 = vunpack.c.h.b16 %v441
        %v994 = vunpack.c.l.b16 %v442
        %v995 = vunpack.c.h.b16 %v442
        %v996 = vunpack.c.l.b16 %v443
        %v997 = vunpack.c.h.b16 %v443
        %v998 = vunpack.c.l.b16 %v444
        %v999 = vunpack.c.h.b16 %v444
        %v1000 = vunpack.c.l.b16 %v445
        %v1001 = vunpack.c.h.b16 %v445
        %v1002 = vunpack.c.l.b16 %v446
        %v1003 = vunpack.c.h.b16 %v446
        %v1004 = vunpack.c.l.b16 %v447
        %v1005 = vunpack.c.h.b16 %v447
        %v1006 = vunpack.c.l.b16 %v448
        %v1007 = vunpack.c.h.b16 %v448
        %v1008 = vunpack.c.l.b16 %v449
        %v1009 = vunpack.c.h.b16 %v449
        %v1010 = vunpack.c.l.b16 %v450
        %v1011 = vunpack.c.h.b16 %v450
        %v1012 = vunpack.c.l.b16 %v451
        %v1013 = vunpack.c.h.b16 %v451
        %v1014 = vunpack.c.l.b16 %v452
        %v1015 = vunpack.c.h.b16 %v452
        %v1016 = vunpack.c.l.b16 %v453
        %v1017 = vunpack.c.h.b16 %v453
        %v1018 = vunpack.c.l.b16 %v454
        %v1019 = vunpack.c.h.b16 %v454
        %v1020 = vunpack.c.l.b16 %v455
        %v1021 = vunpack.c.h.b16 %v455
        %v1022 = vunpack.c.l.b16 %v456
        %v1023 = vunpack.c.h.b16 %v456
        %v1024 = vunpack.c.l.b16 %v457
        %v1025 = vunpack.c.h.b16 %v457
        %v1026 = vunpack.c.l.b16 %v458
        %v1027 = vunpack.c.h.b16 %v458
        %v1028 = vunpack.c.l.b16 %v459
        %v1029 = vunpack.c.h.b16 %v459
        %v1030 = vunpack.c.l.b16 %v460
        %v1031 = vunpack.c.h.b16 %v460
        %v1032 = vunpack.c.l.b16 %v461
        %v1033 = vunpack.c.h.b16 %v461
        %v1034 = vunpack.c.l.b16 %v462
        %v1035 = vunpack.c.h.b16 %v462
        %v1036 = vunpack.c.l.b16 %v463
        %v1037 = vunpack.c.h.b16 %v463
        %v1038 = vunpack.c.l.b16 %v464
        %v1039 = vunpack.c.h.b16 %v464
        %v1040 = vunpack.c.l.b16 %v465
        %v1041 = vunpack.c.h.b16 %v465
        %v1042 = vunpack.c.l.b16 %v466
        %v1043 = vunpack.c.h.b16 %v466
        %v1044 = vunpack.c.l.b16 %v467
        %v1045 = vunpack.c.h.b16 %v467
        %v1046 = vunpack.c.l.b16 %v468
        %v1047 = vunpack.c.h.b16 %v468
        %v1048 = vunpack.c.l.b16 %v469
        %v1049 = vunpack.c.h.b16 %v469
        %v1050 = vunpack.c.l.b16 %v470
        %v1051 = vunpack.c.h.b16 %v470
        %v1052 = vunpack.c.l.b16 %v471
        %v1053 = vunpack.c.h.b16 %v471
        %v1054 = vunpack.c.l.b16 %v472
        %v1055 = vunpack.c.h.b16 %v472
        %v1056 = vunpack.c.l.b16 %v473
        %v1057 = vunpack.c.h.b16 %v473
        %v1058 = vunpack.c.l.b16 %v474
        %v1059 = vunpack.c.h.b16 %v474
        %v1060 = vunpack.c.l.b16 %v475
        %v1061 = vunpack.c.h.b16 %v475
        %v1062 = vunpack.c.l.b16 %v476
        %v1063 = vunpack.c.h.b16 %v476
        %v1064 = vunpack.c.l.b16 %v477
        %v1065 = vunpack.c.h.b16 %v477
        %v1066 = vunpack.c.l.b16 %v478
        %v1067 = vunpack.c.h.b16 %v478
        %v1068 = vunpack.c.l.b16 %v479
        %v1069 = vunpack.c.h.b16 %v479
        %v1070 = vunpack.c.l.b16 %v480
        %v1071 = vunpack.c.h.b16 %v480
        %v1072 = vunpack.c.l.b16 %v481
        %v1073 = vunpack.c.h.b16 %v481
        %v1074 = vunpack.c.l.b16 %v482
        %v1075 = vunpack.c.h.b16 %v482
        %v1076 = vunpack.c.l.b16 %v483
        %v1077 = vunpack.c.h.b16 %v483
        %v1078 = vunpack.c.l.b16 %v484
        %v1079 = vunpack.c.h.b16 %v484
        %v1080 = vunpack.c.l.b16 %v485
        %v1081 = vunpack.c.h.b16 %v485
        %v1082 = vunpack.c.l.b16 %v486
        %v1083 = vunpack.c.h.b16 %v486
        %v1084 = vunpack.c.l.b16 %v487
        %v1085 = vunpack.c.h.b16 %v487
        %v1086 = vunpack.c.l.b16 %v488
        %v1087 = vunpack.c.h.b16 %v488
        %v1088 = vunpack.c.l.b16 %v489
        %v1089 = vunpack.c.h.b16 %v489
        %v1090 = vunpack.c.l.b16 %v490
        %v1091 = vunpack.c.h.b16 %v490
        %v1092 = vunpack.c.l.b16 %v491
        %v1093 = vunpack.c.h.b16 %v491
        %v1094 = vunpack.c.l.b16 %v492
        %v1095 = vunpack.c.h.b16 %v492
        %v1096 = vunpack.c.l.b16 %v493
        %v1097 = vunpack.c.h.b16 %v493
        %v1098 = vunpack.c.l.b16 %v494
        %v1099 = vunpack.c.h.b16 %v494
        %v1100 = vunpack.c.l.b16 %v495
        %v1101 = vunpack.c.h.b16 %v495
        %v1102 = vunpack.c.l.b16 %v496
        %v1103 = vunpack.c.h.b16 %v496
        %v1104 = vunpack.c.l.b16 %v497
        %v1105 = vunpack.c.h.b16 %v497
        %v1106 = vunpack.c.l.b16 %v498
        %v1107 = vunpack.c.h.b16 %v498
        %v1108 = vunpack.c.l.b16 %v499
        %v1109 = vunpack.c.h.b16 %v499
        %v1110 = vunpack.c.l.b16 %v500
        %v1111 = vunpack.c.h.b16 %v500
        %v1112 = vpack.c.b16 %v732, %v728
        %v1113 = vpack.c.b16 %v733, %v729
        %v1114 = vpack.c.b16 %v734, %v730
        %v1115 = vpack.c.b16 %v735, %v731
        %v1116 = vpack.c.b16 %v740, %v736
        %v1117 = vpack.c.b16 %v741, %v737
        %v1118 = vpack.c.b16 %v742, %v738
        %v1119 = vpack.c.b16 %v743, %v739
        %v1120 = vpack.c.b16 %v748, %v744
        %v1121 = vpack.c.b16 %v749, %v745
        %v1122 = vpack.c.b16 %v750, %v746
        %v1123 = vpack.c.b16 %v751, %v747
        %v1124 = vpack.c.b16 %v756, %v752
        %v1125 = vpack.c.b16 %v757, %v753
        %v1126 = vpack.c.b16 %v758, %v754
        %v1127 = vpack.c.b16 %v759, %v755
        %v1128 = vpack.c.b16 %v764, %v760
        %v1129 = vpack.c.b16 %v765, %v761
        %v1130 = vpack.c.b16 %v766, %v762
        %v1131 = vpack.c.b16 %v767, %v763
        %v1132 = vpack.c.b16 %v772, %v768
        %v1133 = vpack.c.b16 %v773, %v769
        %v1134 = vpack.c.b16 %v774, %v770
        %v1135 = vpack.c.b16 %v775, %v771
        %v1136 = vpack.c.b16 %v780, %v776
        %v1137 = vpack.c.b16 %v781, %v777
        %v1138 = vpack.c.b16 %v782, %v778
        %v1139 = vpack.c.b16 %v783, %v779
        %v1140 = vpack.c.b16 %v788, %v784
        %v1141 = vpack.c.b16 %v789, %v785
        %v1142 = vpack.c.b16 %v790, %v786
        %v1143 = vpack.c.b16 %v791, %v787
        %v1144 = vpack.c.b16 %v796, %v792
        %v1145 = vpack.c.b16 %v797, %v793
        %v1146 = vpack.c.b16 %v798, %v794
        %v1147 = vpack.c.b16 %v799, %v795
        %v1148 = vpack.c.b16 %v804, %v800
        %v1149 = vpack.c.b16 %v805, %v801
        %v1150 = vpack.c.b16 %v806, %v802
        %v1151 = vpack.c.b16 %v807, %v803
        %v1152 = vpack.c.b16 %v812, %v808
        %v1153 = vpack.c.b16 %v813, %v809
        %v1154 = vpack.c.b16 %v814, %v810
        %v1155 = vpack.c.b16 %v815, %v811
        %v1156 = vpack.c.b16 %v820, %v816
        %v1157 = vpack.c.b16 %v821, %v817
        %v1158 = vpack.c.b16 %v822, %v818
        %v1159 = vpack.c.b16 %v823, %v819
        %v1160 = vpack.c.b16 %v828, %v824
        %v1161 = vpack.c.b16 %v829, %v825
        %v1162 = vpack.c.b16 %v830, %v826
        %v1163 = vpack.c.b16 %v831, %v827
        %v1164 = vpack.c.b16 %v836, %v832
        %v1165 = vpack.c.b16 %v837, %v833
        %v1166 = vpack.c.b16 %v838, %v834
        %v1167 = vpack.c.b16 %v839, %v835
        %v1168 = vpack.c.b16 %v844, %v840
        %v1169 = vpack.c.b16 %v845, %v841
        %v1170 = vpack.c.b16 %v846, %v842
        %v1171 = vpack.c.b16 %v847, %v843
        %v1172 = vpack.c.b16 %v852, %v848
        %v1173 = vpack.c.b16 %v853, %v849
        %v1174 = vpack.c.b16 %v854, %v850
        %v1175 = vpack.c.b16 %v855, %v851
        %v1176 = vpack.c.b16 %v860, %v856
        %v1177 = vpack.c.b16 %v861, %v857
        %v1178 = vpack.c.b16 %v862, %v858
        %v1179 = vpack.c.b16 %v863, %v859
        %v1180 = vpack.c.b16 %v868, %v864
        %v1181 = vpack.c.b16 %v869, %v865
        %v1182 = vpack.c.b16 %v870, %v866
        %v1183 = vpack.c.b16 %v871, %v867
        %v1184 = vpack.c.b16 %v876, %v872
        %v1185 = vpack.c.b16 %v877, %v873
        %v1186 = vpack.c.b16 %v878, %v874
        %v1187 = vpack.c.b16 %v879, %v875
        %v1188 = vpack.c.b16 %v884, %v880
        %v1189 = vpack.c.b16 %v885, %v881
        %v1190 = vpack.c.b16 %v886, %v882
        %v1191 = vpack.c.b16 %v887, %v883
        %v1192 = vpack.c.b16 %v892, %v888
        %v1193 = vpack.c.b16 %v893, %v889
        %v1194 = vpack.c.b16 %v894, %v890
        %v1195 = vpack.c.b16 %v895, %v891
        %v1196 = vpack.c.b16 %v900, %v896
        %v1197 = vpack.c.b16 %v901, %v897
        %v1198 = vpack.c.b16 %v902, %v898
        %v1199 = vpack.c.b16 %v903, %v899
        %v1200 = vpack.c.b16 %v908, %v904
        %v1201 = vpack.c.b16 %v909, %v905
        %v1202 = vpack.c.b16 %v910, %v906
        %v1203 = vpack.c.b16 %v911, %v907
        %v1204 = vpack.c.b16 %v916, %v912
        %v1205 = vpack.c.b16 %v917, %v913
        %v1206 = vpack.c.b16 %v918, %v914
        %v1207 = vpack.c.b16 %v919, %v915
        %v1208 = vpack.c.b16 %v924, %v920
        %v1209 = vpack.c.b16 %v925, %v921
        %v1210 = vpack.c.b16 %v926, %v922
        %v1211 = vpack.c.b16 %v927, %v923
        %v1212 = vpack.c.b16 %v932, %v928
        %v1213 = vpack.c.b16 %v933, %v929
        %v1214 = vpack.c.b16 %v934, %v930
        %v1215 = vpack.c.b16 %v935, %v931
        %v1216 = vpack.c.b16 %v940, %v936
        %v1217 = vpack.c.b16 %v941, %v937
        %v1218 = vpack.c.b16 %v942, %v938
        %v1219 = vpack.c.b16 %v943, %v939
        %v1220 = vpack.c.b16 %v948, %v944
        %v1221 = vpack.c.b16 %v949, %v945
        %v1222 = vpack.c.b16 %v950, %v946
        %v1223 = vpack.c.b16 %v951, %v947
        %v1224 = vpack.c.b16 %v956, %v952
        %v1225 = vpack.c.b16 %v957, %v953
        %v1226 = vpack.c.b16 %v958, %v954
        %v1227 = vpack.c.b16 %v959, %v955
        %v1228 = vpack.c.b16 %v964, %v960
        %v1229 = vpack.c.b16 %v965, %v961
        %v1230 = vpack.c.b16 %v966, %v962
        %v1231 = vpack.c.b16 %v967, %v963
        %v1232 = vpack.c.b16 %v972, %v968
        %v1233 = vpack.c.b16 %v973, %v969
        %v1234 = vpack.c.b16 %v974, %v970
        %v1235 = vpack.c.b16 %v975, %v971
        %v1236 = vpack.c.b16 %v980, %v976
        %v1237 = vpack.c.b16 %v981, %v977
        %v1238 = vpack.c.b16 %v982, %v978
        %v1239 = vpack.c.b16 %v983, %v979
        %v1240 = vpack.c.b16 %v988, %v984
        %v1241 = vpack.c.b16 %v989, %v985
        %v1242 = vpack.c.b16 %v990, %v986
        %v1243 = vpack.c.b16 %v991, %v987
        %v1244 = vpack.c.b16 %v996, %v992
        %v1245 = vpack.c.b16 %v997, %v993
        %v1246 = vpack.c.b16 %v998, %v994
        %v1247 = vpack.c.b16 %v999, %v995
        %v1248 = vpack.c.b16 %v1004, %v1000
        %v1249 = vpack.c.b16 %v1005, %v1001
        %v1250 = vpack.c.b16 %v1006, %v1002
        %v1251 = vpack.c.b16 %v1007, %v1003
        %v1252 = vpack.c.b16 %v1012, %v1008
        %v1253 = vpack.c.b16 %v1013, %v1009
        %v1254 = vpack.c.b16 %v1014, %v1010
        %v1255 = vpack.c.b16 %v1015, %v1011
        %v1256 = vpack.c.b16 %v1020, %v1016
        %v1257 = vpack.c.b16 %v1021, %v1017
        %v1258 = vpack.c.b16 %v1022, %v1018
        %v1259 = vpack.c.b16 %v1023, %v1019
        %v1260 = vpack.c.b16 %v1028, %v1024
        %v1261 = vpack.c.b16 %v1029, %v1025
        %v1262 = vpack.c.b16 %v1030, %v1026
        %v1263 = vpack.c.b16 %v1031, %v1027
        %v1264 = vpack.c.b16 %v1036, %v1032
        %v1265 = vpack.c.b16 %v1037, %v1033
        %v1266 = vpack.c.b16 %v1038, %v1034
        %v1267 = vpack.c.b16 %v1039, %v1035
        %v1268 = vpack.c.b16 %v1044, %v1040
        %v1269 = vpack.c.b16 %v1045, %v1041
        %v1270 = vpack.c.b16 %v1046, %v1042
        %v1271 = vpack.c.b16 %v1047, %v1043
        %v1272 = vpack.c.b16 %v1052, %v1048
        %v1273 = vpack.c.b16 %v1053, %v1049
        %v1274 = vpack.c.b16 %v1054, %v1050
        %v1275 = vpack.c.b16 %v1055, %v1051
        %v1276 = vpack.c.b16 %v1060, %v1056
        %v1277 = vpack.c.b16 %v1061, %v1057
        %v1278 = vpack.c.b16 %v1062, %v1058
        %v1279 = vpack.c.b16 %v1063, %v1059
        %v1280 = vpack.c.b16 %v1068, %v1064
        %v1281 = vpack.c.b16 %v1069, %v1065
        %v1282 = vpack.c.b16 %v1070, %v1066
        %v1283 = vpack.c.b16 %v1071, %v1067
        %v1284 = vpack.c.b16 %v1076, %v1072
        %v1285 = vpack.c.b16 %v1077, %v1073
        %v1286 = vpack.c.b16 %v1078, %v1074
        %v1287 = vpack.c.b16 %v1079, %v1075
        %v1288 = vpack.c.b16 %v1084, %v1080
        %v1289 = vpack.c.b16 %v1085, %v1081
        %v1290 = vpack.c.b16 %v1086, %v1082
        %v1291 = vpack.c.b16 %v1087, %v1083
        %v1292 = vpack.c.b16 %v1092, %v1088
        %v1293 = vpack.c.b16 %v1093, %v1089
        %v1294 = vpack.c.b16 %v1094, %v1090
        %v1295 = vpack.c.b16 %v1095, %v1091
        %v1296 = vpack.c.b16 %v1100, %v1096
        %v1297 = vpack.c.b16 %v1101, %v1097
        %v1298 = vpack.c.b16 %v1102, %v1098
        %v1299 = vpack.c.b16 %v1103, %v1099
        %v1300 = vpack.c.b16 %v1108, %v1104
        %v1301 = vpack.c.b16 %v1109, %v1105
        %v1302 = vpack.c.b16 %v1110, %v1106
        %v1303 = vpack.c.b16 %v1111, %v1107
        %1496 = vmatpush.bf16.msra.mxu0 %v1140
        %1497 = vmatpush.bf16.msra.mxu0 %v1136
        %1498 = vmatpush.bf16.msra.mxu0 %v1132
        %1499 = vmatpush.bf16.msra.mxu0 %v1128
        %1500 = vmatpush.bf16.msra.mxu0 %v1124
        %1501 = vmatpush.bf16.msra.mxu0 %v1120
        %1502 = vmatpush.bf16.msra.mxu0 %v1116
        %1503 = vmatpush.bf16.msra.mxu0 %v1112
        %1504 = vmatmul.bf16.gmra.mxu0 %v524
        %v1505 = vpop.f32.mrf.mxu0
        %v1506 = vadd.f32 %v511, %v1505
        %v1507 = vpop.f32.mrf.mxu0
        %1508 = vdwg.mxu0
        %1509 = vmatpush.bf16.msra.mxu0 %v1172
        %1510 = vmatpush.bf16.msra.mxu0 %v1168
        %1511 = vmatpush.bf16.msra.mxu0 %v1164
        %1512 = vmatpush.bf16.msra.mxu0 %v1160
        %1513 = vmatpush.bf16.msra.mxu0 %v1156
        %1514 = vmatpush.bf16.msra.mxu0 %v1152
        %1515 = vmatpush.bf16.msra.mxu0 %v1148
        %1516 = vmatpush.bf16.msra.mxu0 %v1144
        %1517 = vmatmul.bf16.gmra.mxu0 %v525
        %v1518 = vpop.f32.mrf.mxu0
        %v1519 = vadd.f32 %v1506, %v1518
        %v1520 = vpop.f32.mrf.mxu0
        %1521 = vdwg.mxu0
        %1522 = vmatpush.bf16.msra.mxu0 %v1204
        %1523 = vmatpush.bf16.msra.mxu0 %v1200
        %1524 = vmatpush.bf16.msra.mxu0 %v1196
        %1525 = vmatpush.bf16.msra.mxu0 %v1192
        %1526 = vmatpush.bf16.msra.mxu0 %v1188
        %1527 = vmatpush.bf16.msra.mxu0 %v1184
        %1528 = vmatpush.bf16.msra.mxu0 %v1180
        %1529 = vmatpush.bf16.msra.mxu0 %v1176
        %1530 = vmatmul.bf16.gmra.mxu0 %v526
        %v1531 = vpop.f32.mrf.mxu0
        %v1532 = vadd.f32 %v1519, %v1531
        %v1533 = vpop.f32.mrf.mxu0
        %1534 = vdwg.mxu0
        %1535 = vmatpush.bf16.msra.mxu0 %v1236
        %1536 = vmatpush.bf16.msra.mxu0 %v1232
        %1537 = vmatpush.bf16.msra.mxu0 %v1228
        %1538 = vmatpush.bf16.msra.mxu0 %v1224
        %1539 = vmatpush.bf16.msra.mxu0 %v1220
        %1540 = vmatpush.bf16.msra.mxu0 %v1216
        %1541 = vmatpush.bf16.msra.mxu0 %v1212
        %1542 = vmatpush.bf16.msra.mxu0 %v1208
        %1543 = vmatmul.bf16.gmra.mxu0 %v527
        %v1544 = vpop.f32.mrf.mxu0
        %v1545 = vadd.f32 %v1532, %v1544
        %v1546 = vpop.f32.mrf.mxu0
        %1547 = vdwg.mxu0
        %1548 = vmatpush.bf16.msra.mxu0 %v1268
        %1549 = vmatpush.bf16.msra.mxu0 %v1264
        %1550 = vmatpush.bf16.msra.mxu0 %v1260
        %1551 = vmatpush.bf16.msra.mxu0 %v1256
        %1552 = vmatpush.bf16.msra.mxu0 %v1252
        %1553 = vmatpush.bf16.msra.mxu0 %v1248
        %1554 = vmatpush.bf16.msra.mxu0 %v1244
        %1555 = vmatpush.bf16.msra.mxu0 %v1240
        %1556 = vmatmul.bf16.gmra.mxu0 %v528
        %v1557 = vpop.f32.mrf.mxu0
        %v1558 = vadd.f32 %v1545, %v1557
        %v1559 = vpop.f32.mrf.mxu0
        %1560 = vdwg.mxu0
        %1561 = vmatpush.bf16.msra.mxu0 %v1300
        %1562 = vmatpush.bf16.msra.mxu0 %v1296
        %1563 = vmatpush.bf16.msra.mxu0 %v1292
        %1564 = vmatpush.bf16.msra.mxu0 %v1288
        %1565 = vmatpush.bf16.msra.mxu0 %v1284
        %1566 = vmatpush.bf16.msra.mxu0 %v1280
        %1567 = vmatpush.bf16.msra.mxu0 %v1276
        %1568 = vmatpush.bf16.msra.mxu0 %v1272
        %1569 = vmatmul.bf16.gmra.mxu0 %v529
        %v1570 = vpop.f32.mrf.mxu0
        %v1571 = vadd.f32 %v1558, %v1570
        %v1572 = vpop.f32.mrf.mxu0
        %1573 = vdwg.mxu0
        %1574 = vmatpush.bf16.msra.mxu0 %v1141
        %1575 = vmatpush.bf16.msra.mxu0 %v1137
        %1576 = vmatpush.bf16.msra.mxu0 %v1133
        %1577 = vmatpush.bf16.msra.mxu0 %v1129
        %1578 = vmatpush.bf16.msra.mxu0 %v1125
        %1579 = vmatpush.bf16.msra.mxu0 %v1121
        %1580 = vmatpush.bf16.msra.mxu0 %v1117
        %1581 = vmatpush.bf16.msra.mxu0 %v1113
        %1582 = vmatmul.bf16.gmra.mxu0 %v524
        %v1583 = vpop.f32.mrf.mxu0
        %v1584 = vadd.f32 %v512, %v1583
        %v1585 = vpop.f32.mrf.mxu0
        %1586 = vdwg.mxu0
        %1587 = vmatpush.bf16.msra.mxu0 %v1173
        %1588 = vmatpush.bf16.msra.mxu0 %v1169
        %1589 = vmatpush.bf16.msra.mxu0 %v1165
        %1590 = vmatpush.bf16.msra.mxu0 %v1161
        %1591 = vmatpush.bf16.msra.mxu0 %v1157
        %1592 = vmatpush.bf16.msra.mxu0 %v1153
        %1593 = vmatpush.bf16.msra.mxu0 %v1149
        %1594 = vmatpush.bf16.msra.mxu0 %v1145
        %1595 = vmatmul.bf16.gmra.mxu0 %v525
        %v1596 = vpop.f32.mrf.mxu0
        %v1597 = vadd.f32 %v1584, %v1596
        %v1598 = vpop.f32.mrf.mxu0
        %1599 = vdwg.mxu0
        %1600 = vmatpush.bf16.msra.mxu0 %v1205
        %1601 = vmatpush.bf16.msra.mxu0 %v1201
        %1602 = vmatpush.bf16.msra.mxu0 %v1197
        %1603 = vmatpush.bf16.msra.mxu0 %v1193
        %1604 = vmatpush.bf16.msra.mxu0 %v1189
        %1605 = vmatpush.bf16.msra.mxu0 %v1185
        %1606 = vmatpush.bf16.msra.mxu0 %v1181
        %1607 = vmatpush.bf16.msra.mxu0 %v1177
        %1608 = vmatmul.bf16.gmra.mxu0 %v526
        %v1609 = vpop.f32.mrf.mxu0
        %v1610 = vadd.f32 %v1597, %v1609
        %v1611 = vpop.f32.mrf.mxu0
        %1612 = vdwg.mxu0
        %1613 = vmatpush.bf16.msra.mxu0 %v1237
        %1614 = vmatpush.bf16.msra.mxu0 %v1233
        %1615 = vmatpush.bf16.msra.mxu0 %v1229
        %1616 = vmatpush.bf16.msra.mxu0 %v1225
        %1617 = vmatpush.bf16.msra.mxu0 %v1221
        %1618 = vmatpush.bf16.msra.mxu0 %v1217
        %1619 = vmatpush.bf16.msra.mxu0 %v1213
        %1620 = vmatpush.bf16.msra.mxu0 %v1209
        %1621 = vmatmul.bf16.gmra.mxu0 %v527
        %v1622 = vpop.f32.mrf.mxu0
        %v1623 = vadd.f32 %v1610, %v1622
        %v1624 = vpop.f32.mrf.mxu0
        %1625 = vdwg.mxu0
        %1626 = vmatpush.bf16.msra.mxu0 %v1269
        %1627 = vmatpush.bf16.msra.mxu0 %v1265
        %1628 = vmatpush.bf16.msra.mxu0 %v1261
        %1629 = vmatpush.bf16.msra.mxu0 %v1257
        %1630 = vmatpush.bf16.msra.mxu0 %v1253
        %1631 = vmatpush.bf16.msra.mxu0 %v1249
        %1632 = vmatpush.bf16.msra.mxu0 %v1245
        %1633 = vmatpush.bf16.msra.mxu0 %v1241
        %1634 = vmatmul.bf16.gmra.mxu0 %v528
        %v1635 = vpop.f32.mrf.mxu0
        %v1636 = vadd.f32 %v1623, %v1635
        %v1637 = vpop.f32.mrf.mxu0
        %1638 = vdwg.mxu0
        %1639 = vmatpush.bf16.msra.mxu0 %v1301
        %1640 = vmatpush.bf16.msra.mxu0 %v1297
        %1641 = vmatpush.bf16.msra.mxu0 %v1293
        %1642 = vmatpush.bf16.msra.mxu0 %v1289
        %1643 = vmatpush.bf16.msra.mxu0 %v1285
        %1644 = vmatpush.bf16.msra.mxu0 %v1281
        %1645 = vmatpush.bf16.msra.mxu0 %v1277
        %1646 = vmatpush.bf16.msra.mxu0 %v1273
        %1647 = vmatmul.bf16.gmra.mxu0 %v529
        %v1648 = vpop.f32.mrf.mxu0
        %v1649 = vadd.f32 %v1636, %v1648
        %v1650 = vpop.f32.mrf.mxu0
        %1651 = vdwg.mxu0
        %1652 = vmatpush.bf16.msra.mxu0 %v1142
        %1653 = vmatpush.bf16.msra.mxu0 %v1138
        %1654 = vmatpush.bf16.msra.mxu0 %v1134
        %1655 = vmatpush.bf16.msra.mxu0 %v1130
        %1656 = vmatpush.bf16.msra.mxu0 %v1126
        %1657 = vmatpush.bf16.msra.mxu0 %v1122
        %1658 = vmatpush.bf16.msra.mxu0 %v1118
        %1659 = vmatpush.bf16.msra.mxu0 %v1114
        %1660 = vmatmul.bf16.gmra.mxu0 %v524
        %v1661 = vpop.f32.mrf.mxu0
        %v1662 = vadd.f32 %v513, %v1661
        %v1663 = vpop.f32.mrf.mxu0
        %1664 = vdwg.mxu0
        %1665 = vmatpush.bf16.msra.mxu0 %v1174
        %1666 = vmatpush.bf16.msra.mxu0 %v1170
        %1667 = vmatpush.bf16.msra.mxu0 %v1166
        %1668 = vmatpush.bf16.msra.mxu0 %v1162
        %1669 = vmatpush.bf16.msra.mxu0 %v1158
        %1670 = vmatpush.bf16.msra.mxu0 %v1154
        %1671 = vmatpush.bf16.msra.mxu0 %v1150
        %1672 = vmatpush.bf16.msra.mxu0 %v1146
        %1673 = vmatmul.bf16.gmra.mxu0 %v525
        %v1674 = vpop.f32.mrf.mxu0
        %v1675 = vadd.f32 %v1662, %v1674
        %v1676 = vpop.f32.mrf.mxu0
        %1677 = vdwg.mxu0
        %1678 = vmatpush.bf16.msra.mxu0 %v1206
        %1679 = vmatpush.bf16.msra.mxu0 %v1202
        %1680 = vmatpush.bf16.msra.mxu0 %v1198
        %1681 = vmatpush.bf16.msra.mxu0 %v1194
        %1682 = vmatpush.bf16.msra.mxu0 %v1190
        %1683 = vmatpush.bf16.msra.mxu0 %v1186
        %1684 = vmatpush.bf16.msra.mxu0 %v1182
        %1685 = vmatpush.bf16.msra.mxu0 %v1178
        %1686 = vmatmul.bf16.gmra.mxu0 %v526
        %v1687 = vpop.f32.mrf.mxu0
        %v1688 = vadd.f32 %v1675, %v1687
        %v1689 = vpop.f32.mrf.mxu0
        %1690 = vdwg.mxu0
        %1691 = vmatpush.bf16.msra.mxu0 %v1238
        %1692 = vmatpush.bf16.msra.mxu0 %v1234
        %1693 = vmatpush.bf16.msra.mxu0 %v1230
        %1694 = vmatpush.bf16.msra.mxu0 %v1226
        %1695 = vmatpush.bf16.msra.mxu0 %v1222
        %1696 = vmatpush.bf16.msra.mxu0 %v1218
        %1697 = vmatpush.bf16.msra.mxu0 %v1214
        %1698 = vmatpush.bf16.msra.mxu0 %v1210
        %1699 = vmatmul.bf16.gmra.mxu0 %v527
        %v1700 = vpop.f32.mrf.mxu0
        %v1701 = vadd.f32 %v1688, %v1700
        %v1702 = vpop.f32.mrf.mxu0
        %1703 = vdwg.mxu0
        %1704 = vmatpush.bf16.msra.mxu0 %v1270
        %1705 = vmatpush.bf16.msra.mxu0 %v1266
        %1706 = vmatpush.bf16.msra.mxu0 %v1262
        %1707 = vmatpush.bf16.msra.mxu0 %v1258
        %1708 = vmatpush.bf16.msra.mxu0 %v1254
        %1709 = vmatpush.bf16.msra.mxu0 %v1250
        %1710 = vmatpush.bf16.msra.mxu0 %v1246
        %1711 = vmatpush.bf16.msra.mxu0 %v1242
        %1712 = vmatmul.bf16.gmra.mxu0 %v528
        %v1713 = vpop.f32.mrf.mxu0
        %v1714 = vadd.f32 %v1701, %v1713
        %v1715 = vpop.f32.mrf.mxu0
        %1716 = vdwg.mxu0
        %1717 = vmatpush.bf16.msra.mxu0 %v1302
        %1718 = vmatpush.bf16.msra.mxu0 %v1298
        %1719 = vmatpush.bf16.msra.mxu0 %v1294
        %1720 = vmatpush.bf16.msra.mxu0 %v1290
        %1721 = vmatpush.bf16.msra.mxu0 %v1286
        %1722 = vmatpush.bf16.msra.mxu0 %v1282
        %1723 = vmatpush.bf16.msra.mxu0 %v1278
        %1724 = vmatpush.bf16.msra.mxu0 %v1274
        %1725 = vmatmul.bf16.gmra.mxu0 %v529
        %v1726 = vpop.f32.mrf.mxu0
        %v1727 = vadd.f32 %v1714, %v1726
        %v1728 = vpop.f32.mrf.mxu0
        %1729 = vdwg.mxu0
        %1730 = vmatpush.bf16.msra.mxu0 %v1143
        %1731 = vmatpush.bf16.msra.mxu0 %v1139
        %1732 = vmatpush.bf16.msra.mxu0 %v1135
        %1733 = vmatpush.bf16.msra.mxu0 %v1131
        %1734 = vmatpush.bf16.msra.mxu0 %v1127
        %1735 = vmatpush.bf16.msra.mxu0 %v1123
        %1736 = vmatpush.bf16.msra.mxu0 %v1119
        %1737 = vmatpush.bf16.msra.mxu0 %v1115
        %1738 = vmatmul.bf16.gmra.mxu0 %v524
        %v1739 = vpop.f32.mrf.mxu0
        %v1740 = vadd.f32 %v514, %v1739
        %v1741 = vpop.f32.mrf.mxu0
        %1742 = vdwg.mxu0
        %1743 = vmatpush.bf16.msra.mxu0 %v1175
        %1744 = vmatpush.bf16.msra.mxu0 %v1171
        %1745 = vmatpush.bf16.msra.mxu0 %v1167
        %1746 = vmatpush.bf16.msra.mxu0 %v1163
        %1747 = vmatpush.bf16.msra.mxu0 %v1159
        %1748 = vmatpush.bf16.msra.mxu0 %v1155
        %1749 = vmatpush.bf16.msra.mxu0 %v1151
        %1750 = vmatpush.bf16.msra.mxu0 %v1147
        %1751 = vmatmul.bf16.gmra.mxu0 %v525
        %v1752 = vpop.f32.mrf.mxu0
        %v1753 = vadd.f32 %v1740, %v1752
        %v1754 = vpop.f32.mrf.mxu0
        %1755 = vdwg.mxu0
        %1756 = vmatpush.bf16.msra.mxu0 %v1207
        %1757 = vmatpush.bf16.msra.mxu0 %v1203
        %1758 = vmatpush.bf16.msra.mxu0 %v1199
        %1759 = vmatpush.bf16.msra.mxu0 %v1195
        %1760 = vmatpush.bf16.msra.mxu0 %v1191
        %1761 = vmatpush.bf16.msra.mxu0 %v1187
        %1762 = vmatpush.bf16.msra.mxu0 %v1183
        %1763 = vmatpush.bf16.msra.mxu0 %v1179
        %1764 = vmatmul.bf16.gmra.mxu0 %v526
        %v1765 = vpop.f32.mrf.mxu0
        %v1766 = vadd.f32 %v1753, %v1765
        %v1767 = vpop.f32.mrf.mxu0
        %1768 = vdwg.mxu0
        %1769 = vmatpush.bf16.msra.mxu0 %v1239
        %1770 = vmatpush.bf16.msra.mxu0 %v1235
        %1771 = vmatpush.bf16.msra.mxu0 %v1231
        %1772 = vmatpush.bf16.msra.mxu0 %v1227
        %1773 = vmatpush.bf16.msra.mxu0 %v1223
        %1774 = vmatpush.bf16.msra.mxu0 %v1219
        %1775 = vmatpush.bf16.msra.mxu0 %v1215
        %1776 = vmatpush.bf16.msra.mxu0 %v1211
        %1777 = vmatmul.bf16.gmra.mxu0 %v527
        %v1778 = vpop.f32.mrf.mxu0
        %v1779 = vadd.f32 %v1766, %v1778
        %v1780 = vpop.f32.mrf.mxu0
        %1781 = vdwg.mxu0
        %1782 = vmatpush.bf16.msra.mxu0 %v1271
        %1783 = vmatpush.bf16.msra.mxu0 %v1267
        %1784 = vmatpush.bf16.msra.mxu0 %v1263
        %1785 = vmatpush.bf16.msra.mxu0 %v1259
        %1786 = vmatpush.bf16.msra.mxu0 %v1255
        %1787 = vmatpush.bf16.msra.mxu0 %v1251
        %1788 = vmatpush.bf16.msra.mxu0 %v1247
        %1789 = vmatpush.bf16.msra.mxu0 %v1243
        %1790 = vmatmul.bf16.gmra.mxu0 %v528
        %v1791 = vpop.f32.mrf.mxu0
        %v1792 = vadd.f32 %v1779, %v1791
        %v1793 = vpop.f32.mrf.mxu0
        %1794 = vdwg.mxu0
        %1795 = vmatpush.bf16.msra.mxu0 %v1303
        %1796 = vmatpush.bf16.msra.mxu0 %v1299
        %1797 = vmatpush.bf16.msra.mxu0 %v1295
        %1798 = vmatpush.bf16.msra.mxu0 %v1291
        %1799 = vmatpush.bf16.msra.mxu0 %v1287
        %1800 = vmatpush.bf16.msra.mxu0 %v1283
        %1801 = vmatpush.bf16.msra.mxu0 %v1279
        %1802 = vmatpush.bf16.msra.mxu0 %v1275
        %1803 = vmatmul.bf16.gmra.mxu0 %v529
        %v1804 = vpop.f32.mrf.mxu0
        %v1805 = vadd.f32 %v1792, %v1804
        %v1806 = vpop.f32.mrf.mxu0
        %1807 = vdwg.mxu0
        %v1808 = vmax.f32 %v1571, 0.0
        %v1809 = vmax.f32 %v1649, 0.0
        %v1810 = vmax.f32 %v1727, 0.0
        %v1811 = vmax.f32 %v1805, 0.0
        %v1814 = vperm.slane %v305, 0
        %v1815 = vperm.slane %v305, 4
        %v1816 = vperm.slane %v306, 0
        %v1817 = vperm.slane %v306, 4
        %v1822 = vperm.slane %v1814, 0
        %v1823 = vperm.slane %v1815, 0
        %v1824 = vperm.slane %v1816, 0
        %v1825 = vperm.slane %v1817, 0
        %v1826 = vmul.f32 %v1808, %v1822
        %v1827 = vmul.f32 %v1809, %v1823
        %v1828 = vmul.f32 %v1810, %v1824
        %v1829 = vmul.f32 %v1811, %v1825
        %v1830 = vadd.f32 %v1826, %v1827
        %v1831 = vadd.f32 %v1830, %v1828
        %v1832 = vadd.f32 %v1831, %v1829
        %1833 = vadd.xlane.f32.xlu0 %v1832
        %v1834 = vpop.xlane.xlu0 %1833
        %s1835 = scalar_lea.vmem %s256, 1536 [#allocation5]
        %v1836 = vld [vmem:[%s1835] sm:$0xff]
        %v1837 = vld [vmem:[%s1835 + $0x8] sm:$0xff]
        %v1838 = vld [vmem:[%s1835 + $0x10] sm:$0xff]
        %v1839 = vld [vmem:[%s1835 + $0x18] sm:$0xff]
        %v1840 = vld [vmem:[%s1835 + $0x20] sm:$0xff]
        %v1841 = vld [vmem:[%s1835 + $0x28] sm:$0xff]
        %v1842 = vld [vmem:[%s1835 + $0x30] sm:$0xff]
        %v1843 = vld [vmem:[%s1835 + $0x38] sm:$0xff]
        %v1844 = vld [vmem:[%s1835 + $0x40] sm:$0xff]
        %v1845 = vld [vmem:[%s1835 + $0x48] sm:$0xff]
        %v1846 = vld [vmem:[%s1835 + $0x50] sm:$0xff]
        %v1847 = vld [vmem:[%s1835 + $0x58] sm:$0xff]
        %v1848 = vld [vmem:[%s1835 + $0x60] sm:$0xff]
        %v1849 = vld [vmem:[%s1835 + $0x68] sm:$0xff]
        %v1850 = vld [vmem:[%s1835 + $0x70] sm:$0xff]
        %v1851 = vld [vmem:[%s1835 + $0x78] sm:$0xff]
        %v1852 = vld [vmem:[%s1835 + $0x80] sm:$0xff]
        %v1853 = vld [vmem:[%s1835 + $0x88] sm:$0xff]
        %v1854 = vld [vmem:[%s1835 + $0x90] sm:$0xff]
        %v1855 = vld [vmem:[%s1835 + $0x98] sm:$0xff]
        %v1856 = vld [vmem:[%s1835 + $0xa0] sm:$0xff]
        %v1857 = vld [vmem:[%s1835 + $0xa8] sm:$0xff]
        %v1858 = vld [vmem:[%s1835 + $0xb0] sm:$0xff]
        %v1859 = vld [vmem:[%s1835 + $0xb8] sm:$0xff]
        %v1860 = vld [vmem:[%s1835 + $0xc0] sm:$0xff]
        %v1861 = vld [vmem:[%s1835 + $0xc8] sm:$0xff]
        %v1862 = vld [vmem:[%s1835 + $0xd0] sm:$0xff]
        %v1863 = vld [vmem:[%s1835 + $0xd8] sm:$0xff]
        %v1864 = vld [vmem:[%s1835 + $0xe0] sm:$0xff]
        %v1865 = vld [vmem:[%s1835 + $0xe8] sm:$0xff]
        %v1866 = vld [vmem:[%s1835 + $0xf0] sm:$0xff]
        %v1867 = vld [vmem:[%s1835 + $0xf8] sm:$0xff]
        %v1868 = vld [vmem:[%s1835 + $0x100] sm:$0xff]
        %v1869 = vld [vmem:[%s1835 + $0x108] sm:$0xff]
        %v1870 = vld [vmem:[%s1835 + $0x110] sm:$0xff]
        %v1871 = vld [vmem:[%s1835 + $0x118] sm:$0xff]
        %v1872 = vld [vmem:[%s1835 + $0x120] sm:$0xff]
        %v1873 = vld [vmem:[%s1835 + $0x128] sm:$0xff]
        %v1874 = vld [vmem:[%s1835 + $0x130] sm:$0xff]
        %v1875 = vld [vmem:[%s1835 + $0x138] sm:$0xff]
        %v1876 = vld [vmem:[%s1835 + $0x140] sm:$0xff]
        %v1877 = vld [vmem:[%s1835 + $0x148] sm:$0xff]
        %v1878 = vld [vmem:[%s1835 + $0x150] sm:$0xff]
        %v1879 = vld [vmem:[%s1835 + $0x158] sm:$0xff]
        %v1880 = vld [vmem:[%s1835 + $0x160] sm:$0xff]
        %v1881 = vld [vmem:[%s1835 + $0x168] sm:$0xff]
        %v1882 = vld [vmem:[%s1835 + $0x170] sm:$0xff]
        %v1883 = vld [vmem:[%s1835 + $0x178] sm:$0xff]
        %v1884 = vld [vmem:[%s1835 + $0x180] sm:$0xff]
        %v1885 = vld [vmem:[%s1835 + $0x188] sm:$0xff]
        %v1886 = vld [vmem:[%s1835 + $0x190] sm:$0xff]
        %v1887 = vld [vmem:[%s1835 + $0x198] sm:$0xff]
        %v1888 = vld [vmem:[%s1835 + $0x1a0] sm:$0xff]
        %v1889 = vld [vmem:[%s1835 + $0x1a8] sm:$0xff]
        %v1890 = vld [vmem:[%s1835 + $0x1b0] sm:$0xff]
        %v1891 = vld [vmem:[%s1835 + $0x1b8] sm:$0xff]
        %v1892 = vld [vmem:[%s1835 + $0x1c0] sm:$0xff]
        %v1893 = vld [vmem:[%s1835 + $0x1c8] sm:$0xff]
        %v1894 = vld [vmem:[%s1835 + $0x1d0] sm:$0xff]
        %v1895 = vld [vmem:[%s1835 + $0x1d8] sm:$0xff]
        %v1896 = vld [vmem:[%s1835 + $0x1e0] sm:$0xff]
        %v1897 = vld [vmem:[%s1835 + $0x1e8] sm:$0xff]
        %v1898 = vld [vmem:[%s1835 + $0x1f0] sm:$0xff]
        %v1899 = vld [vmem:[%s1835 + $0x1f8] sm:$0xff]
        %v1900 = vld [vmem:[%s1835 + $0x200] sm:$0xff]
        %v1901 = vld [vmem:[%s1835 + $0x208] sm:$0xff]
        %v1902 = vld [vmem:[%s1835 + $0x210] sm:$0xff]
        %v1903 = vld [vmem:[%s1835 + $0x218] sm:$0xff]
        %v1904 = vld [vmem:[%s1835 + $0x220] sm:$0xff]
        %v1905 = vld [vmem:[%s1835 + $0x228] sm:$0xff]
        %v1906 = vld [vmem:[%s1835 + $0x230] sm:$0xff]
        %v1907 = vld [vmem:[%s1835 + $0x238] sm:$0xff]
        %v1908 = vld [vmem:[%s1835 + $0x240] sm:$0xff]
        %v1909 = vld [vmem:[%s1835 + $0x248] sm:$0xff]
        %v1910 = vld [vmem:[%s1835 + $0x250] sm:$0xff]
        %v1911 = vld [vmem:[%s1835 + $0x258] sm:$0xff]
        %v1912 = vld [vmem:[%s1835 + $0x260] sm:$0xff]
        %v1913 = vld [vmem:[%s1835 + $0x268] sm:$0xff]
        %v1914 = vld [vmem:[%s1835 + $0x270] sm:$0xff]
        %v1915 = vld [vmem:[%s1835 + $0x278] sm:$0xff]
        %v1916 = vld [vmem:[%s1835 + $0x280] sm:$0xff]
        %v1917 = vld [vmem:[%s1835 + $0x288] sm:$0xff]
        %v1918 = vld [vmem:[%s1835 + $0x290] sm:$0xff]
        %v1919 = vld [vmem:[%s1835 + $0x298] sm:$0xff]
        %v1920 = vld [vmem:[%s1835 + $0x2a0] sm:$0xff]
        %v1921 = vld [vmem:[%s1835 + $0x2a8] sm:$0xff]
        %v1922 = vld [vmem:[%s1835 + $0x2b0] sm:$0xff]
        %v1923 = vld [vmem:[%s1835 + $0x2b8] sm:$0xff]
        %v1924 = vld [vmem:[%s1835 + $0x2c0] sm:$0xff]
        %v1925 = vld [vmem:[%s1835 + $0x2c8] sm:$0xff]
        %v1926 = vld [vmem:[%s1835 + $0x2d0] sm:$0xff]
        %v1927 = vld [vmem:[%s1835 + $0x2d8] sm:$0xff]
        %v1928 = vld [vmem:[%s1835 + $0x2e0] sm:$0xff]
        %v1929 = vld [vmem:[%s1835 + $0x2e8] sm:$0xff]
        %v1930 = vld [vmem:[%s1835 + $0x2f0] sm:$0xff]
        %v1931 = vld [vmem:[%s1835 + $0x2f8] sm:$0xff]
        %v1932 = vld [vmem:[%s1835 + $0x300] sm:$0xff]
        %v1933 = vld [vmem:[%s1835 + $0x308] sm:$0xff]
        %v1934 = vld [vmem:[%s1835 + $0x310] sm:$0xff]
        %v1935 = vld [vmem:[%s1835 + $0x318] sm:$0xff]
        %v1936 = vld [vmem:[%s1835 + $0x320] sm:$0xff]
        %v1937 = vld [vmem:[%s1835 + $0x328] sm:$0xff]
        %v1938 = vld [vmem:[%s1835 + $0x330] sm:$0xff]
        %v1939 = vld [vmem:[%s1835 + $0x338] sm:$0xff]
        %v1940 = vld [vmem:[%s1835 + $0x340] sm:$0xff]
        %v1941 = vld [vmem:[%s1835 + $0x348] sm:$0xff]
        %v1942 = vld [vmem:[%s1835 + $0x350] sm:$0xff]
        %v1943 = vld [vmem:[%s1835 + $0x358] sm:$0xff]
        %v1944 = vld [vmem:[%s1835 + $0x360] sm:$0xff]
        %v1945 = vld [vmem:[%s1835 + $0x368] sm:$0xff]
        %v1946 = vld [vmem:[%s1835 + $0x370] sm:$0xff]
        %v1947 = vld [vmem:[%s1835 + $0x378] sm:$0xff]
        %v1948 = vld [vmem:[%s1835 + $0x380] sm:$0xff]
        %v1949 = vld [vmem:[%s1835 + $0x388] sm:$0xff]
        %v1950 = vld [vmem:[%s1835 + $0x390] sm:$0xff]
        %v1951 = vld [vmem:[%s1835 + $0x398] sm:$0xff]
        %v1952 = vld [vmem:[%s1835 + $0x3a0] sm:$0xff]
        %v1953 = vld [vmem:[%s1835 + $0x3a8] sm:$0xff]
        %v1954 = vld [vmem:[%s1835 + $0x3b0] sm:$0xff]
        %v1955 = vld [vmem:[%s1835 + $0x3b8] sm:$0xff]
        %v1956 = vld [vmem:[%s1835 + $0x3c0] sm:$0xff]
        %v1957 = vld [vmem:[%s1835 + $0x3c8] sm:$0xff]
        %v1958 = vld [vmem:[%s1835 + $0x3d0] sm:$0xff]
        %v1959 = vld [vmem:[%s1835 + $0x3d8] sm:$0xff]
        %v1960 = vld [vmem:[%s1835 + $0x3e0] sm:$0xff]
        %v1961 = vld [vmem:[%s1835 + $0x3e8] sm:$0xff]
        %v1962 = vld [vmem:[%s1835 + $0x3f0] sm:$0xff]
        %v1963 = vld [vmem:[%s1835 + $0x3f8] sm:$0xff]
        %v1964 = vld [vmem:[%s1835 + $0x400] sm:$0xff]
        %v1965 = vld [vmem:[%s1835 + $0x408] sm:$0xff]
        %v1966 = vld [vmem:[%s1835 + $0x410] sm:$0xff]
        %v1967 = vld [vmem:[%s1835 + $0x418] sm:$0xff]
        %v1968 = vld [vmem:[%s1835 + $0x420] sm:$0xff]
        %v1969 = vld [vmem:[%s1835 + $0x428] sm:$0xff]
        %v1970 = vld [vmem:[%s1835 + $0x430] sm:$0xff]
        %v1971 = vld [vmem:[%s1835 + $0x438] sm:$0xff]
        %v1972 = vld [vmem:[%s1835 + $0x440] sm:$0xff]
        %v1973 = vld [vmem:[%s1835 + $0x448] sm:$0xff]
        %v1974 = vld [vmem:[%s1835 + $0x450] sm:$0xff]
        %v1975 = vld [vmem:[%s1835 + $0x458] sm:$0xff]
        %v1976 = vld [vmem:[%s1835 + $0x460] sm:$0xff]
        %v1977 = vld [vmem:[%s1835 + $0x468] sm:$0xff]
        %v1978 = vld [vmem:[%s1835 + $0x470] sm:$0xff]
        %v1979 = vld [vmem:[%s1835 + $0x478] sm:$0xff]
        %v1980 = vld [vmem:[%s1835 + $0x480] sm:$0xff]
        %v1981 = vld [vmem:[%s1835 + $0x488] sm:$0xff]
        %v1982 = vld [vmem:[%s1835 + $0x490] sm:$0xff]
        %v1983 = vld [vmem:[%s1835 + $0x498] sm:$0xff]
        %v1984 = vld [vmem:[%s1835 + $0x4a0] sm:$0xff]
        %v1985 = vld [vmem:[%s1835 + $0x4a8] sm:$0xff]
        %v1986 = vld [vmem:[%s1835 + $0x4b0] sm:$0xff]
        %v1987 = vld [vmem:[%s1835 + $0x4b8] sm:$0xff]
        %v1988 = vld [vmem:[%s1835 + $0x4c0] sm:$0xff]
        %v1989 = vld [vmem:[%s1835 + $0x4c8] sm:$0xff]
        %v1990 = vld [vmem:[%s1835 + $0x4d0] sm:$0xff]
        %v1991 = vld [vmem:[%s1835 + $0x4d8] sm:$0xff]
        %v1992 = vld [vmem:[%s1835 + $0x4e0] sm:$0xff]
        %v1993 = vld [vmem:[%s1835 + $0x4e8] sm:$0xff]
        %v1994 = vld [vmem:[%s1835 + $0x4f0] sm:$0xff]
        %v1995 = vld [vmem:[%s1835 + $0x4f8] sm:$0xff]
        %v1996 = vld [vmem:[%s1835 + $0x500] sm:$0xff]
        %v1997 = vld [vmem:[%s1835 + $0x508] sm:$0xff]
        %v1998 = vld [vmem:[%s1835 + $0x510] sm:$0xff]
        %v1999 = vld [vmem:[%s1835 + $0x518] sm:$0xff]
        %v2000 = vld [vmem:[%s1835 + $0x520] sm:$0xff]
        %v2001 = vld [vmem:[%s1835 + $0x528] sm:$0xff]
        %v2002 = vld [vmem:[%s1835 + $0x530] sm:$0xff]
        %v2003 = vld [vmem:[%s1835 + $0x538] sm:$0xff]
        %v2004 = vld [vmem:[%s1835 + $0x540] sm:$0xff]
        %v2005 = vld [vmem:[%s1835 + $0x548] sm:$0xff]
        %v2006 = vld [vmem:[%s1835 + $0x550] sm:$0xff]
        %v2007 = vld [vmem:[%s1835 + $0x558] sm:$0xff]
        %v2008 = vld [vmem:[%s1835 + $0x560] sm:$0xff]
        %v2009 = vld [vmem:[%s1835 + $0x568] sm:$0xff]
        %v2010 = vld [vmem:[%s1835 + $0x570] sm:$0xff]
        %v2011 = vld [vmem:[%s1835 + $0x578] sm:$0xff]
        %v2012 = vld [vmem:[%s1835 + $0x580] sm:$0xff]
        %v2013 = vld [vmem:[%s1835 + $0x588] sm:$0xff]
        %v2014 = vld [vmem:[%s1835 + $0x590] sm:$0xff]
        %v2015 = vld [vmem:[%s1835 + $0x598] sm:$0xff]
        %v2016 = vld [vmem:[%s1835 + $0x5a0] sm:$0xff]
        %v2017 = vld [vmem:[%s1835 + $0x5a8] sm:$0xff]
        %v2018 = vld [vmem:[%s1835 + $0x5b0] sm:$0xff]
        %v2019 = vld [vmem:[%s1835 + $0x5b8] sm:$0xff]
        %v2020 = vld [vmem:[%s1835 + $0x5c0] sm:$0xff]
        %v2021 = vld [vmem:[%s1835 + $0x5c8] sm:$0xff]
        %v2022 = vld [vmem:[%s1835 + $0x5d0] sm:$0xff]
        %v2023 = vld [vmem:[%s1835 + $0x5d8] sm:$0xff]
        %v2024 = vld [vmem:[%s1835 + $0x5e0] sm:$0xff]
        %v2025 = vld [vmem:[%s1835 + $0x5e8] sm:$0xff]
        %v2026 = vld [vmem:[%s1835 + $0x5f0] sm:$0xff]
        %v2027 = vld [vmem:[%s1835 + $0x5f8] sm:$0xff]
        %v2028 = vperm.slane %v301, 1
        %v2029 = vperm.slane %v301, 5
        %v2030 = vperm.slane %v302, 1
        %v2031 = vperm.slane %v302, 5
        %v2036 = vperm.slane %v2028, 1
        %v2037 = vperm.slane %v2029, 1
        %v2038 = vperm.slane %v2030, 1
        %v2039 = vperm.slane %v2031, 1
        %v2232 = vunpack.c.l.b16 %v1836
        %v2233 = vunpack.c.h.b16 %v1836
        %v2234 = vunpack.c.l.b16 %v1837
        %v2235 = vunpack.c.h.b16 %v1837
        %v2236 = vunpack.c.l.b16 %v1838
        %v2237 = vunpack.c.h.b16 %v1838
        %v2238 = vunpack.c.l.b16 %v1839
        %v2239 = vunpack.c.h.b16 %v1839
        %v2240 = vunpack.c.l.b16 %v1840
        %v2241 = vunpack.c.h.b16 %v1840
        %v2242 = vunpack.c.l.b16 %v1841
        %v2243 = vunpack.c.h.b16 %v1841
        %v2244 = vunpack.c.l.b16 %v1842
        %v2245 = vunpack.c.h.b16 %v1842
        %v2246 = vunpack.c.l.b16 %v1843
        %v2247 = vunpack.c.h.b16 %v1843
        %v2248 = vunpack.c.l.b16 %v1844
        %v2249 = vunpack.c.h.b16 %v1844
        %v2250 = vunpack.c.l.b16 %v1845
        %v2251 = vunpack.c.h.b16 %v1845
        %v2252 = vunpack.c.l.b16 %v1846
        %v2253 = vunpack.c.h.b16 %v1846
        %v2254 = vunpack.c.l.b16 %v1847
        %v2255 = vunpack.c.h.b16 %v1847
        %v2256 = vunpack.c.l.b16 %v1848
        %v2257 = vunpack.c.h.b16 %v1848
        %v2258 = vunpack.c.l.b16 %v1849
        %v2259 = vunpack.c.h.b16 %v1849
        %v2260 = vunpack.c.l.b16 %v1850
        %v2261 = vunpack.c.h.b16 %v1850
        %v2262 = vunpack.c.l.b16 %v1851
        %v2263 = vunpack.c.h.b16 %v1851
        %v2264 = vunpack.c.l.b16 %v1852
        %v2265 = vunpack.c.h.b16 %v1852
        %v2266 = vunpack.c.l.b16 %v1853
        %v2267 = vunpack.c.h.b16 %v1853
        %v2268 = vunpack.c.l.b16 %v1854
        %v2269 = vunpack.c.h.b16 %v1854
        %v2270 = vunpack.c.l.b16 %v1855
        %v2271 = vunpack.c.h.b16 %v1855
        %v2272 = vunpack.c.l.b16 %v1856
        %v2273 = vunpack.c.h.b16 %v1856
        %v2274 = vunpack.c.l.b16 %v1857
        %v2275 = vunpack.c.h.b16 %v1857
        %v2276 = vunpack.c.l.b16 %v1858
        %v2277 = vunpack.c.h.b16 %v1858
        %v2278 = vunpack.c.l.b16 %v1859
        %v2279 = vunpack.c.h.b16 %v1859
        %v2280 = vunpack.c.l.b16 %v1860
        %v2281 = vunpack.c.h.b16 %v1860
        %v2282 = vunpack.c.l.b16 %v1861
        %v2283 = vunpack.c.h.b16 %v1861
        %v2284 = vunpack.c.l.b16 %v1862
        %v2285 = vunpack.c.h.b16 %v1862
        %v2286 = vunpack.c.l.b16 %v1863
        %v2287 = vunpack.c.h.b16 %v1863
        %v2288 = vunpack.c.l.b16 %v1864
        %v2289 = vunpack.c.h.b16 %v1864
        %v2290 = vunpack.c.l.b16 %v1865
        %v2291 = vunpack.c.h.b16 %v1865
        %v2292 = vunpack.c.l.b16 %v1866
        %v2293 = vunpack.c.h.b16 %v1866
        %v2294 = vunpack.c.l.b16 %v1867
        %v2295 = vunpack.c.h.b16 %v1867
        %v2296 = vunpack.c.l.b16 %v1868
        %v2297 = vunpack.c.h.b16 %v1868
        %v2298 = vunpack.c.l.b16 %v1869
        %v2299 = vunpack.c.h.b16 %v1869
        %v2300 = vunpack.c.l.b16 %v1870
        %v2301 = vunpack.c.h.b16 %v1870
        %v2302 = vunpack.c.l.b16 %v1871
        %v2303 = vunpack.c.h.b16 %v1871
        %v2304 = vunpack.c.l.b16 %v1872
        %v2305 = vunpack.c.h.b16 %v1872
        %v2306 = vunpack.c.l.b16 %v1873
        %v2307 = vunpack.c.h.b16 %v1873
        %v2308 = vunpack.c.l.b16 %v1874
        %v2309 = vunpack.c.h.b16 %v1874
        %v2310 = vunpack.c.l.b16 %v1875
        %v2311 = vunpack.c.h.b16 %v1875
        %v2312 = vunpack.c.l.b16 %v1876
        %v2313 = vunpack.c.h.b16 %v1876
        %v2314 = vunpack.c.l.b16 %v1877
        %v2315 = vunpack.c.h.b16 %v1877
        %v2316 = vunpack.c.l.b16 %v1878
        %v2317 = vunpack.c.h.b16 %v1878
        %v2318 = vunpack.c.l.b16 %v1879
        %v2319 = vunpack.c.h.b16 %v1879
        %v2320 = vunpack.c.l.b16 %v1880
        %v2321 = vunpack.c.h.b16 %v1880
        %v2322 = vunpack.c.l.b16 %v1881
        %v2323 = vunpack.c.h.b16 %v1881
        %v2324 = vunpack.c.l.b16 %v1882
        %v2325 = vunpack.c.h.b16 %v1882
        %v2326 = vunpack.c.l.b16 %v1883
        %v2327 = vunpack.c.h.b16 %v1883
        %v2328 = vunpack.c.l.b16 %v1884
        %v2329 = vunpack.c.h.b16 %v1884
        %v2330 = vunpack.c.l.b16 %v1885
        %v2331 = vunpack.c.h.b16 %v1885
        %v2332 = vunpack.c.l.b16 %v1886
        %v2333 = vunpack.c.h.b16 %v1886
        %v2334 = vunpack.c.l.b16 %v1887
        %v2335 = vunpack.c.h.b16 %v1887
        %v2336 = vunpack.c.l.b16 %v1888
        %v2337 = vunpack.c.h.b16 %v1888
        %v2338 = vunpack.c.l.b16 %v1889
        %v2339 = vunpack.c.h.b16 %v1889
        %v2340 = vunpack.c.l.b16 %v1890
        %v2341 = vunpack.c.h.b16 %v1890
        %v2342 = vunpack.c.l.b16 %v1891
        %v2343 = vunpack.c.h.b16 %v1891
        %v2344 = vunpack.c.l.b16 %v1892
        %v2345 = vunpack.c.h.b16 %v1892
        %v2346 = vunpack.c.l.b16 %v1893
        %v2347 = vunpack.c.h.b16 %v1893
        %v2348 = vunpack.c.l.b16 %v1894
        %v2349 = vunpack.c.h.b16 %v1894
        %v2350 = vunpack.c.l.b16 %v1895
        %v2351 = vunpack.c.h.b16 %v1895
        %v2352 = vunpack.c.l.b16 %v1896
        %v2353 = vunpack.c.h.b16 %v1896
        %v2354 = vunpack.c.l.b16 %v1897
        %v2355 = vunpack.c.h.b16 %v1897
        %v2356 = vunpack.c.l.b16 %v1898
        %v2357 = vunpack.c.h.b16 %v1898
        %v2358 = vunpack.c.l.b16 %v1899
        %v2359 = vunpack.c.h.b16 %v1899
        %v2360 = vunpack.c.l.b16 %v1900
        %v2361 = vunpack.c.h.b16 %v1900
        %v2362 = vunpack.c.l.b16 %v1901
        %v2363 = vunpack.c.h.b16 %v1901
        %v2364 = vunpack.c.l.b16 %v1902
        %v2365 = vunpack.c.h.b16 %v1902
        %v2366 = vunpack.c.l.b16 %v1903
        %v2367 = vunpack.c.h.b16 %v1903
        %v2368 = vunpack.c.l.b16 %v1904
        %v2369 = vunpack.c.h.b16 %v1904
        %v2370 = vunpack.c.l.b16 %v1905
        %v2371 = vunpack.c.h.b16 %v1905
        %v2372 = vunpack.c.l.b16 %v1906
        %v2373 = vunpack.c.h.b16 %v1906
        %v2374 = vunpack.c.l.b16 %v1907
        %v2375 = vunpack.c.h.b16 %v1907
        %v2376 = vunpack.c.l.b16 %v1908
        %v2377 = vunpack.c.h.b16 %v1908
        %v2378 = vunpack.c.l.b16 %v1909
        %v2379 = vunpack.c.h.b16 %v1909
        %v2380 = vunpack.c.l.b16 %v1910
        %v2381 = vunpack.c.h.b16 %v1910
        %v2382 = vunpack.c.l.b16 %v1911
        %v2383 = vunpack.c.h.b16 %v1911
        %v2384 = vunpack.c.l.b16 %v1912
        %v2385 = vunpack.c.h.b16 %v1912
        %v2386 = vunpack.c.l.b16 %v1913
        %v2387 = vunpack.c.h.b16 %v1913
        %v2388 = vunpack.c.l.b16 %v1914
        %v2389 = vunpack.c.h.b16 %v1914
        %v2390 = vunpack.c.l.b16 %v1915
        %v2391 = vunpack.c.h.b16 %v1915
        %v2392 = vunpack.c.l.b16 %v1916
        %v2393 = vunpack.c.h.b16 %v1916
        %v2394 = vunpack.c.l.b16 %v1917
        %v2395 = vunpack.c.h.b16 %v1917
        %v2396 = vunpack.c.l.b16 %v1918
        %v2397 = vunpack.c.h.b16 %v1918
        %v2398 = vunpack.c.l.b16 %v1919
        %v2399 = vunpack.c.h.b16 %v1919
        %v2400 = vunpack.c.l.b16 %v1920
        %v2401 = vunpack.c.h.b16 %v1920
        %v2402 = vunpack.c.l.b16 %v1921
        %v2403 = vunpack.c.h.b16 %v1921
        %v2404 = vunpack.c.l.b16 %v1922
        %v2405 = vunpack.c.h.b16 %v1922
        %v2406 = vunpack.c.l.b16 %v1923
        %v2407 = vunpack.c.h.b16 %v1923
        %v2408 = vunpack.c.l.b16 %v1924
        %v2409 = vunpack.c.h.b16 %v1924
        %v2410 = vunpack.c.l.b16 %v1925
        %v2411 = vunpack.c.h.b16 %v1925
        %v2412 = vunpack.c.l.b16 %v1926
        %v2413 = vunpack.c.h.b16 %v1926
        %v2414 = vunpack.c.l.b16 %v1927
        %v2415 = vunpack.c.h.b16 %v1927
        %v2416 = vunpack.c.l.b16 %v1928
        %v2417 = vunpack.c.h.b16 %v1928
        %v2418 = vunpack.c.l.b16 %v1929
        %v2419 = vunpack.c.h.b16 %v1929
        %v2420 = vunpack.c.l.b16 %v1930
        %v2421 = vunpack.c.h.b16 %v1930
        %v2422 = vunpack.c.l.b16 %v1931
        %v2423 = vunpack.c.h.b16 %v1931
        %v2424 = vunpack.c.l.b16 %v1932
        %v2425 = vunpack.c.h.b16 %v1932
        %v2426 = vunpack.c.l.b16 %v1933
        %v2427 = vunpack.c.h.b16 %v1933
        %v2428 = vunpack.c.l.b16 %v1934
        %v2429 = vunpack.c.h.b16 %v1934
        %v2430 = vunpack.c.l.b16 %v1935
        %v2431 = vunpack.c.h.b16 %v1935
        %v2432 = vunpack.c.l.b16 %v1936
        %v2433 = vunpack.c.h.b16 %v1936
        %v2434 = vunpack.c.l.b16 %v1937
        %v2435 = vunpack.c.h.b16 %v1937
        %v2436 = vunpack.c.l.b16 %v1938
        %v2437 = vunpack.c.h.b16 %v1938
        %v2438 = vunpack.c.l.b16 %v1939
        %v2439 = vunpack.c.h.b16 %v1939
        %v2440 = vunpack.c.l.b16 %v1940
        %v2441 = vunpack.c.h.b16 %v1940
        %v2442 = vunpack.c.l.b16 %v1941
        %v2443 = vunpack.c.h.b16 %v1941
        %v2444 = vunpack.c.l.b16 %v1942
        %v2445 = vunpack.c.h.b16 %v1942
        %v2446 = vunpack.c.l.b16 %v1943
        %v2447 = vunpack.c.h.b16 %v1943
        %v2448 = vunpack.c.l.b16 %v1944
        %v2449 = vunpack.c.h.b16 %v1944
        %v2450 = vunpack.c.l.b16 %v1945
        %v2451 = vunpack.c.h.b16 %v1945
        %v2452 = vunpack.c.l.b16 %v1946
        %v2453 = vunpack.c.h.b16 %v1946
        %v2454 = vunpack.c.l.b16 %v1947
        %v2455 = vunpack.c.h.b16 %v1947
        %v2456 = vunpack.c.l.b16 %v1948
        %v2457 = vunpack.c.h.b16 %v1948
        %v2458 = vunpack.c.l.b16 %v1949
        %v2459 = vunpack.c.h.b16 %v1949
        %v2460 = vunpack.c.l.b16 %v1950
        %v2461 = vunpack.c.h.b16 %v1950
        %v2462 = vunpack.c.l.b16 %v1951
        %v2463 = vunpack.c.h.b16 %v1951
        %v2464 = vunpack.c.l.b16 %v1952
        %v2465 = vunpack.c.h.b16 %v1952
        %v2466 = vunpack.c.l.b16 %v1953
        %v2467 = vunpack.c.h.b16 %v1953
        %v2468 = vunpack.c.l.b16 %v1954
        %v2469 = vunpack.c.h.b16 %v1954
        %v2470 = vunpack.c.l.b16 %v1955
        %v2471 = vunpack.c.h.b16 %v1955
        %v2472 = vunpack.c.l.b16 %v1956
        %v2473 = vunpack.c.h.b16 %v1956
        %v2474 = vunpack.c.l.b16 %v1957
        %v2475 = vunpack.c.h.b16 %v1957
        %v2476 = vunpack.c.l.b16 %v1958
        %v2477 = vunpack.c.h.b16 %v1958
        %v2478 = vunpack.c.l.b16 %v1959
        %v2479 = vunpack.c.h.b16 %v1959
        %v2480 = vunpack.c.l.b16 %v1960
        %v2481 = vunpack.c.h.b16 %v1960
        %v2482 = vunpack.c.l.b16 %v1961
        %v2483 = vunpack.c.h.b16 %v1961
        %v2484 = vunpack.c.l.b16 %v1962
        %v2485 = vunpack.c.h.b16 %v1962
        %v2486 = vunpack.c.l.b16 %v1963
        %v2487 = vunpack.c.h.b16 %v1963
        %v2488 = vunpack.c.l.b16 %v1964
        %v2489 = vunpack.c.h.b16 %v1964
        %v2490 = vunpack.c.l.b16 %v1965
        %v2491 = vunpack.c.h.b16 %v1965
        %v2492 = vunpack.c.l.b16 %v1966
        %v2493 = vunpack.c.h.b16 %v1966
        %v2494 = vunpack.c.l.b16 %v1967
        %v2495 = vunpack.c.h.b16 %v1967
        %v2496 = vunpack.c.l.b16 %v1968
        %v2497 = vunpack.c.h.b16 %v1968
        %v2498 = vunpack.c.l.b16 %v1969
        %v2499 = vunpack.c.h.b16 %v1969
        %v2500 = vunpack.c.l.b16 %v1970
        %v2501 = vunpack.c.h.b16 %v1970
        %v2502 = vunpack.c.l.b16 %v1971
        %v2503 = vunpack.c.h.b16 %v1971
        %v2504 = vunpack.c.l.b16 %v1972
        %v2505 = vunpack.c.h.b16 %v1972
        %v2506 = vunpack.c.l.b16 %v1973
        %v2507 = vunpack.c.h.b16 %v1973
        %v2508 = vunpack.c.l.b16 %v1974
        %v2509 = vunpack.c.h.b16 %v1974
        %v2510 = vunpack.c.l.b16 %v1975
        %v2511 = vunpack.c.h.b16 %v1975
        %v2512 = vunpack.c.l.b16 %v1976
        %v2513 = vunpack.c.h.b16 %v1976
        %v2514 = vunpack.c.l.b16 %v1977
        %v2515 = vunpack.c.h.b16 %v1977
        %v2516 = vunpack.c.l.b16 %v1978
        %v2517 = vunpack.c.h.b16 %v1978
        %v2518 = vunpack.c.l.b16 %v1979
        %v2519 = vunpack.c.h.b16 %v1979
        %v2520 = vunpack.c.l.b16 %v1980
        %v2521 = vunpack.c.h.b16 %v1980
        %v2522 = vunpack.c.l.b16 %v1981
        %v2523 = vunpack.c.h.b16 %v1981
        %v2524 = vunpack.c.l.b16 %v1982
        %v2525 = vunpack.c.h.b16 %v1982
        %v2526 = vunpack.c.l.b16 %v1983
        %v2527 = vunpack.c.h.b16 %v1983
        %v2528 = vunpack.c.l.b16 %v1984
        %v2529 = vunpack.c.h.b16 %v1984
        %v2530 = vunpack.c.l.b16 %v1985
        %v2531 = vunpack.c.h.b16 %v1985
        %v2532 = vunpack.c.l.b16 %v1986
        %v2533 = vunpack.c.h.b16 %v1986
        %v2534 = vunpack.c.l.b16 %v1987
        %v2535 = vunpack.c.h.b16 %v1987
        %v2536 = vunpack.c.l.b16 %v1988
        %v2537 = vunpack.c.h.b16 %v1988
        %v2538 = vunpack.c.l.b16 %v1989
        %v2539 = vunpack.c.h.b16 %v1989
        %v2540 = vunpack.c.l.b16 %v1990
        %v2541 = vunpack.c.h.b16 %v1990
        %v2542 = vunpack.c.l.b16 %v1991
        %v2543 = vunpack.c.h.b16 %v1991
        %v2544 = vunpack.c.l.b16 %v1992
        %v2545 = vunpack.c.h.b16 %v1992
        %v2546 = vunpack.c.l.b16 %v1993
        %v2547 = vunpack.c.h.b16 %v1993
        %v2548 = vunpack.c.l.b16 %v1994
        %v2549 = vunpack.c.h.b16 %v1994
        %v2550 = vunpack.c.l.b16 %v1995
        %v2551 = vunpack.c.h.b16 %v1995
        %v2552 = vunpack.c.l.b16 %v1996
        %v2553 = vunpack.c.h.b16 %v1996
        %v2554 = vunpack.c.l.b16 %v1997
        %v2555 = vunpack.c.h.b16 %v1997
        %v2556 = vunpack.c.l.b16 %v1998
        %v2557 = vunpack.c.h.b16 %v1998
        %v2558 = vunpack.c.l.b16 %v1999
        %v2559 = vunpack.c.h.b16 %v1999
        %v2560 = vunpack.c.l.b16 %v2000
        %v2561 = vunpack.c.h.b16 %v2000
        %v2562 = vunpack.c.l.b16 %v2001
        %v2563 = vunpack.c.h.b16 %v2001
        %v2564 = vunpack.c.l.b16 %v2002
        %v2565 = vunpack.c.h.b16 %v2002
        %v2566 = vunpack.c.l.b16 %v2003
        %v2567 = vunpack.c.h.b16 %v2003
        %v2568 = vunpack.c.l.b16 %v2004
        %v2569 = vunpack.c.h.b16 %v2004
        %v2570 = vunpack.c.l.b16 %v2005
        %v2571 = vunpack.c.h.b16 %v2005
        %v2572 = vunpack.c.l.b16 %v2006
        %v2573 = vunpack.c.h.b16 %v2006
        %v2574 = vunpack.c.l.b16 %v2007
        %v2575 = vunpack.c.h.b16 %v2007
        %v2576 = vunpack.c.l.b16 %v2008
        %v2577 = vunpack.c.h.b16 %v2008
        %v2578 = vunpack.c.l.b16 %v2009
        %v2579 = vunpack.c.h.b16 %v2009
        %v2580 = vunpack.c.l.b16 %v2010
        %v2581 = vunpack.c.h.b16 %v2010
        %v2582 = vunpack.c.l.b16 %v2011
        %v2583 = vunpack.c.h.b16 %v2011
        %v2584 = vunpack.c.l.b16 %v2012
        %v2585 = vunpack.c.h.b16 %v2012
        %v2586 = vunpack.c.l.b16 %v2013
        %v2587 = vunpack.c.h.b16 %v2013
        %v2588 = vunpack.c.l.b16 %v2014
        %v2589 = vunpack.c.h.b16 %v2014
        %v2590 = vunpack.c.l.b16 %v2015
        %v2591 = vunpack.c.h.b16 %v2015
        %v2592 = vunpack.c.l.b16 %v2016
        %v2593 = vunpack.c.h.b16 %v2016
        %v2594 = vunpack.c.l.b16 %v2017
        %v2595 = vunpack.c.h.b16 %v2017
        %v2596 = vunpack.c.l.b16 %v2018
        %v2597 = vunpack.c.h.b16 %v2018
        %v2598 = vunpack.c.l.b16 %v2019
        %v2599 = vunpack.c.h.b16 %v2019
        %v2600 = vunpack.c.l.b16 %v2020
        %v2601 = vunpack.c.h.b16 %v2020
        %v2602 = vunpack.c.l.b16 %v2021
        %v2603 = vunpack.c.h.b16 %v2021
        %v2604 = vunpack.c.l.b16 %v2022
        %v2605 = vunpack.c.h.b16 %v2022
        %v2606 = vunpack.c.l.b16 %v2023
        %v2607 = vunpack.c.h.b16 %v2023
        %v2608 = vunpack.c.l.b16 %v2024
        %v2609 = vunpack.c.h.b16 %v2024
        %v2610 = vunpack.c.l.b16 %v2025
        %v2611 = vunpack.c.h.b16 %v2025
        %v2612 = vunpack.c.l.b16 %v2026
        %v2613 = vunpack.c.h.b16 %v2026
        %v2614 = vunpack.c.l.b16 %v2027
        %v2615 = vunpack.c.h.b16 %v2027
        %v2616 = vpack.c.b16 %v2236, %v2232
        %v2617 = vpack.c.b16 %v2237, %v2233
        %v2618 = vpack.c.b16 %v2238, %v2234
        %v2619 = vpack.c.b16 %v2239, %v2235
        %v2620 = vpack.c.b16 %v2244, %v2240
        %v2621 = vpack.c.b16 %v2245, %v2241
        %v2622 = vpack.c.b16 %v2246, %v2242
        %v2623 = vpack.c.b16 %v2247, %v2243
        %v2624 = vpack.c.b16 %v2252, %v2248
        %v2625 = vpack.c.b16 %v2253, %v2249
        %v2626 = vpack.c.b16 %v2254, %v2250
        %v2627 = vpack.c.b16 %v2255, %v2251
        %v2628 = vpack.c.b16 %v2260, %v2256
        %v2629 = vpack.c.b16 %v2261, %v2257
        %v2630 = vpack.c.b16 %v2262, %v2258
        %v2631 = vpack.c.b16 %v2263, %v2259
        %v2632 = vpack.c.b16 %v2268, %v2264
        %v2633 = vpack.c.b16 %v2269, %v2265
        %v2634 = vpack.c.b16 %v2270, %v2266
        %v2635 = vpack.c.b16 %v2271, %v2267
        %v2636 = vpack.c.b16 %v2276, %v2272
        %v2637 = vpack.c.b16 %v2277, %v2273
        %v2638 = vpack.c.b16 %v2278, %v2274
        %v2639 = vpack.c.b16 %v2279, %v2275
        %v2640 = vpack.c.b16 %v2284, %v2280
        %v2641 = vpack.c.b16 %v2285, %v2281
        %v2642 = vpack.c.b16 %v2286, %v2282
        %v2643 = vpack.c.b16 %v2287, %v2283
        %v2644 = vpack.c.b16 %v2292, %v2288
        %v2645 = vpack.c.b16 %v2293, %v2289
        %v2646 = vpack.c.b16 %v2294, %v2290
        %v2647 = vpack.c.b16 %v2295, %v2291
        %v2648 = vpack.c.b16 %v2300, %v2296
        %v2649 = vpack.c.b16 %v2301, %v2297
        %v2650 = vpack.c.b16 %v2302, %v2298
        %v2651 = vpack.c.b16 %v2303, %v2299
        %v2652 = vpack.c.b16 %v2308, %v2304
        %v2653 = vpack.c.b16 %v2309, %v2305
        %v2654 = vpack.c.b16 %v2310, %v2306
        %v2655 = vpack.c.b16 %v2311, %v2307
        %v2656 = vpack.c.b16 %v2316, %v2312
        %v2657 = vpack.c.b16 %v2317, %v2313
        %v2658 = vpack.c.b16 %v2318, %v2314
        %v2659 = vpack.c.b16 %v2319, %v2315
        %v2660 = vpack.c.b16 %v2324, %v2320
        %v2661 = vpack.c.b16 %v2325, %v2321
        %v2662 = vpack.c.b16 %v2326, %v2322
        %v2663 = vpack.c.b16 %v2327, %v2323
        %v2664 = vpack.c.b16 %v2332, %v2328
        %v2665 = vpack.c.b16 %v2333, %v2329
        %v2666 = vpack.c.b16 %v2334, %v2330
        %v2667 = vpack.c.b16 %v2335, %v2331
        %v2668 = vpack.c.b16 %v2340, %v2336
        %v2669 = vpack.c.b16 %v2341, %v2337
        %v2670 = vpack.c.b16 %v2342, %v2338
        %v2671 = vpack.c.b16 %v2343, %v2339
        %v2672 = vpack.c.b16 %v2348, %v2344
        %v2673 = vpack.c.b16 %v2349, %v2345
        %v2674 = vpack.c.b16 %v2350, %v2346
        %v2675 = vpack.c.b16 %v2351, %v2347
        %v2676 = vpack.c.b16 %v2356, %v2352
        %v2677 = vpack.c.b16 %v2357, %v2353
        %v2678 = vpack.c.b16 %v2358, %v2354
        %v2679 = vpack.c.b16 %v2359, %v2355
        %v2680 = vpack.c.b16 %v2364, %v2360
        %v2681 = vpack.c.b16 %v2365, %v2361
        %v2682 = vpack.c.b16 %v2366, %v2362
        %v2683 = vpack.c.b16 %v2367, %v2363
        %v2684 = vpack.c.b16 %v2372, %v2368
        %v2685 = vpack.c.b16 %v2373, %v2369
        %v2686 = vpack.c.b16 %v2374, %v2370
        %v2687 = vpack.c.b16 %v2375, %v2371
        %v2688 = vpack.c.b16 %v2380, %v2376
        %v2689 = vpack.c.b16 %v2381, %v2377
        %v2690 = vpack.c.b16 %v2382, %v2378
        %v2691 = vpack.c.b16 %v2383, %v2379
        %v2692 = vpack.c.b16 %v2388, %v2384
        %v2693 = vpack.c.b16 %v2389, %v2385
        %v2694 = vpack.c.b16 %v2390, %v2386
        %v2695 = vpack.c.b16 %v2391, %v2387
        %v2696 = vpack.c.b16 %v2396, %v2392
        %v2697 = vpack.c.b16 %v2397, %v2393
        %v2698 = vpack.c.b16 %v2398, %v2394
        %v2699 = vpack.c.b16 %v2399, %v2395
        %v2700 = vpack.c.b16 %v2404, %v2400
        %v2701 = vpack.c.b16 %v2405, %v2401
        %v2702 = vpack.c.b16 %v2406, %v2402
        %v2703 = vpack.c.b16 %v2407, %v2403
        %v2704 = vpack.c.b16 %v2412, %v2408
        %v2705 = vpack.c.b16 %v2413, %v2409
        %v2706 = vpack.c.b16 %v2414, %v2410
        %v2707 = vpack.c.b16 %v2415, %v2411
        %v2708 = vpack.c.b16 %v2420, %v2416
        %v2709 = vpack.c.b16 %v2421, %v2417
        %v2710 = vpack.c.b16 %v2422, %v2418
        %v2711 = vpack.c.b16 %v2423, %v2419
        %v2712 = vpack.c.b16 %v2428, %v2424
        %v2713 = vpack.c.b16 %v2429, %v2425
        %v2714 = vpack.c.b16 %v2430, %v2426
        %v2715 = vpack.c.b16 %v2431, %v2427
        %v2716 = vpack.c.b16 %v2436, %v2432
        %v2717 = vpack.c.b16 %v2437, %v2433
        %v2718 = vpack.c.b16 %v2438, %v2434
        %v2719 = vpack.c.b16 %v2439, %v2435
        %v2720 = vpack.c.b16 %v2444, %v2440
        %v2721 = vpack.c.b16 %v2445, %v2441
        %v2722 = vpack.c.b16 %v2446, %v2442
        %v2723 = vpack.c.b16 %v2447, %v2443
        %v2724 = vpack.c.b16 %v2452, %v2448
        %v2725 = vpack.c.b16 %v2453, %v2449
        %v2726 = vpack.c.b16 %v2454, %v2450
        %v2727 = vpack.c.b16 %v2455, %v2451
        %v2728 = vpack.c.b16 %v2460, %v2456
        %v2729 = vpack.c.b16 %v2461, %v2457
        %v2730 = vpack.c.b16 %v2462, %v2458
        %v2731 = vpack.c.b16 %v2463, %v2459
        %v2732 = vpack.c.b16 %v2468, %v2464
        %v2733 = vpack.c.b16 %v2469, %v2465
        %v2734 = vpack.c.b16 %v2470, %v2466
        %v2735 = vpack.c.b16 %v2471, %v2467
        %v2736 = vpack.c.b16 %v2476, %v2472
        %v2737 = vpack.c.b16 %v2477, %v2473
        %v2738 = vpack.c.b16 %v2478, %v2474
        %v2739 = vpack.c.b16 %v2479, %v2475
        %v2740 = vpack.c.b16 %v2484, %v2480
        %v2741 = vpack.c.b16 %v2485, %v2481
        %v2742 = vpack.c.b16 %v2486, %v2482
        %v2743 = vpack.c.b16 %v2487, %v2483
        %v2744 = vpack.c.b16 %v2492, %v2488
        %v2745 = vpack.c.b16 %v2493, %v2489
        %v2746 = vpack.c.b16 %v2494, %v2490
        %v2747 = vpack.c.b16 %v2495, %v2491
        %v2748 = vpack.c.b16 %v2500, %v2496
        %v2749 = vpack.c.b16 %v2501, %v2497
        %v2750 = vpack.c.b16 %v2502, %v2498
        %v2751 = vpack.c.b16 %v2503, %v2499
        %v2752 = vpack.c.b16 %v2508, %v2504
        %v2753 = vpack.c.b16 %v2509, %v2505
        %v2754 = vpack.c.b16 %v2510, %v2506
        %v2755 = vpack.c.b16 %v2511, %v2507
        %v2756 = vpack.c.b16 %v2516, %v2512
        %v2757 = vpack.c.b16 %v2517, %v2513
        %v2758 = vpack.c.b16 %v2518, %v2514
        %v2759 = vpack.c.b16 %v2519, %v2515
        %v2760 = vpack.c.b16 %v2524, %v2520
        %v2761 = vpack.c.b16 %v2525, %v2521
        %v2762 = vpack.c.b16 %v2526, %v2522
        %v2763 = vpack.c.b16 %v2527, %v2523
        %v2764 = vpack.c.b16 %v2532, %v2528
        %v2765 = vpack.c.b16 %v2533, %v2529
        %v2766 = vpack.c.b16 %v2534, %v2530
        %v2767 = vpack.c.b16 %v2535, %v2531
        %v2768 = vpack.c.b16 %v2540, %v2536
        %v2769 = vpack.c.b16 %v2541, %v2537
        %v2770 = vpack.c.b16 %v2542, %v2538
        %v2771 = vpack.c.b16 %v2543, %v2539
        %v2772 = vpack.c.b16 %v2548, %v2544
        %v2773 = vpack.c.b16 %v2549, %v2545
        %v2774 = vpack.c.b16 %v2550, %v2546
        %v2775 = vpack.c.b16 %v2551, %v2547
        %v2776 = vpack.c.b16 %v2556, %v2552
        %v2777 = vpack.c.b16 %v2557, %v2553
        %v2778 = vpack.c.b16 %v2558, %v2554
        %v2779 = vpack.c.b16 %v2559, %v2555
        %v2780 = vpack.c.b16 %v2564, %v2560
        %v2781 = vpack.c.b16 %v2565, %v2561
        %v2782 = vpack.c.b16 %v2566, %v2562
        %v2783 = vpack.c.b16 %v2567, %v2563
        %v2784 = vpack.c.b16 %v2572, %v2568
        %v2785 = vpack.c.b16 %v2573, %v2569
        %v2786 = vpack.c.b16 %v2574, %v2570
        %v2787 = vpack.c.b16 %v2575, %v2571
        %v2788 = vpack.c.b16 %v2580, %v2576
        %v2789 = vpack.c.b16 %v2581, %v2577
        %v2790 = vpack.c.b16 %v2582, %v2578
        %v2791 = vpack.c.b16 %v2583, %v2579
        %v2792 = vpack.c.b16 %v2588, %v2584
        %v2793 = vpack.c.b16 %v2589, %v2585
        %v2794 = vpack.c.b16 %v2590, %v2586
        %v2795 = vpack.c.b16 %v2591, %v2587
        %v2796 = vpack.c.b16 %v2596, %v2592
        %v2797 = vpack.c.b16 %v2597, %v2593
        %v2798 = vpack.c.b16 %v2598, %v2594
        %v2799 = vpack.c.b16 %v2599, %v2595
        %v2800 = vpack.c.b16 %v2604, %v2600
        %v2801 = vpack.c.b16 %v2605, %v2601
        %v2802 = vpack.c.b16 %v2606, %v2602
        %v2803 = vpack.c.b16 %v2607, %v2603
        %v2804 = vpack.c.b16 %v2612, %v2608
        %v2805 = vpack.c.b16 %v2613, %v2609
        %v2806 = vpack.c.b16 %v2614, %v2610
        %v2807 = vpack.c.b16 %v2615, %v2611
        %3000 = vmatpush.bf16.msra.mxu0 %v2644
        %3001 = vmatpush.bf16.msra.mxu0 %v2640
        %3002 = vmatpush.bf16.msra.mxu0 %v2636
        %3003 = vmatpush.bf16.msra.mxu0 %v2632
        %3004 = vmatpush.bf16.msra.mxu0 %v2628
        %3005 = vmatpush.bf16.msra.mxu0 %v2624
        %3006 = vmatpush.bf16.msra.mxu0 %v2620
        %3007 = vmatpush.bf16.msra.mxu0 %v2616
        %3008 = vmatmul.bf16.gmra.mxu0 %v524
        %v3009 = vpop.f32.mrf.mxu0
        %v3010 = vadd.f32 %v2036, %v3009
        %v3011 = vpop.f32.mrf.mxu0
        %3012 = vdwg.mxu0
        %3013 = vmatpush.bf16.msra.mxu0 %v2676
        %3014 = vmatpush.bf16.msra.mxu0 %v2672
        %3015 = vmatpush.bf16.msra.mxu0 %v2668
        %3016 = vmatpush.bf16.msra.mxu0 %v2664
        %3017 = vmatpush.bf16.msra.mxu0 %v2660
        %3018 = vmatpush.bf16.msra.mxu0 %v2656
        %3019 = vmatpush.bf16.msra.mxu0 %v2652
        %3020 = vmatpush.bf16.msra.mxu0 %v2648
        %3021 = vmatmul.bf16.gmra.mxu0 %v525
        %v3022 = vpop.f32.mrf.mxu0
        %v3023 = vadd.f32 %v3010, %v3022
        %v3024 = vpop.f32.mrf.mxu0
        %3025 = vdwg.mxu0
        %3026 = vmatpush.bf16.msra.mxu0 %v2708
        %3027 = vmatpush.bf16.msra.mxu0 %v2704
        %3028 = vmatpush.bf16.msra.mxu0 %v2700
        %3029 = vmatpush.bf16.msra.mxu0 %v2696
        %3030 = vmatpush.bf16.msra.mxu0 %v2692
        %3031 = vmatpush.bf16.msra.mxu0 %v2688
        %3032 = vmatpush.bf16.msra.mxu0 %v2684
        %3033 = vmatpush.bf16.msra.mxu0 %v2680
        %3034 = vmatmul.bf16.gmra.mxu0 %v526
        %v3035 = vpop.f32.mrf.mxu0
        %v3036 = vadd.f32 %v3023, %v3035
        %v3037 = vpop.f32.mrf.mxu0
        %3038 = vdwg.mxu0
        %3039 = vmatpush.bf16.msra.mxu0 %v2740
        %3040 = vmatpush.bf16.msra.mxu0 %v2736
        %3041 = vmatpush.bf16.msra.mxu0 %v2732
        %3042 = vmatpush.bf16.msra.mxu0 %v2728
        %3043 = vmatpush.bf16.msra.mxu0 %v2724
        %3044 = vmatpush.bf16.msra.mxu0 %v2720
        %3045 = vmatpush.bf16.msra.mxu0 %v2716
        %3046 = vmatpush.bf16.msra.mxu0 %v2712
        %3047 = vmatmul.bf16.gmra.mxu0 %v527
        %v3048 = vpop.f32.mrf.mxu0
        %v3049 = vadd.f32 %v3036, %v3048
        %v3050 = vpop.f32.mrf.mxu0
        %3051 = vdwg.mxu0
        %3052 = vmatpush.bf16.msra.mxu0 %v2772
        %3053 = vmatpush.bf16.msra.mxu0 %v2768
        %3054 = vmatpush.bf16.msra.mxu0 %v2764
        %3055 = vmatpush.bf16.msra.mxu0 %v2760
        %3056 = vmatpush.bf16.msra.mxu0 %v2756
        %3057 = vmatpush.bf16.msra.mxu0 %v2752
        %3058 = vmatpush.bf16.msra.mxu0 %v2748
        %3059 = vmatpush.bf16.msra.mxu0 %v2744
        %3060 = vmatmul.bf16.gmra.mxu0 %v528
        %v3061 = vpop.f32.mrf.mxu0
        %v3062 = vadd.f32 %v3049, %v3061
        %v3063 = vpop.f32.mrf.mxu0
        %3064 = vdwg.mxu0
        %3065 = vmatpush.bf16.msra.mxu0 %v2804
        %3066 = vmatpush.bf16.msra.mxu0 %v2800
        %3067 = vmatpush.bf16.msra.mxu0 %v2796
        %3068 = vmatpush.bf16.msra.mxu0 %v2792
        %3069 = vmatpush.bf16.msra.mxu0 %v2788
        %3070 = vmatpush.bf16.msra.mxu0 %v2784
        %3071 = vmatpush.bf16.msra.mxu0 %v2780
        %3072 = vmatpush.bf16.msra.mxu0 %v2776
        %3073 = vmatmul.bf16.gmra.mxu0 %v529
        %v3074 = vpop.f32.mrf.mxu0
        %v3075 = vadd.f32 %v3062, %v3074
        %v3076 = vpop.f32.mrf.mxu0
        %3077 = vdwg.mxu0
        %3078 = vmatpush.bf16.msra.mxu0 %v2645
        %3079 = vmatpush.bf16.msra.mxu0 %v2641
        %3080 = vmatpush.bf16.msra.mxu0 %v2637
        %3081 = vmatpush.bf16.msra.mxu0 %v2633
        %3082 = vmatpush.bf16.msra.mxu0 %v2629
        %3083 = vmatpush.bf16.msra.mxu0 %v2625
        %3084 = vmatpush.bf16.msra.mxu0 %v2621
        %3085 = vmatpush.bf16.msra.mxu0 %v2617
        %3086 = vmatmul.bf16.gmra.mxu0 %v524
        %v3087 = vpop.f32.mrf.mxu0
        %v3088 = vadd.f32 %v2037, %v3087
        %v3089 = vpop.f32.mrf.mxu0
        %3090 = vdwg.mxu0
        %3091 = vmatpush.bf16.msra.mxu0 %v2677
        %3092 = vmatpush.bf16.msra.mxu0 %v2673
        %3093 = vmatpush.bf16.msra.mxu0 %v2669
        %3094 = vmatpush.bf16.msra.mxu0 %v2665
        %3095 = vmatpush.bf16.msra.mxu0 %v2661
        %3096 = vmatpush.bf16.msra.mxu0 %v2657
        %3097 = vmatpush.bf16.msra.mxu0 %v2653
        %3098 = vmatpush.bf16.msra.mxu0 %v2649
        %3099 = vmatmul.bf16.gmra.mxu0 %v525
        %v3100 = vpop.f32.mrf.mxu0
        %v3101 = vadd.f32 %v3088, %v3100
        %v3102 = vpop.f32.mrf.mxu0
        %3103 = vdwg.mxu0
        %3104 = vmatpush.bf16.msra.mxu0 %v2709
        %3105 = vmatpush.bf16.msra.mxu0 %v2705
        %3106 = vmatpush.bf16.msra.mxu0 %v2701
        %3107 = vmatpush.bf16.msra.mxu0 %v2697
        %3108 = vmatpush.bf16.msra.mxu0 %v2693
        %3109 = vmatpush.bf16.msra.mxu0 %v2689
        %3110 = vmatpush.bf16.msra.mxu0 %v2685
        %3111 = vmatpush.bf16.msra.mxu0 %v2681
        %3112 = vmatmul.bf16.gmra.mxu0 %v526
        %v3113 = vpop.f32.mrf.mxu0
        %v3114 = vadd.f32 %v3101, %v3113
        %v3115 = vpop.f32.mrf.mxu0
        %3116 = vdwg.mxu0
        %3117 = vmatpush.bf16.msra.mxu0 %v2741
        %3118 = vmatpush.bf16.msra.mxu0 %v2737
        %3119 = vmatpush.bf16.msra.mxu0 %v2733
        %3120 = vmatpush.bf16.msra.mxu0 %v2729
        %3121 = vmatpush.bf16.msra.mxu0 %v2725
        %3122 = vmatpush.bf16.msra.mxu0 %v2721
        %3123 = vmatpush.bf16.msra.mxu0 %v2717
        %3124 = vmatpush.bf16.msra.mxu0 %v2713
        %3125 = vmatmul.bf16.gmra.mxu0 %v527
        %v3126 = vpop.f32.mrf.mxu0
        %v3127 = vadd.f32 %v3114, %v3126
        %v3128 = vpop.f32.mrf.mxu0
        %3129 = vdwg.mxu0
        %3130 = vmatpush.bf16.msra.mxu0 %v2773
        %3131 = vmatpush.bf16.msra.mxu0 %v2769
        %3132 = vmatpush.bf16.msra.mxu0 %v2765
        %3133 = vmatpush.bf16.msra.mxu0 %v2761
        %3134 = vmatpush.bf16.msra.mxu0 %v2757
        %3135 = vmatpush.bf16.msra.mxu0 %v2753
        %3136 = vmatpush.bf16.msra.mxu0 %v2749
        %3137 = vmatpush.bf16.msra.mxu0 %v2745
        %3138 = vmatmul.bf16.gmra.mxu0 %v528
        %v3139 = vpop.f32.mrf.mxu0
        %v3140 = vadd.f32 %v3127, %v3139
        %v3141 = vpop.f32.mrf.mxu0
        %3142 = vdwg.mxu0
        %3143 = vmatpush.bf16.msra.mxu0 %v2805
        %3144 = vmatpush.bf16.msra.mxu0 %v2801
        %3145 = vmatpush.bf16.msra.mxu0 %v2797
        %3146 = vmatpush.bf16.msra.mxu0 %v2793
        %3147 = vmatpush.bf16.msra.mxu0 %v2789
        %3148 = vmatpush.bf16.msra.mxu0 %v2785
        %3149 = vmatpush.bf16.msra.mxu0 %v2781
        %3150 = vmatpush.bf16.msra.mxu0 %v2777
        %3151 = vmatmul.bf16.gmra.mxu0 %v529
        %v3152 = vpop.f32.mrf.mxu0
        %v3153 = vadd.f32 %v3140, %v3152
        %v3154 = vpop.f32.mrf.mxu0
        %3155 = vdwg.mxu0
        %3156 = vmatpush.bf16.msra.mxu0 %v2646
        %3157 = vmatpush.bf16.msra.mxu0 %v2642
        %3158 = vmatpush.bf16.msra.mxu0 %v2638
        %3159 = vmatpush.bf16.msra.mxu0 %v2634
        %3160 = vmatpush.bf16.msra.mxu0 %v2630
        %3161 = vmatpush.bf16.msra.mxu0 %v2626
        %3162 = vmatpush.bf16.msra.mxu0 %v2622
        %3163 = vmatpush.bf16.msra.mxu0 %v2618
        %3164 = vmatmul.bf16.gmra.mxu0 %v524
        %v3165 = vpop.f32.mrf.mxu0
        %v3166 = vadd.f32 %v2038, %v3165
        %v3167 = vpop.f32.mrf.mxu0
        %3168 = vdwg.mxu0
        %3169 = vmatpush.bf16.msra.mxu0 %v2678
        %3170 = vmatpush.bf16.msra.mxu0 %v2674
        %3171 = vmatpush.bf16.msra.mxu0 %v2670
        %3172 = vmatpush.bf16.msra.mxu0 %v2666
        %3173 = vmatpush.bf16.msra.mxu0 %v2662
        %3174 = vmatpush.bf16.msra.mxu0 %v2658
        %3175 = vmatpush.bf16.msra.mxu0 %v2654
        %3176 = vmatpush.bf16.msra.mxu0 %v2650
        %3177 = vmatmul.bf16.gmra.mxu0 %v525
        %v3178 = vpop.f32.mrf.mxu0
        %v3179 = vadd.f32 %v3166, %v3178
        %v3180 = vpop.f32.mrf.mxu0
        %3181 = vdwg.mxu0
        %3182 = vmatpush.bf16.msra.mxu0 %v2710
        %3183 = vmatpush.bf16.msra.mxu0 %v2706
        %3184 = vmatpush.bf16.msra.mxu0 %v2702
        %3185 = vmatpush.bf16.msra.mxu0 %v2698
        %3186 = vmatpush.bf16.msra.mxu0 %v2694
        %3187 = vmatpush.bf16.msra.mxu0 %v2690
        %3188 = vmatpush.bf16.msra.mxu0 %v2686
        %3189 = vmatpush.bf16.msra.mxu0 %v2682
        %3190 = vmatmul.bf16.gmra.mxu0 %v526
        %v3191 = vpop.f32.mrf.mxu0
        %v3192 = vadd.f32 %v3179, %v3191
        %v3193 = vpop.f32.mrf.mxu0
        %3194 = vdwg.mxu0
        %3195 = vmatpush.bf16.msra.mxu0 %v2742
        %3196 = vmatpush.bf16.msra.mxu0 %v2738
        %3197 = vmatpush.bf16.msra.mxu0 %v2734
        %3198 = vmatpush.bf16.msra.mxu0 %v2730
        %3199 = vmatpush.bf16.msra.mxu0 %v2726
        %3200 = vmatpush.bf16.msra.mxu0 %v2722
        %3201 = vmatpush.bf16.msra.mxu0 %v2718
        %3202 = vmatpush.bf16.msra.mxu0 %v2714
        %3203 = vmatmul.bf16.gmra.mxu0 %v527
        %v3204 = vpop.f32.mrf.mxu0
        %v3205 = vadd.f32 %v3192, %v3204
        %v3206 = vpop.f32.mrf.mxu0
        %3207 = vdwg.mxu0
        %3208 = vmatpush.bf16.msra.mxu0 %v2774
        %3209 = vmatpush.bf16.msra.mxu0 %v2770
        %3210 = vmatpush.bf16.msra.mxu0 %v2766
        %3211 = vmatpush.bf16.msra.mxu0 %v2762
        %3212 = vmatpush.bf16.msra.mxu0 %v2758
        %3213 = vmatpush.bf16.msra.mxu0 %v2754
        %3214 = vmatpush.bf16.msra.mxu0 %v2750
        %3215 = vmatpush.bf16.msra.mxu0 %v2746
        %3216 = vmatmul.bf16.gmra.mxu0 %v528
        %v3217 = vpop.f32.mrf.mxu0
        %v3218 = vadd.f32 %v3205, %v3217
        %v3219 = vpop.f32.mrf.mxu0
        %3220 = vdwg.mxu0
        %3221 = vmatpush.bf16.msra.mxu0 %v2806
        %3222 = vmatpush.bf16.msra.mxu0 %v2802
        %3223 = vmatpush.bf16.msra.mxu0 %v2798
        %3224 = vmatpush.bf16.msra.mxu0 %v2794
        %3225 = vmatpush.bf16.msra.mxu0 %v2790
        %3226 = vmatpush.bf16.msra.mxu0 %v2786
        %3227 = vmatpush.bf16.msra.mxu0 %v2782
        %3228 = vmatpush.bf16.msra.mxu0 %v2778
        %3229 = vmatmul.bf16.gmra.mxu0 %v529
        %v3230 = vpop.f32.mrf.mxu0
        %v3231 = vadd.f32 %v3218, %v3230
        %v3232 = vpop.f32.mrf.mxu0
        %3233 = vdwg.mxu0
        %3234 = vmatpush.bf16.msra.mxu0 %v2647
        %3235 = vmatpush.bf16.msra.mxu0 %v2643
        %3236 = vmatpush.bf16.msra.mxu0 %v2639
        %3237 = vmatpush.bf16.msra.mxu0 %v2635
        %3238 = vmatpush.bf16.msra.mxu0 %v2631
        %3239 = vmatpush.bf16.msra.mxu0 %v2627
        %3240 = vmatpush.bf16.msra.mxu0 %v2623
        %3241 = vmatpush.bf16.msra.mxu0 %v2619
        %3242 = vmatmul.bf16.gmra.mxu0 %v524
        %v3243 = vpop.f32.mrf.mxu0
        %v3244 = vadd.f32 %v2039, %v3243
        %v3245 = vpop.f32.mrf.mxu0
        %3246 = vdwg.mxu0
        %3247 = vmatpush.bf16.msra.mxu0 %v2679
        %3248 = vmatpush.bf16.msra.mxu0 %v2675
        %3249 = vmatpush.bf16.msra.mxu0 %v2671
        %3250 = vmatpush.bf16.msra.mxu0 %v2667
        %3251 = vmatpush.bf16.msra.mxu0 %v2663
        %3252 = vmatpush.bf16.msra.mxu0 %v2659
        %3253 = vmatpush.bf16.msra.mxu0 %v2655
        %3254 = vmatpush.bf16.msra.mxu0 %v2651
        %3255 = vmatmul.bf16.gmra.mxu0 %v525
        %v3256 = vpop.f32.mrf.mxu0
        %v3257 = vadd.f32 %v3244, %v3256
        %v3258 = vpop.f32.mrf.mxu0
        %3259 = vdwg.mxu0
        %3260 = vmatpush.bf16.msra.mxu0 %v2711
        %3261 = vmatpush.bf16.msra.mxu0 %v2707
        %3262 = vmatpush.bf16.msra.mxu0 %v2703
        %3263 = vmatpush.bf16.msra.mxu0 %v2699
        %3264 = vmatpush.bf16.msra.mxu0 %v2695
        %3265 = vmatpush.bf16.msra.mxu0 %v2691
        %3266 = vmatpush.bf16.msra.mxu0 %v2687
        %3267 = vmatpush.bf16.msra.mxu0 %v2683
        %3268 = vmatmul.bf16.gmra.mxu0 %v526
        %v3269 = vpop.f32.mrf.mxu0
        %v3270 = vadd.f32 %v3257, %v3269
        %v3271 = vpop.f32.mrf.mxu0
        %3272 = vdwg.mxu0
        %3273 = vmatpush.bf16.msra.mxu0 %v2743
        %3274 = vmatpush.bf16.msra.mxu0 %v2739
        %3275 = vmatpush.bf16.msra.mxu0 %v2735
        %3276 = vmatpush.bf16.msra.mxu0 %v2731
        %3277 = vmatpush.bf16.msra.mxu0 %v2727
        %3278 = vmatpush.bf16.msra.mxu0 %v2723
        %3279 = vmatpush.bf16.msra.mxu0 %v2719
        %3280 = vmatpush.bf16.msra.mxu0 %v2715
        %3281 = vmatmul.bf16.gmra.mxu0 %v527
        %v3282 = vpop.f32.mrf.mxu0
        %v3283 = vadd.f32 %v3270, %v3282
        %v3284 = vpop.f32.mrf.mxu0
        %3285 = vdwg.mxu0
        %3286 = vmatpush.bf16.msra.mxu0 %v2775
        %3287 = vmatpush.bf16.msra.mxu0 %v2771
        %3288 = vmatpush.bf16.msra.mxu0 %v2767
        %3289 = vmatpush.bf16.msra.mxu0 %v2763
        %3290 = vmatpush.bf16.msra.mxu0 %v2759
        %3291 = vmatpush.bf16.msra.mxu0 %v2755
        %3292 = vmatpush.bf16.msra.mxu0 %v2751
        %3293 = vmatpush.bf16.msra.mxu0 %v2747
        %3294 = vmatmul.bf16.gmra.mxu0 %v528
        %v3295 = vpop.f32.mrf.mxu0
        %v3296 = vadd.f32 %v3283, %v3295
        %v3297 = vpop.f32.mrf.mxu0
        %3298 = vdwg.mxu0
        %3299 = vmatpush.bf16.msra.mxu0 %v2807
        %3300 = vmatpush.bf16.msra.mxu0 %v2803
        %3301 = vmatpush.bf16.msra.mxu0 %v2799
        %3302 = vmatpush.bf16.msra.mxu0 %v2795
        %3303 = vmatpush.bf16.msra.mxu0 %v2791
        %3304 = vmatpush.bf16.msra.mxu0 %v2787
        %3305 = vmatpush.bf16.msra.mxu0 %v2783
        %3306 = vmatpush.bf16.msra.mxu0 %v2779
        %3307 = vmatmul.bf16.gmra.mxu0 %v529
        %v3308 = vpop.f32.mrf.mxu0
        %v3309 = vadd.f32 %v3296, %v3308
        %v3310 = vpop.f32.mrf.mxu0
        %3311 = vdwg.mxu0
        %v3312 = vmax.f32 %v3075, 0.0
        %v3313 = vmax.f32 %v3153, 0.0
        %v3314 = vmax.f32 %v3231, 0.0
        %v3315 = vmax.f32 %v3309, 0.0
        %v3316 = vperm.slane %v305, 1
        %v3317 = vperm.slane %v305, 5
        %v3318 = vperm.slane %v306, 1
        %v3319 = vperm.slane %v306, 5
        %v3324 = vperm.slane %v3316, 1
        %v3325 = vperm.slane %v3317, 1
        %v3326 = vperm.slane %v3318, 1
        %v3327 = vperm.slane %v3319, 1
        %v3328 = vmul.f32 %v3312, %v3324
        %v3329 = vmul.f32 %v3313, %v3325
        %v3330 = vmul.f32 %v3314, %v3326
        %v3331 = vmul.f32 %v3315, %v3327
        %v3332 = vadd.f32 %v3328, %v3329
        %v3333 = vadd.f32 %v3332, %v3330
        %v3334 = vadd.f32 %v3333, %v3331
        %3335 = vadd.xlane.f32.xlu0 %v3334
        %v3336 = vpop.xlane.xlu0 %3335
        %s3337 = scalar_lea.vmem %s256, 3072 [#allocation5]
        %v3338 = vld [vmem:[%s3337] sm:$0xff]
        %v3339 = vld [vmem:[%s3337 + $0x8] sm:$0xff]
        %v3340 = vld [vmem:[%s3337 + $0x10] sm:$0xff]
        %v3341 = vld [vmem:[%s3337 + $0x18] sm:$0xff]
        %v3342 = vld [vmem:[%s3337 + $0x20] sm:$0xff]
        %v3343 = vld [vmem:[%s3337 + $0x28] sm:$0xff]
        %v3344 = vld [vmem:[%s3337 + $0x30] sm:$0xff]
        %v3345 = vld [vmem:[%s3337 + $0x38] sm:$0xff]
        %v3346 = vld [vmem:[%s3337 + $0x40] sm:$0xff]
        %v3347 = vld [vmem:[%s3337 + $0x48] sm:$0xff]
        %v3348 = vld [vmem:[%s3337 + $0x50] sm:$0xff]
        %v3349 = vld [vmem:[%s3337 + $0x58] sm:$0xff]
        %v3350 = vld [vmem:[%s3337 + $0x60] sm:$0xff]
        %v3351 = vld [vmem:[%s3337 + $0x68] sm:$0xff]
        %v3352 = vld [vmem:[%s3337 + $0x70] sm:$0xff]
        %v3353 = vld [vmem:[%s3337 + $0x78] sm:$0xff]
        %v3354 = vld [vmem:[%s3337 + $0x80] sm:$0xff]
        %v3355 = vld [vmem:[%s3337 + $0x88] sm:$0xff]
        %v3356 = vld [vmem:[%s3337 + $0x90] sm:$0xff]
        %v3357 = vld [vmem:[%s3337 + $0x98] sm:$0xff]
        %v3358 = vld [vmem:[%s3337 + $0xa0] sm:$0xff]
        %v3359 = vld [vmem:[%s3337 + $0xa8] sm:$0xff]
        %v3360 = vld [vmem:[%s3337 + $0xb0] sm:$0xff]
        %v3361 = vld [vmem:[%s3337 + $0xb8] sm:$0xff]
        %v3362 = vld [vmem:[%s3337 + $0xc0] sm:$0xff]
        %v3363 = vld [vmem:[%s3337 + $0xc8] sm:$0xff]
        %v3364 = vld [vmem:[%s3337 + $0xd0] sm:$0xff]
        %v3365 = vld [vmem:[%s3337 + $0xd8] sm:$0xff]
        %v3366 = vld [vmem:[%s3337 + $0xe0] sm:$0xff]
        %v3367 = vld [vmem:[%s3337 + $0xe8] sm:$0xff]
        %v3368 = vld [vmem:[%s3337 + $0xf0] sm:$0xff]
        %v3369 = vld [vmem:[%s3337 + $0xf8] sm:$0xff]
        %v3370 = vld [vmem:[%s3337 + $0x100] sm:$0xff]
        %v3371 = vld [vmem:[%s3337 + $0x108] sm:$0xff]
        %v3372 = vld [vmem:[%s3337 + $0x110] sm:$0xff]
        %v3373 = vld [vmem:[%s3337 + $0x118] sm:$0xff]
        %v3374 = vld [vmem:[%s3337 + $0x120] sm:$0xff]
        %v3375 = vld [vmem:[%s3337 + $0x128] sm:$0xff]
        %v3376 = vld [vmem:[%s3337 + $0x130] sm:$0xff]
        %v3377 = vld [vmem:[%s3337 + $0x138] sm:$0xff]
        %v3378 = vld [vmem:[%s3337 + $0x140] sm:$0xff]
        %v3379 = vld [vmem:[%s3337 + $0x148] sm:$0xff]
        %v3380 = vld [vmem:[%s3337 + $0x150] sm:$0xff]
        %v3381 = vld [vmem:[%s3337 + $0x158] sm:$0xff]
        %v3382 = vld [vmem:[%s3337 + $0x160] sm:$0xff]
        %v3383 = vld [vmem:[%s3337 + $0x168] sm:$0xff]
        %v3384 = vld [vmem:[%s3337 + $0x170] sm:$0xff]
        %v3385 = vld [vmem:[%s3337 + $0x178] sm:$0xff]
        %v3386 = vld [vmem:[%s3337 + $0x180] sm:$0xff]
        %v3387 = vld [vmem:[%s3337 + $0x188] sm:$0xff]
        %v3388 = vld [vmem:[%s3337 + $0x190] sm:$0xff]
        %v3389 = vld [vmem:[%s3337 + $0x198] sm:$0xff]
        %v3390 = vld [vmem:[%s3337 + $0x1a0] sm:$0xff]
        %v3391 = vld [vmem:[%s3337 + $0x1a8] sm:$0xff]
        %v3392 = vld [vmem:[%s3337 + $0x1b0] sm:$0xff]
        %v3393 = vld [vmem:[%s3337 + $0x1b8] sm:$0xff]
        %v3394 = vld [vmem:[%s3337 + $0x1c0] sm:$0xff]
        %v3395 = vld [vmem:[%s3337 + $0x1c8] sm:$0xff]
        %v3396 = vld [vmem:[%s3337 + $0x1d0] sm:$0xff]
        %v3397 = vld [vmem:[%s3337 + $0x1d8] sm:$0xff]
        %v3398 = vld [vmem:[%s3337 + $0x1e0] sm:$0xff]
        %v3399 = vld [vmem:[%s3337 + $0x1e8] sm:$0xff]
        %v3400 = vld [vmem:[%s3337 + $0x1f0] sm:$0xff]
        %v3401 = vld [vmem:[%s3337 + $0x1f8] sm:$0xff]
        %v3402 = vld [vmem:[%s3337 + $0x200] sm:$0xff]
        %v3403 = vld [vmem:[%s3337 + $0x208] sm:$0xff]
        %v3404 = vld [vmem:[%s3337 + $0x210] sm:$0xff]
        %v3405 = vld [vmem:[%s3337 + $0x218] sm:$0xff]
        %v3406 = vld [vmem:[%s3337 + $0x220] sm:$0xff]
        %v3407 = vld [vmem:[%s3337 + $0x228] sm:$0xff]
        %v3408 = vld [vmem:[%s3337 + $0x230] sm:$0xff]
        %v3409 = vld [vmem:[%s3337 + $0x238] sm:$0xff]
        %v3410 = vld [vmem:[%s3337 + $0x240] sm:$0xff]
        %v3411 = vld [vmem:[%s3337 + $0x248] sm:$0xff]
        %v3412 = vld [vmem:[%s3337 + $0x250] sm:$0xff]
        %v3413 = vld [vmem:[%s3337 + $0x258] sm:$0xff]
        %v3414 = vld [vmem:[%s3337 + $0x260] sm:$0xff]
        %v3415 = vld [vmem:[%s3337 + $0x268] sm:$0xff]
        %v3416 = vld [vmem:[%s3337 + $0x270] sm:$0xff]
        %v3417 = vld [vmem:[%s3337 + $0x278] sm:$0xff]
        %v3418 = vld [vmem:[%s3337 + $0x280] sm:$0xff]
        %v3419 = vld [vmem:[%s3337 + $0x288] sm:$0xff]
        %v3420 = vld [vmem:[%s3337 + $0x290] sm:$0xff]
        %v3421 = vld [vmem:[%s3337 + $0x298] sm:$0xff]
        %v3422 = vld [vmem:[%s3337 + $0x2a0] sm:$0xff]
        %v3423 = vld [vmem:[%s3337 + $0x2a8] sm:$0xff]
        %v3424 = vld [vmem:[%s3337 + $0x2b0] sm:$0xff]
        %v3425 = vld [vmem:[%s3337 + $0x2b8] sm:$0xff]
        %v3426 = vld [vmem:[%s3337 + $0x2c0] sm:$0xff]
        %v3427 = vld [vmem:[%s3337 + $0x2c8] sm:$0xff]
        %v3428 = vld [vmem:[%s3337 + $0x2d0] sm:$0xff]
        %v3429 = vld [vmem:[%s3337 + $0x2d8] sm:$0xff]
        %v3430 = vld [vmem:[%s3337 + $0x2e0] sm:$0xff]
        %v3431 = vld [vmem:[%s3337 + $0x2e8] sm:$0xff]
        %v3432 = vld [vmem:[%s3337 + $0x2f0] sm:$0xff]
        %v3433 = vld [vmem:[%s3337 + $0x2f8] sm:$0xff]
        %v3434 = vld [vmem:[%s3337 + $0x300] sm:$0xff]
        %v3435 = vld [vmem:[%s3337 + $0x308] sm:$0xff]
        %v3436 = vld [vmem:[%s3337 + $0x310] sm:$0xff]
        %v3437 = vld [vmem:[%s3337 + $0x318] sm:$0xff]
        %v3438 = vld [vmem:[%s3337 + $0x320] sm:$0xff]
        %v3439 = vld [vmem:[%s3337 + $0x328] sm:$0xff]
        %v3440 = vld [vmem:[%s3337 + $0x330] sm:$0xff]
        %v3441 = vld [vmem:[%s3337 + $0x338] sm:$0xff]
        %v3442 = vld [vmem:[%s3337 + $0x340] sm:$0xff]
        %v3443 = vld [vmem:[%s3337 + $0x348] sm:$0xff]
        %v3444 = vld [vmem:[%s3337 + $0x350] sm:$0xff]
        %v3445 = vld [vmem:[%s3337 + $0x358] sm:$0xff]
        %v3446 = vld [vmem:[%s3337 + $0x360] sm:$0xff]
        %v3447 = vld [vmem:[%s3337 + $0x368] sm:$0xff]
        %v3448 = vld [vmem:[%s3337 + $0x370] sm:$0xff]
        %v3449 = vld [vmem:[%s3337 + $0x378] sm:$0xff]
        %v3450 = vld [vmem:[%s3337 + $0x380] sm:$0xff]
        %v3451 = vld [vmem:[%s3337 + $0x388] sm:$0xff]
        %v3452 = vld [vmem:[%s3337 + $0x390] sm:$0xff]
        %v3453 = vld [vmem:[%s3337 + $0x398] sm:$0xff]
        %v3454 = vld [vmem:[%s3337 + $0x3a0] sm:$0xff]
        %v3455 = vld [vmem:[%s3337 + $0x3a8] sm:$0xff]
        %v3456 = vld [vmem:[%s3337 + $0x3b0] sm:$0xff]
        %v3457 = vld [vmem:[%s3337 + $0x3b8] sm:$0xff]
        %v3458 = vld [vmem:[%s3337 + $0x3c0] sm:$0xff]
        %v3459 = vld [vmem:[%s3337 + $0x3c8] sm:$0xff]
        %v3460 = vld [vmem:[%s3337 + $0x3d0] sm:$0xff]
        %v3461 = vld [vmem:[%s3337 + $0x3d8] sm:$0xff]
        %v3462 = vld [vmem:[%s3337 + $0x3e0] sm:$0xff]
        %v3463 = vld [vmem:[%s3337 + $0x3e8] sm:$0xff]
        %v3464 = vld [vmem:[%s3337 + $0x3f0] sm:$0xff]
        %v3465 = vld [vmem:[%s3337 + $0x3f8] sm:$0xff]
        %v3466 = vld [vmem:[%s3337 + $0x400] sm:$0xff]
        %v3467 = vld [vmem:[%s3337 + $0x408] sm:$0xff]
        %v3468 = vld [vmem:[%s3337 + $0x410] sm:$0xff]
        %v3469 = vld [vmem:[%s3337 + $0x418] sm:$0xff]
        %v3470 = vld [vmem:[%s3337 + $0x420] sm:$0xff]
        %v3471 = vld [vmem:[%s3337 + $0x428] sm:$0xff]
        %v3472 = vld [vmem:[%s3337 + $0x430] sm:$0xff]
        %v3473 = vld [vmem:[%s3337 + $0x438] sm:$0xff]
        %v3474 = vld [vmem:[%s3337 + $0x440] sm:$0xff]
        %v3475 = vld [vmem:[%s3337 + $0x448] sm:$0xff]
        %v3476 = vld [vmem:[%s3337 + $0x450] sm:$0xff]
        %v3477 = vld [vmem:[%s3337 + $0x458] sm:$0xff]
        %v3478 = vld [vmem:[%s3337 + $0x460] sm:$0xff]
        %v3479 = vld [vmem:[%s3337 + $0x468] sm:$0xff]
        %v3480 = vld [vmem:[%s3337 + $0x470] sm:$0xff]
        %v3481 = vld [vmem:[%s3337 + $0x478] sm:$0xff]
        %v3482 = vld [vmem:[%s3337 + $0x480] sm:$0xff]
        %v3483 = vld [vmem:[%s3337 + $0x488] sm:$0xff]
        %v3484 = vld [vmem:[%s3337 + $0x490] sm:$0xff]
        %v3485 = vld [vmem:[%s3337 + $0x498] sm:$0xff]
        %v3486 = vld [vmem:[%s3337 + $0x4a0] sm:$0xff]
        %v3487 = vld [vmem:[%s3337 + $0x4a8] sm:$0xff]
        %v3488 = vld [vmem:[%s3337 + $0x4b0] sm:$0xff]
        %v3489 = vld [vmem:[%s3337 + $0x4b8] sm:$0xff]
        %v3490 = vld [vmem:[%s3337 + $0x4c0] sm:$0xff]
        %v3491 = vld [vmem:[%s3337 + $0x4c8] sm:$0xff]
        %v3492 = vld [vmem:[%s3337 + $0x4d0] sm:$0xff]
        %v3493 = vld [vmem:[%s3337 + $0x4d8] sm:$0xff]
        %v3494 = vld [vmem:[%s3337 + $0x4e0] sm:$0xff]
        %v3495 = vld [vmem:[%s3337 + $0x4e8] sm:$0xff]
        %v3496 = vld [vmem:[%s3337 + $0x4f0] sm:$0xff]
        %v3497 = vld [vmem:[%s3337 + $0x4f8] sm:$0xff]
        %v3498 = vld [vmem:[%s3337 + $0x500] sm:$0xff]
        %v3499 = vld [vmem:[%s3337 + $0x508] sm:$0xff]
        %v3500 = vld [vmem:[%s3337 + $0x510] sm:$0xff]
        %v3501 = vld [vmem:[%s3337 + $0x518] sm:$0xff]
        %v3502 = vld [vmem:[%s3337 + $0x520] sm:$0xff]
        %v3503 = vld [vmem:[%s3337 + $0x528] sm:$0xff]
        %v3504 = vld [vmem:[%s3337 + $0x530] sm:$0xff]
        %v3505 = vld [vmem:[%s3337 + $0x538] sm:$0xff]
        %v3506 = vld [vmem:[%s3337 + $0x540] sm:$0xff]
        %v3507 = vld [vmem:[%s3337 + $0x548] sm:$0xff]
        %v3508 = vld [vmem:[%s3337 + $0x550] sm:$0xff]
        %v3509 = vld [vmem:[%s3337 + $0x558] sm:$0xff]
        %v3510 = vld [vmem:[%s3337 + $0x560] sm:$0xff]
        %v3511 = vld [vmem:[%s3337 + $0x568] sm:$0xff]
        %v3512 = vld [vmem:[%s3337 + $0x570] sm:$0xff]
        %v3513 = vld [vmem:[%s3337 + $0x578] sm:$0xff]
        %v3514 = vld [vmem:[%s3337 + $0x580] sm:$0xff]
        %v3515 = vld [vmem:[%s3337 + $0x588] sm:$0xff]
        %v3516 = vld [vmem:[%s3337 + $0x590] sm:$0xff]
        %v3517 = vld [vmem:[%s3337 + $0x598] sm:$0xff]
        %v3518 = vld [vmem:[%s3337 + $0x5a0] sm:$0xff]
        %v3519 = vld [vmem:[%s3337 + $0x5a8] sm:$0xff]
        %v3520 = vld [vmem:[%s3337 + $0x5b0] sm:$0xff]
        %v3521 = vld [vmem:[%s3337 + $0x5b8] sm:$0xff]
        %v3522 = vld [vmem:[%s3337 + $0x5c0] sm:$0xff]
        %v3523 = vld [vmem:[%s3337 + $0x5c8] sm:$0xff]
        %v3524 = vld [vmem:[%s3337 + $0x5d0] sm:$0xff]
        %v3525 = vld [vmem:[%s3337 + $0x5d8] sm:$0xff]
        %v3526 = vld [vmem:[%s3337 + $0x5e0] sm:$0xff]
        %v3527 = vld [vmem:[%s3337 + $0x5e8] sm:$0xff]
        %v3528 = vld [vmem:[%s3337 + $0x5f0] sm:$0xff]
        %v3529 = vld [vmem:[%s3337 + $0x5f8] sm:$0xff]
        %v3530 = vperm.slane %v301, 2
        %v3531 = vperm.slane %v301, 6
        %v3532 = vperm.slane %v302, 2
        %v3533 = vperm.slane %v302, 6
        %v3538 = vperm.slane %v3530, 2
        %v3539 = vperm.slane %v3531, 2
        %v3540 = vperm.slane %v3532, 2
        %v3541 = vperm.slane %v3533, 2
        %v3734 = vunpack.c.l.b16 %v3338
        %v3735 = vunpack.c.h.b16 %v3338
        %v3736 = vunpack.c.l.b16 %v3339
        %v3737 = vunpack.c.h.b16 %v3339
        %v3738 = vunpack.c.l.b16 %v3340
        %v3739 = vunpack.c.h.b16 %v3340
        %v3740 = vunpack.c.l.b16 %v3341
        %v3741 = vunpack.c.h.b16 %v3341
        %v3742 = vunpack.c.l.b16 %v3342
        %v3743 = vunpack.c.h.b16 %v3342
        %v3744 = vunpack.c.l.b16 %v3343
        %v3745 = vunpack.c.h.b16 %v3343
        %v3746 = vunpack.c.l.b16 %v3344
        %v3747 = vunpack.c.h.b16 %v3344
        %v3748 = vunpack.c.l.b16 %v3345
        %v3749 = vunpack.c.h.b16 %v3345
        %v3750 = vunpack.c.l.b16 %v3346
        %v3751 = vunpack.c.h.b16 %v3346
        %v3752 = vunpack.c.l.b16 %v3347
        %v3753 = vunpack.c.h.b16 %v3347
        %v3754 = vunpack.c.l.b16 %v3348
        %v3755 = vunpack.c.h.b16 %v3348
        %v3756 = vunpack.c.l.b16 %v3349
        %v3757 = vunpack.c.h.b16 %v3349
        %v3758 = vunpack.c.l.b16 %v3350
        %v3759 = vunpack.c.h.b16 %v3350
        %v3760 = vunpack.c.l.b16 %v3351
        %v3761 = vunpack.c.h.b16 %v3351
        %v3762 = vunpack.c.l.b16 %v3352
        %v3763 = vunpack.c.h.b16 %v3352
        %v3764 = vunpack.c.l.b16 %v3353
        %v3765 = vunpack.c.h.b16 %v3353
        %v3766 = vunpack.c.l.b16 %v3354
        %v3767 = vunpack.c.h.b16 %v3354
        %v3768 = vunpack.c.l.b16 %v3355
        %v3769 = vunpack.c.h.b16 %v3355
        %v3770 = vunpack.c.l.b16 %v3356
        %v3771 = vunpack.c.h.b16 %v3356
        %v3772 = vunpack.c.l.b16 %v3357
        %v3773 = vunpack.c.h.b16 %v3357
        %v3774 = vunpack.c.l.b16 %v3358
        %v3775 = vunpack.c.h.b16 %v3358
        %v3776 = vunpack.c.l.b16 %v3359
        %v3777 = vunpack.c.h.b16 %v3359
        %v3778 = vunpack.c.l.b16 %v3360
        %v3779 = vunpack.c.h.b16 %v3360
        %v3780 = vunpack.c.l.b16 %v3361
        %v3781 = vunpack.c.h.b16 %v3361
        %v3782 = vunpack.c.l.b16 %v3362
        %v3783 = vunpack.c.h.b16 %v3362
        %v3784 = vunpack.c.l.b16 %v3363
        %v3785 = vunpack.c.h.b16 %v3363
        %v3786 = vunpack.c.l.b16 %v3364
        %v3787 = vunpack.c.h.b16 %v3364
        %v3788 = vunpack.c.l.b16 %v3365
        %v3789 = vunpack.c.h.b16 %v3365
        %v3790 = vunpack.c.l.b16 %v3366
        %v3791 = vunpack.c.h.b16 %v3366
        %v3792 = vunpack.c.l.b16 %v3367
        %v3793 = vunpack.c.h.b16 %v3367
        %v3794 = vunpack.c.l.b16 %v3368
        %v3795 = vunpack.c.h.b16 %v3368
        %v3796 = vunpack.c.l.b16 %v3369
        %v3797 = vunpack.c.h.b16 %v3369
        %v3798 = vunpack.c.l.b16 %v3370
        %v3799 = vunpack.c.h.b16 %v3370
        %v3800 = vunpack.c.l.b16 %v3371
        %v3801 = vunpack.c.h.b16 %v3371
        %v3802 = vunpack.c.l.b16 %v3372
        %v3803 = vunpack.c.h.b16 %v3372
        %v3804 = vunpack.c.l.b16 %v3373
        %v3805 = vunpack.c.h.b16 %v3373
        %v3806 = vunpack.c.l.b16 %v3374
        %v3807 = vunpack.c.h.b16 %v3374
        %v3808 = vunpack.c.l.b16 %v3375
        %v3809 = vunpack.c.h.b16 %v3375
        %v3810 = vunpack.c.l.b16 %v3376
        %v3811 = vunpack.c.h.b16 %v3376
        %v3812 = vunpack.c.l.b16 %v3377
        %v3813 = vunpack.c.h.b16 %v3377
        %v3814 = vunpack.c.l.b16 %v3378
        %v3815 = vunpack.c.h.b16 %v3378
        %v3816 = vunpack.c.l.b16 %v3379
        %v3817 = vunpack.c.h.b16 %v3379
        %v3818 = vunpack.c.l.b16 %v3380
        %v3819 = vunpack.c.h.b16 %v3380
        %v3820 = vunpack.c.l.b16 %v3381
        %v3821 = vunpack.c.h.b16 %v3381
        %v3822 = vunpack.c.l.b16 %v3382
        %v3823 = vunpack.c.h.b16 %v3382
        %v3824 = vunpack.c.l.b16 %v3383
        %v3825 = vunpack.c.h.b16 %v3383
        %v3826 = vunpack.c.l.b16 %v3384
        %v3827 = vunpack.c.h.b16 %v3384
        %v3828 = vunpack.c.l.b16 %v3385
        %v3829 = vunpack.c.h.b16 %v3385
        %v3830 = vunpack.c.l.b16 %v3386
        %v3831 = vunpack.c.h.b16 %v3386
        %v3832 = vunpack.c.l.b16 %v3387
        %v3833 = vunpack.c.h.b16 %v3387
        %v3834 = vunpack.c.l.b16 %v3388
        %v3835 = vunpack.c.h.b16 %v3388
        %v3836 = vunpack.c.l.b16 %v3389
        %v3837 = vunpack.c.h.b16 %v3389
        %v3838 = vunpack.c.l.b16 %v3390
        %v3839 = vunpack.c.h.b16 %v3390
        %v3840 = vunpack.c.l.b16 %v3391
        %v3841 = vunpack.c.h.b16 %v3391
        %v3842 = vunpack.c.l.b16 %v3392
        %v3843 = vunpack.c.h.b16 %v3392
        %v3844 = vunpack.c.l.b16 %v3393
        %v3845 = vunpack.c.h.b16 %v3393
        %v3846 = vunpack.c.l.b16 %v3394
        %v3847 = vunpack.c.h.b16 %v3394
        %v3848 = vunpack.c.l.b16 %v3395
        %v3849 = vunpack.c.h.b16 %v3395
        %v3850 = vunpack.c.l.b16 %v3396
        %v3851 = vunpack.c.h.b16 %v3396
        %v3852 = vunpack.c.l.b16 %v3397
        %v3853 = vunpack.c.h.b16 %v3397
        %v3854 = vunpack.c.l.b16 %v3398
        %v3855 = vunpack.c.h.b16 %v3398
        %v3856 = vunpack.c.l.b16 %v3399
        %v3857 = vunpack.c.h.b16 %v3399
        %v3858 = vunpack.c.l.b16 %v3400
        %v3859 = vunpack.c.h.b16 %v3400
        %v3860 = vunpack.c.l.b16 %v3401
        %v3861 = vunpack.c.h.b16 %v3401
        %v3862 = vunpack.c.l.b16 %v3402
        %v3863 = vunpack.c.h.b16 %v3402
        %v3864 = vunpack.c.l.b16 %v3403
        %v3865 = vunpack.c.h.b16 %v3403
        %v3866 = vunpack.c.l.b16 %v3404
        %v3867 = vunpack.c.h.b16 %v3404
        %v3868 = vunpack.c.l.b16 %v3405
        %v3869 = vunpack.c.h.b16 %v3405
        %v3870 = vunpack.c.l.b16 %v3406
        %v3871 = vunpack.c.h.b16 %v3406
        %v3872 = vunpack.c.l.b16 %v3407
        %v3873 = vunpack.c.h.b16 %v3407
        %v3874 = vunpack.c.l.b16 %v3408
        %v3875 = vunpack.c.h.b16 %v3408
        %v3876 = vunpack.c.l.b16 %v3409
        %v3877 = vunpack.c.h.b16 %v3409
        %v3878 = vunpack.c.l.b16 %v3410
        %v3879 = vunpack.c.h.b16 %v3410
        %v3880 = vunpack.c.l.b16 %v3411
        %v3881 = vunpack.c.h.b16 %v3411
        %v3882 = vunpack.c.l.b16 %v3412
        %v3883 = vunpack.c.h.b16 %v3412
        %v3884 = vunpack.c.l.b16 %v3413
        %v3885 = vunpack.c.h.b16 %v3413
        %v3886 = vunpack.c.l.b16 %v3414
        %v3887 = vunpack.c.h.b16 %v3414
        %v3888 = vunpack.c.l.b16 %v3415
        %v3889 = vunpack.c.h.b16 %v3415
        %v3890 = vunpack.c.l.b16 %v3416
        %v3891 = vunpack.c.h.b16 %v3416
        %v3892 = vunpack.c.l.b16 %v3417
        %v3893 = vunpack.c.h.b16 %v3417
        %v3894 = vunpack.c.l.b16 %v3418
        %v3895 = vunpack.c.h.b16 %v3418
        %v3896 = vunpack.c.l.b16 %v3419
        %v3897 = vunpack.c.h.b16 %v3419
        %v3898 = vunpack.c.l.b16 %v3420
        %v3899 = vunpack.c.h.b16 %v3420
        %v3900 = vunpack.c.l.b16 %v3421
        %v3901 = vunpack.c.h.b16 %v3421
        %v3902 = vunpack.c.l.b16 %v3422
        %v3903 = vunpack.c.h.b16 %v3422
        %v3904 = vunpack.c.l.b16 %v3423
        %v3905 = vunpack.c.h.b16 %v3423
        %v3906 = vunpack.c.l.b16 %v3424
        %v3907 = vunpack.c.h.b16 %v3424
        %v3908 = vunpack.c.l.b16 %v3425
        %v3909 = vunpack.c.h.b16 %v3425
        %v3910 = vunpack.c.l.b16 %v3426
        %v3911 = vunpack.c.h.b16 %v3426
        %v3912 = vunpack.c.l.b16 %v3427
        %v3913 = vunpack.c.h.b16 %v3427
        %v3914 = vunpack.c.l.b16 %v3428
        %v3915 = vunpack.c.h.b16 %v3428
        %v3916 = vunpack.c.l.b16 %v3429
        %v3917 = vunpack.c.h.b16 %v3429
        %v3918 = vunpack.c.l.b16 %v3430
        %v3919 = vunpack.c.h.b16 %v3430
        %v3920 = vunpack.c.l.b16 %v3431
        %v3921 = vunpack.c.h.b16 %v3431
        %v3922 = vunpack.c.l.b16 %v3432
        %v3923 = vunpack.c.h.b16 %v3432
        %v3924 = vunpack.c.l.b16 %v3433
        %v3925 = vunpack.c.h.b16 %v3433
        %v3926 = vunpack.c.l.b16 %v3434
        %v3927 = vunpack.c.h.b16 %v3434
        %v3928 = vunpack.c.l.b16 %v3435
        %v3929 = vunpack.c.h.b16 %v3435
        %v3930 = vunpack.c.l.b16 %v3436
        %v3931 = vunpack.c.h.b16 %v3436
        %v3932 = vunpack.c.l.b16 %v3437
        %v3933 = vunpack.c.h.b16 %v3437
        %v3934 = vunpack.c.l.b16 %v3438
        %v3935 = vunpack.c.h.b16 %v3438
        %v3936 = vunpack.c.l.b16 %v3439
        %v3937 = vunpack.c.h.b16 %v3439
        %v3938 = vunpack.c.l.b16 %v3440
        %v3939 = vunpack.c.h.b16 %v3440
        %v3940 = vunpack.c.l.b16 %v3441
        %v3941 = vunpack.c.h.b16 %v3441
        %v3942 = vunpack.c.l.b16 %v3442
        %v3943 = vunpack.c.h.b16 %v3442
        %v3944 = vunpack.c.l.b16 %v3443
        %v3945 = vunpack.c.h.b16 %v3443
        %v3946 = vunpack.c.l.b16 %v3444
        %v3947 = vunpack.c.h.b16 %v3444
        %v3948 = vunpack.c.l.b16 %v3445
        %v3949 = vunpack.c.h.b16 %v3445
        %v3950 = vunpack.c.l.b16 %v3446
        %v3951 = vunpack.c.h.b16 %v3446
        %v3952 = vunpack.c.l.b16 %v3447
        %v3953 = vunpack.c.h.b16 %v3447
        %v3954 = vunpack.c.l.b16 %v3448
        %v3955 = vunpack.c.h.b16 %v3448
        %v3956 = vunpack.c.l.b16 %v3449
        %v3957 = vunpack.c.h.b16 %v3449
        %v3958 = vunpack.c.l.b16 %v3450
        %v3959 = vunpack.c.h.b16 %v3450
        %v3960 = vunpack.c.l.b16 %v3451
        %v3961 = vunpack.c.h.b16 %v3451
        %v3962 = vunpack.c.l.b16 %v3452
        %v3963 = vunpack.c.h.b16 %v3452
        %v3964 = vunpack.c.l.b16 %v3453
        %v3965 = vunpack.c.h.b16 %v3453
        %v3966 = vunpack.c.l.b16 %v3454
        %v3967 = vunpack.c.h.b16 %v3454
        %v3968 = vunpack.c.l.b16 %v3455
        %v3969 = vunpack.c.h.b16 %v3455
        %v3970 = vunpack.c.l.b16 %v3456
        %v3971 = vunpack.c.h.b16 %v3456
        %v3972 = vunpack.c.l.b16 %v3457
        %v3973 = vunpack.c.h.b16 %v3457
        %v3974 = vunpack.c.l.b16 %v3458
        %v3975 = vunpack.c.h.b16 %v3458
        %v3976 = vunpack.c.l.b16 %v3459
        %v3977 = vunpack.c.h.b16 %v3459
        %v3978 = vunpack.c.l.b16 %v3460
        %v3979 = vunpack.c.h.b16 %v3460
        %v3980 = vunpack.c.l.b16 %v3461
        %v3981 = vunpack.c.h.b16 %v3461
        %v3982 = vunpack.c.l.b16 %v3462
        %v3983 = vunpack.c.h.b16 %v3462
        %v3984 = vunpack.c.l.b16 %v3463
        %v3985 = vunpack.c.h.b16 %v3463
        %v3986 = vunpack.c.l.b16 %v3464
        %v3987 = vunpack.c.h.b16 %v3464
        %v3988 = vunpack.c.l.b16 %v3465
        %v3989 = vunpack.c.h.b16 %v3465
        %v3990 = vunpack.c.l.b16 %v3466
        %v3991 = vunpack.c.h.b16 %v3466
        %v3992 = vunpack.c.l.b16 %v3467
        %v3993 = vunpack.c.h.b16 %v3467
        %v3994 = vunpack.c.l.b16 %v3468
        %v3995 = vunpack.c.h.b16 %v3468
        %v3996 = vunpack.c.l.b16 %v3469
        %v3997 = vunpack.c.h.b16 %v3469
        %v3998 = vunpack.c.l.b16 %v3470
        %v3999 = vunpack.c.h.b16 %v3470
        %v4000 = vunpack.c.l.b16 %v3471
        %v4001 = vunpack.c.h.b16 %v3471
        %v4002 = vunpack.c.l.b16 %v3472
        %v4003 = vunpack.c.h.b16 %v3472
        %v4004 = vunpack.c.l.b16 %v3473
        %v4005 = vunpack.c.h.b16 %v3473
        %v4006 = vunpack.c.l.b16 %v3474
        %v4007 = vunpack.c.h.b16 %v3474
        %v4008 = vunpack.c.l.b16 %v3475
        %v4009 = vunpack.c.h.b16 %v3475
        %v4010 = vunpack.c.l.b16 %v3476
        %v4011 = vunpack.c.h.b16 %v3476
        %v4012 = vunpack.c.l.b16 %v3477
        %v4013 = vunpack.c.h.b16 %v3477
        %v4014 = vunpack.c.l.b16 %v3478
        %v4015 = vunpack.c.h.b16 %v3478
        %v4016 = vunpack.c.l.b16 %v3479
        %v4017 = vunpack.c.h.b16 %v3479
        %v4018 = vunpack.c.l.b16 %v3480
        %v4019 = vunpack.c.h.b16 %v3480
        %v4020 = vunpack.c.l.b16 %v3481
        %v4021 = vunpack.c.h.b16 %v3481
        %v4022 = vunpack.c.l.b16 %v3482
        %v4023 = vunpack.c.h.b16 %v3482
        %v4024 = vunpack.c.l.b16 %v3483
        %v4025 = vunpack.c.h.b16 %v3483
        %v4026 = vunpack.c.l.b16 %v3484
        %v4027 = vunpack.c.h.b16 %v3484
        %v4028 = vunpack.c.l.b16 %v3485
        %v4029 = vunpack.c.h.b16 %v3485
        %v4030 = vunpack.c.l.b16 %v3486
        %v4031 = vunpack.c.h.b16 %v3486
        %v4032 = vunpack.c.l.b16 %v3487
        %v4033 = vunpack.c.h.b16 %v3487
        %v4034 = vunpack.c.l.b16 %v3488
        %v4035 = vunpack.c.h.b16 %v3488
        %v4036 = vunpack.c.l.b16 %v3489
        %v4037 = vunpack.c.h.b16 %v3489
        %v4038 = vunpack.c.l.b16 %v3490
        %v4039 = vunpack.c.h.b16 %v3490
        %v4040 = vunpack.c.l.b16 %v3491
        %v4041 = vunpack.c.h.b16 %v3491
        %v4042 = vunpack.c.l.b16 %v3492
        %v4043 = vunpack.c.h.b16 %v3492
        %v4044 = vunpack.c.l.b16 %v3493
        %v4045 = vunpack.c.h.b16 %v3493
        %v4046 = vunpack.c.l.b16 %v3494
        %v4047 = vunpack.c.h.b16 %v3494
        %v4048 = vunpack.c.l.b16 %v3495
        %v4049 = vunpack.c.h.b16 %v3495
        %v4050 = vunpack.c.l.b16 %v3496
        %v4051 = vunpack.c.h.b16 %v3496
        %v4052 = vunpack.c.l.b16 %v3497
        %v4053 = vunpack.c.h.b16 %v3497
        %v4054 = vunpack.c.l.b16 %v3498
        %v4055 = vunpack.c.h.b16 %v3498
        %v4056 = vunpack.c.l.b16 %v3499
        %v4057 = vunpack.c.h.b16 %v3499
        %v4058 = vunpack.c.l.b16 %v3500
        %v4059 = vunpack.c.h.b16 %v3500
        %v4060 = vunpack.c.l.b16 %v3501
        %v4061 = vunpack.c.h.b16 %v3501
        %v4062 = vunpack.c.l.b16 %v3502
        %v4063 = vunpack.c.h.b16 %v3502
        %v4064 = vunpack.c.l.b16 %v3503
        %v4065 = vunpack.c.h.b16 %v3503
        %v4066 = vunpack.c.l.b16 %v3504
        %v4067 = vunpack.c.h.b16 %v3504
        %v4068 = vunpack.c.l.b16 %v3505
        %v4069 = vunpack.c.h.b16 %v3505
        %v4070 = vunpack.c.l.b16 %v3506
        %v4071 = vunpack.c.h.b16 %v3506
        %v4072 = vunpack.c.l.b16 %v3507
        %v4073 = vunpack.c.h.b16 %v3507
        %v4074 = vunpack.c.l.b16 %v3508
        %v4075 = vunpack.c.h.b16 %v3508
        %v4076 = vunpack.c.l.b16 %v3509
        %v4077 = vunpack.c.h.b16 %v3509
        %v4078 = vunpack.c.l.b16 %v3510
        %v4079 = vunpack.c.h.b16 %v3510
        %v4080 = vunpack.c.l.b16 %v3511
        %v4081 = vunpack.c.h.b16 %v3511
        %v4082 = vunpack.c.l.b16 %v3512
        %v4083 = vunpack.c.h.b16 %v3512
        %v4084 = vunpack.c.l.b16 %v3513
        %v4085 = vunpack.c.h.b16 %v3513
        %v4086 = vunpack.c.l.b16 %v3514
        %v4087 = vunpack.c.h.b16 %v3514
        %v4088 = vunpack.c.l.b16 %v3515
        %v4089 = vunpack.c.h.b16 %v3515
        %v4090 = vunpack.c.l.b16 %v3516
        %v4091 = vunpack.c.h.b16 %v3516
        %v4092 = vunpack.c.l.b16 %v3517
        %v4093 = vunpack.c.h.b16 %v3517
        %v4094 = vunpack.c.l.b16 %v3518
        %v4095 = vunpack.c.h.b16 %v3518
        %v4096 = vunpack.c.l.b16 %v3519
        %v4097 = vunpack.c.h.b16 %v3519
        %v4098 = vunpack.c.l.b16 %v3520
        %v4099 = vunpack.c.h.b16 %v3520
        %v4100 = vunpack.c.l.b16 %v3521
        %v4101 = vunpack.c.h.b16 %v3521
        %v4102 = vunpack.c.l.b16 %v3522
        %v4103 = vunpack.c.h.b16 %v3522
        %v4104 = vunpack.c.l.b16 %v3523
        %v4105 = vunpack.c.h.b16 %v3523
        %v4106 = vunpack.c.l.b16 %v3524
        %v4107 = vunpack.c.h.b16 %v3524
        %v4108 = vunpack.c.l.b16 %v3525
        %v4109 = vunpack.c.h.b16 %v3525
        %v4110 = vunpack.c.l.b16 %v3526
        %v4111 = vunpack.c.h.b16 %v3526
        %v4112 = vunpack.c.l.b16 %v3527
        %v4113 = vunpack.c.h.b16 %v3527
        %v4114 = vunpack.c.l.b16 %v3528
        %v4115 = vunpack.c.h.b16 %v3528
        %v4116 = vunpack.c.l.b16 %v3529
        %v4117 = vunpack.c.h.b16 %v3529
        %v4118 = vpack.c.b16 %v3738, %v3734
        %v4119 = vpack.c.b16 %v3739, %v3735
        %v4120 = vpack.c.b16 %v3740, %v3736
        %v4121 = vpack.c.b16 %v3741, %v3737
        %v4122 = vpack.c.b16 %v3746, %v3742
        %v4123 = vpack.c.b16 %v3747, %v3743
        %v4124 = vpack.c.b16 %v3748, %v3744
        %v4125 = vpack.c.b16 %v3749, %v3745
        %v4126 = vpack.c.b16 %v3754, %v3750
        %v4127 = vpack.c.b16 %v3755, %v3751
        %v4128 = vpack.c.b16 %v3756, %v3752
        %v4129 = vpack.c.b16 %v3757, %v3753
        %v4130 = vpack.c.b16 %v3762, %v3758
        %v4131 = vpack.c.b16 %v3763, %v3759
        %v4132 = vpack.c.b16 %v3764, %v3760
        %v4133 = vpack.c.b16 %v3765, %v3761
        %v4134 = vpack.c.b16 %v3770, %v3766
        %v4135 = vpack.c.b16 %v3771, %v3767
        %v4136 = vpack.c.b16 %v3772, %v3768
        %v4137 = vpack.c.b16 %v3773, %v3769
        %v4138 = vpack.c.b16 %v3778, %v3774
        %v4139 = vpack.c.b16 %v3779, %v3775
        %v4140 = vpack.c.b16 %v3780, %v3776
        %v4141 = vpack.c.b16 %v3781, %v3777
        %v4142 = vpack.c.b16 %v3786, %v3782
        %v4143 = vpack.c.b16 %v3787, %v3783
        %v4144 = vpack.c.b16 %v3788, %v3784
        %v4145 = vpack.c.b16 %v3789, %v3785
        %v4146 = vpack.c.b16 %v3794, %v3790
        %v4147 = vpack.c.b16 %v3795, %v3791
        %v4148 = vpack.c.b16 %v3796, %v3792
        %v4149 = vpack.c.b16 %v3797, %v3793
        %v4150 = vpack.c.b16 %v3802, %v3798
        %v4151 = vpack.c.b16 %v3803, %v3799
        %v4152 = vpack.c.b16 %v3804, %v3800
        %v4153 = vpack.c.b16 %v3805, %v3801
        %v4154 = vpack.c.b16 %v3810, %v3806
        %v4155 = vpack.c.b16 %v3811, %v3807
        %v4156 = vpack.c.b16 %v3812, %v3808
        %v4157 = vpack.c.b16 %v3813, %v3809
        %v4158 = vpack.c.b16 %v3818, %v3814
        %v4159 = vpack.c.b16 %v3819, %v3815
        %v4160 = vpack.c.b16 %v3820, %v3816
        %v4161 = vpack.c.b16 %v3821, %v3817
        %v4162 = vpack.c.b16 %v3826, %v3822
        %v4163 = vpack.c.b16 %v3827, %v3823
        %v4164 = vpack.c.b16 %v3828, %v3824
        %v4165 = vpack.c.b16 %v3829, %v3825
        %v4166 = vpack.c.b16 %v3834, %v3830
        %v4167 = vpack.c.b16 %v3835, %v3831
        %v4168 = vpack.c.b16 %v3836, %v3832
        %v4169 = vpack.c.b16 %v3837, %v3833
        %v4170 = vpack.c.b16 %v3842, %v3838
        %v4171 = vpack.c.b16 %v3843, %v3839
        %v4172 = vpack.c.b16 %v3844, %v3840
        %v4173 = vpack.c.b16 %v3845, %v3841
        %v4174 = vpack.c.b16 %v3850, %v3846
        %v4175 = vpack.c.b16 %v3851, %v3847
        %v4176 = vpack.c.b16 %v3852, %v3848
        %v4177 = vpack.c.b16 %v3853, %v3849
        %v4178 = vpack.c.b16 %v3858, %v3854
        %v4179 = vpack.c.b16 %v3859, %v3855
        %v4180 = vpack.c.b16 %v3860, %v3856
        %v4181 = vpack.c.b16 %v3861, %v3857
        %v4182 = vpack.c.b16 %v3866, %v3862
        %v4183 = vpack.c.b16 %v3867, %v3863
        %v4184 = vpack.c.b16 %v3868, %v3864
        %v4185 = vpack.c.b16 %v3869, %v3865
        %v4186 = vpack.c.b16 %v3874, %v3870
        %v4187 = vpack.c.b16 %v3875, %v3871
        %v4188 = vpack.c.b16 %v3876, %v3872
        %v4189 = vpack.c.b16 %v3877, %v3873
        %v4190 = vpack.c.b16 %v3882, %v3878
        %v4191 = vpack.c.b16 %v3883, %v3879
        %v4192 = vpack.c.b16 %v3884, %v3880
        %v4193 = vpack.c.b16 %v3885, %v3881
        %v4194 = vpack.c.b16 %v3890, %v3886
        %v4195 = vpack.c.b16 %v3891, %v3887
        %v4196 = vpack.c.b16 %v3892, %v3888
        %v4197 = vpack.c.b16 %v3893, %v3889
        %v4198 = vpack.c.b16 %v3898, %v3894
        %v4199 = vpack.c.b16 %v3899, %v3895
        %v4200 = vpack.c.b16 %v3900, %v3896
        %v4201 = vpack.c.b16 %v3901, %v3897
        %v4202 = vpack.c.b16 %v3906, %v3902
        %v4203 = vpack.c.b16 %v3907, %v3903
        %v4204 = vpack.c.b16 %v3908, %v3904
        %v4205 = vpack.c.b16 %v3909, %v3905
        %v4206 = vpack.c.b16 %v3914, %v3910
        %v4207 = vpack.c.b16 %v3915, %v3911
        %v4208 = vpack.c.b16 %v3916, %v3912
        %v4209 = vpack.c.b16 %v3917, %v3913
        %v4210 = vpack.c.b16 %v3922, %v3918
        %v4211 = vpack.c.b16 %v3923, %v3919
        %v4212 = vpack.c.b16 %v3924, %v3920
        %v4213 = vpack.c.b16 %v3925, %v3921
        %v4214 = vpack.c.b16 %v3930, %v3926
        %v4215 = vpack.c.b16 %v3931, %v3927
        %v4216 = vpack.c.b16 %v3932, %v3928
        %v4217 = vpack.c.b16 %v3933, %v3929
        %v4218 = vpack.c.b16 %v3938, %v3934
        %v4219 = vpack.c.b16 %v3939, %v3935
        %v4220 = vpack.c.b16 %v3940, %v3936
        %v4221 = vpack.c.b16 %v3941, %v3937
        %v4222 = vpack.c.b16 %v3946, %v3942
        %v4223 = vpack.c.b16 %v3947, %v3943
        %v4224 = vpack.c.b16 %v3948, %v3944
        %v4225 = vpack.c.b16 %v3949, %v3945
        %v4226 = vpack.c.b16 %v3954, %v3950
        %v4227 = vpack.c.b16 %v3955, %v3951
        %v4228 = vpack.c.b16 %v3956, %v3952
        %v4229 = vpack.c.b16 %v3957, %v3953
        %v4230 = vpack.c.b16 %v3962, %v3958
        %v4231 = vpack.c.b16 %v3963, %v3959
        %v4232 = vpack.c.b16 %v3964, %v3960
        %v4233 = vpack.c.b16 %v3965, %v3961
        %v4234 = vpack.c.b16 %v3970, %v3966
        %v4235 = vpack.c.b16 %v3971, %v3967
        %v4236 = vpack.c.b16 %v3972, %v3968
        %v4237 = vpack.c.b16 %v3973, %v3969
        %v4238 = vpack.c.b16 %v3978, %v3974
        %v4239 = vpack.c.b16 %v3979, %v3975
        %v4240 = vpack.c.b16 %v3980, %v3976
        %v4241 = vpack.c.b16 %v3981, %v3977
        %v4242 = vpack.c.b16 %v3986, %v3982
        %v4243 = vpack.c.b16 %v3987, %v3983
        %v4244 = vpack.c.b16 %v3988, %v3984
        %v4245 = vpack.c.b16 %v3989, %v3985
        %v4246 = vpack.c.b16 %v3994, %v3990
        %v4247 = vpack.c.b16 %v3995, %v3991
        %v4248 = vpack.c.b16 %v3996, %v3992
        %v4249 = vpack.c.b16 %v3997, %v3993
        %v4250 = vpack.c.b16 %v4002, %v3998
        %v4251 = vpack.c.b16 %v4003, %v3999
        %v4252 = vpack.c.b16 %v4004, %v4000
        %v4253 = vpack.c.b16 %v4005, %v4001
        %v4254 = vpack.c.b16 %v4010, %v4006
        %v4255 = vpack.c.b16 %v4011, %v4007
        %v4256 = vpack.c.b16 %v4012, %v4008
        %v4257 = vpack.c.b16 %v4013, %v4009
        %v4258 = vpack.c.b16 %v4018, %v4014
        %v4259 = vpack.c.b16 %v4019, %v4015
        %v4260 = vpack.c.b16 %v4020, %v4016
        %v4261 = vpack.c.b16 %v4021, %v4017
        %v4262 = vpack.c.b16 %v4026, %v4022
        %v4263 = vpack.c.b16 %v4027, %v4023
        %v4264 = vpack.c.b16 %v4028, %v4024
        %v4265 = vpack.c.b16 %v4029, %v4025
        %v4266 = vpack.c.b16 %v4034, %v4030
        %v4267 = vpack.c.b16 %v4035, %v4031
        %v4268 = vpack.c.b16 %v4036, %v4032
        %v4269 = vpack.c.b16 %v4037, %v4033
        %v4270 = vpack.c.b16 %v4042, %v4038
        %v4271 = vpack.c.b16 %v4043, %v4039
        %v4272 = vpack.c.b16 %v4044, %v4040
        %v4273 = vpack.c.b16 %v4045, %v4041
        %v4274 = vpack.c.b16 %v4050, %v4046
        %v4275 = vpack.c.b16 %v4051, %v4047
        %v4276 = vpack.c.b16 %v4052, %v4048
        %v4277 = vpack.c.b16 %v4053, %v4049
        %v4278 = vpack.c.b16 %v4058, %v4054
        %v4279 = vpack.c.b16 %v4059, %v4055
        %v4280 = vpack.c.b16 %v4060, %v4056
        %v4281 = vpack.c.b16 %v4061, %v4057
        %v4282 = vpack.c.b16 %v4066, %v4062
        %v4283 = vpack.c.b16 %v4067, %v4063
        %v4284 = vpack.c.b16 %v4068, %v4064
        %v4285 = vpack.c.b16 %v4069, %v4065
        %v4286 = vpack.c.b16 %v4074, %v4070
        %v4287 = vpack.c.b16 %v4075, %v4071
        %v4288 = vpack.c.b16 %v4076, %v4072
        %v4289 = vpack.c.b16 %v4077, %v4073
        %v4290 = vpack.c.b16 %v4082, %v4078
        %v4291 = vpack.c.b16 %v4083, %v4079
        %v4292 = vpack.c.b16 %v4084, %v4080
        %v4293 = vpack.c.b16 %v4085, %v4081
        %v4294 = vpack.c.b16 %v4090, %v4086
        %v4295 = vpack.c.b16 %v4091, %v4087
        %v4296 = vpack.c.b16 %v4092, %v4088
        %v4297 = vpack.c.b16 %v4093, %v4089
        %v4298 = vpack.c.b16 %v4098, %v4094
        %v4299 = vpack.c.b16 %v4099, %v4095
        %v4300 = vpack.c.b16 %v4100, %v4096
        %v4301 = vpack.c.b16 %v4101, %v4097
        %v4302 = vpack.c.b16 %v4106, %v4102
        %v4303 = vpack.c.b16 %v4107, %v4103
        %v4304 = vpack.c.b16 %v4108, %v4104
        %v4305 = vpack.c.b16 %v4109, %v4105
        %v4306 = vpack.c.b16 %v4114, %v4110
        %v4307 = vpack.c.b16 %v4115, %v4111
        %v4308 = vpack.c.b16 %v4116, %v4112
        %v4309 = vpack.c.b16 %v4117, %v4113
        %4502 = vmatpush.bf16.msra.mxu0 %v4146
        %4503 = vmatpush.bf16.msra.mxu0 %v4142
        %4504 = vmatpush.bf16.msra.mxu0 %v4138
        %4505 = vmatpush.bf16.msra.mxu0 %v4134
        %4506 = vmatpush.bf16.msra.mxu0 %v4130
        %4507 = vmatpush.bf16.msra.mxu0 %v4126
        %4508 = vmatpush.bf16.msra.mxu0 %v4122
        %4509 = vmatpush.bf16.msra.mxu0 %v4118
        %4510 = vmatmul.bf16.gmra.mxu0 %v524
        %v4511 = vpop.f32.mrf.mxu0
        %v4512 = vadd.f32 %v3538, %v4511
        %v4513 = vpop.f32.mrf.mxu0
        %4514 = vdwg.mxu0
        %4515 = vmatpush.bf16.msra.mxu0 %v4178
        %4516 = vmatpush.bf16.msra.mxu0 %v4174
        %4517 = vmatpush.bf16.msra.mxu0 %v4170
        %4518 = vmatpush.bf16.msra.mxu0 %v4166
        %4519 = vmatpush.bf16.msra.mxu0 %v4162
        %4520 = vmatpush.bf16.msra.mxu0 %v4158
        %4521 = vmatpush.bf16.msra.mxu0 %v4154
        %4522 = vmatpush.bf16.msra.mxu0 %v4150
        %4523 = vmatmul.bf16.gmra.mxu0 %v525
        %v4524 = vpop.f32.mrf.mxu0
        %v4525 = vadd.f32 %v4512, %v4524
        %v4526 = vpop.f32.mrf.mxu0
        %4527 = vdwg.mxu0
        %4528 = vmatpush.bf16.msra.mxu0 %v4210
        %4529 = vmatpush.bf16.msra.mxu0 %v4206
        %4530 = vmatpush.bf16.msra.mxu0 %v4202
        %4531 = vmatpush.bf16.msra.mxu0 %v4198
        %4532 = vmatpush.bf16.msra.mxu0 %v4194
        %4533 = vmatpush.bf16.msra.mxu0 %v4190
        %4534 = vmatpush.bf16.msra.mxu0 %v4186
        %4535 = vmatpush.bf16.msra.mxu0 %v4182
        %4536 = vmatmul.bf16.gmra.mxu0 %v526
        %v4537 = vpop.f32.mrf.mxu0
        %v4538 = vadd.f32 %v4525, %v4537
        %v4539 = vpop.f32.mrf.mxu0
        %4540 = vdwg.mxu0
        %4541 = vmatpush.bf16.msra.mxu0 %v4242
        %4542 = vmatpush.bf16.msra.mxu0 %v4238
        %4543 = vmatpush.bf16.msra.mxu0 %v4234
        %4544 = vmatpush.bf16.msra.mxu0 %v4230
        %4545 = vmatpush.bf16.msra.mxu0 %v4226
        %4546 = vmatpush.bf16.msra.mxu0 %v4222
        %4547 = vmatpush.bf16.msra.mxu0 %v4218
        %4548 = vmatpush.bf16.msra.mxu0 %v4214
        %4549 = vmatmul.bf16.gmra.mxu0 %v527
        %v4550 = vpop.f32.mrf.mxu0
        %v4551 = vadd.f32 %v4538, %v4550
        %v4552 = vpop.f32.mrf.mxu0
        %4553 = vdwg.mxu0
        %4554 = vmatpush.bf16.msra.mxu0 %v4274
        %4555 = vmatpush.bf16.msra.mxu0 %v4270
        %4556 = vmatpush.bf16.msra.mxu0 %v4266
        %4557 = vmatpush.bf16.msra.mxu0 %v4262
        %4558 = vmatpush.bf16.msra.mxu0 %v4258
        %4559 = vmatpush.bf16.msra.mxu0 %v4254
        %4560 = vmatpush.bf16.msra.mxu0 %v4250
        %4561 = vmatpush.bf16.msra.mxu0 %v4246
        %4562 = vmatmul.bf16.gmra.mxu0 %v528
        %v4563 = vpop.f32.mrf.mxu0
        %v4564 = vadd.f32 %v4551, %v4563
        %v4565 = vpop.f32.mrf.mxu0
        %4566 = vdwg.mxu0
        %4567 = vmatpush.bf16.msra.mxu0 %v4306
        %4568 = vmatpush.bf16.msra.mxu0 %v4302
        %4569 = vmatpush.bf16.msra.mxu0 %v4298
        %4570 = vmatpush.bf16.msra.mxu0 %v4294
        %4571 = vmatpush.bf16.msra.mxu0 %v4290
        %4572 = vmatpush.bf16.msra.mxu0 %v4286
        %4573 = vmatpush.bf16.msra.mxu0 %v4282
        %4574 = vmatpush.bf16.msra.mxu0 %v4278
        %4575 = vmatmul.bf16.gmra.mxu0 %v529
        %v4576 = vpop.f32.mrf.mxu0
        %v4577 = vadd.f32 %v4564, %v4576
        %v4578 = vpop.f32.mrf.mxu0
        %4579 = vdwg.mxu0
        %4580 = vmatpush.bf16.msra.mxu0 %v4147
        %4581 = vmatpush.bf16.msra.mxu0 %v4143
        %4582 = vmatpush.bf16.msra.mxu0 %v4139
        %4583 = vmatpush.bf16.msra.mxu0 %v4135
        %4584 = vmatpush.bf16.msra.mxu0 %v4131
        %4585 = vmatpush.bf16.msra.mxu0 %v4127
        %4586 = vmatpush.bf16.msra.mxu0 %v4123
        %4587 = vmatpush.bf16.msra.mxu0 %v4119
        %4588 = vmatmul.bf16.gmra.mxu0 %v524
        %v4589 = vpop.f32.mrf.mxu0
        %v4590 = vadd.f32 %v3539, %v4589
        %v4591 = vpop.f32.mrf.mxu0
        %4592 = vdwg.mxu0
        %4593 = vmatpush.bf16.msra.mxu0 %v4179
        %4594 = vmatpush.bf16.msra.mxu0 %v4175
        %4595 = vmatpush.bf16.msra.mxu0 %v4171
        %4596 = vmatpush.bf16.msra.mxu0 %v4167
        %4597 = vmatpush.bf16.msra.mxu0 %v4163
        %4598 = vmatpush.bf16.msra.mxu0 %v4159
        %4599 = vmatpush.bf16.msra.mxu0 %v4155
        %4600 = vmatpush.bf16.msra.mxu0 %v4151
        %4601 = vmatmul.bf16.gmra.mxu0 %v525
        %v4602 = vpop.f32.mrf.mxu0
        %v4603 = vadd.f32 %v4590, %v4602
        %v4604 = vpop.f32.mrf.mxu0
        %4605 = vdwg.mxu0
        %4606 = vmatpush.bf16.msra.mxu0 %v4211
        %4607 = vmatpush.bf16.msra.mxu0 %v4207
        %4608 = vmatpush.bf16.msra.mxu0 %v4203
        %4609 = vmatpush.bf16.msra.mxu0 %v4199
        %4610 = vmatpush.bf16.msra.mxu0 %v4195
        %4611 = vmatpush.bf16.msra.mxu0 %v4191
        %4612 = vmatpush.bf16.msra.mxu0 %v4187
        %4613 = vmatpush.bf16.msra.mxu0 %v4183
        %4614 = vmatmul.bf16.gmra.mxu0 %v526
        %v4615 = vpop.f32.mrf.mxu0
        %v4616 = vadd.f32 %v4603, %v4615
        %v4617 = vpop.f32.mrf.mxu0
        %4618 = vdwg.mxu0
        %4619 = vmatpush.bf16.msra.mxu0 %v4243
        %4620 = vmatpush.bf16.msra.mxu0 %v4239
        %4621 = vmatpush.bf16.msra.mxu0 %v4235
        %4622 = vmatpush.bf16.msra.mxu0 %v4231
        %4623 = vmatpush.bf16.msra.mxu0 %v4227
        %4624 = vmatpush.bf16.msra.mxu0 %v4223
        %4625 = vmatpush.bf16.msra.mxu0 %v4219
        %4626 = vmatpush.bf16.msra.mxu0 %v4215
        %4627 = vmatmul.bf16.gmra.mxu0 %v527
        %v4628 = vpop.f32.mrf.mxu0
        %v4629 = vadd.f32 %v4616, %v4628
        %v4630 = vpop.f32.mrf.mxu0
        %4631 = vdwg.mxu0
        %4632 = vmatpush.bf16.msra.mxu0 %v4275
        %4633 = vmatpush.bf16.msra.mxu0 %v4271
        %4634 = vmatpush.bf16.msra.mxu0 %v4267
        %4635 = vmatpush.bf16.msra.mxu0 %v4263
        %4636 = vmatpush.bf16.msra.mxu0 %v4259
        %4637 = vmatpush.bf16.msra.mxu0 %v4255
        %4638 = vmatpush.bf16.msra.mxu0 %v4251
        %4639 = vmatpush.bf16.msra.mxu0 %v4247
        %4640 = vmatmul.bf16.gmra.mxu0 %v528
        %v4641 = vpop.f32.mrf.mxu0
        %v4642 = vadd.f32 %v4629, %v4641
        %v4643 = vpop.f32.mrf.mxu0
        %4644 = vdwg.mxu0
        %4645 = vmatpush.bf16.msra.mxu0 %v4307
        %4646 = vmatpush.bf16.msra.mxu0 %v4303
        %4647 = vmatpush.bf16.msra.mxu0 %v4299
        %4648 = vmatpush.bf16.msra.mxu0 %v4295
        %4649 = vmatpush.bf16.msra.mxu0 %v4291
        %4650 = vmatpush.bf16.msra.mxu0 %v4287
        %4651 = vmatpush.bf16.msra.mxu0 %v4283
        %4652 = vmatpush.bf16.msra.mxu0 %v4279
        %4653 = vmatmul.bf16.gmra.mxu0 %v529
        %v4654 = vpop.f32.mrf.mxu0
        %v4655 = vadd.f32 %v4642, %v4654
        %v4656 = vpop.f32.mrf.mxu0
        %4657 = vdwg.mxu0
        %4658 = vmatpush.bf16.msra.mxu0 %v4148
        %4659 = vmatpush.bf16.msra.mxu0 %v4144
        %4660 = vmatpush.bf16.msra.mxu0 %v4140
        %4661 = vmatpush.bf16.msra.mxu0 %v4136
        %4662 = vmatpush.bf16.msra.mxu0 %v4132
        %4663 = vmatpush.bf16.msra.mxu0 %v4128
        %4664 = vmatpush.bf16.msra.mxu0 %v4124
        %4665 = vmatpush.bf16.msra.mxu0 %v4120
        %4666 = vmatmul.bf16.gmra.mxu0 %v524
        %v4667 = vpop.f32.mrf.mxu0
        %v4668 = vadd.f32 %v3540, %v4667
        %v4669 = vpop.f32.mrf.mxu0
        %4670 = vdwg.mxu0
        %4671 = vmatpush.bf16.msra.mxu0 %v4180
        %4672 = vmatpush.bf16.msra.mxu0 %v4176
        %4673 = vmatpush.bf16.msra.mxu0 %v4172
        %4674 = vmatpush.bf16.msra.mxu0 %v4168
        %4675 = vmatpush.bf16.msra.mxu0 %v4164
        %4676 = vmatpush.bf16.msra.mxu0 %v4160
        %4677 = vmatpush.bf16.msra.mxu0 %v4156
        %4678 = vmatpush.bf16.msra.mxu0 %v4152
        %4679 = vmatmul.bf16.gmra.mxu0 %v525
        %v4680 = vpop.f32.mrf.mxu0
        %v4681 = vadd.f32 %v4668, %v4680
        %v4682 = vpop.f32.mrf.mxu0
        %4683 = vdwg.mxu0
        %4684 = vmatpush.bf16.msra.mxu0 %v4212
        %4685 = vmatpush.bf16.msra.mxu0 %v4208
        %4686 = vmatpush.bf16.msra.mxu0 %v4204
        %4687 = vmatpush.bf16.msra.mxu0 %v4200
        %4688 = vmatpush.bf16.msra.mxu0 %v4196
        %4689 = vmatpush.bf16.msra.mxu0 %v4192
        %4690 = vmatpush.bf16.msra.mxu0 %v4188
        %4691 = vmatpush.bf16.msra.mxu0 %v4184
        %4692 = vmatmul.bf16.gmra.mxu0 %v526
        %v4693 = vpop.f32.mrf.mxu0
        %v4694 = vadd.f32 %v4681, %v4693
        %v4695 = vpop.f32.mrf.mxu0
        %4696 = vdwg.mxu0
        %4697 = vmatpush.bf16.msra.mxu0 %v4244
        %4698 = vmatpush.bf16.msra.mxu0 %v4240
        %4699 = vmatpush.bf16.msra.mxu0 %v4236
        %4700 = vmatpush.bf16.msra.mxu0 %v4232
        %4701 = vmatpush.bf16.msra.mxu0 %v4228
        %4702 = vmatpush.bf16.msra.mxu0 %v4224
        %4703 = vmatpush.bf16.msra.mxu0 %v4220
        %4704 = vmatpush.bf16.msra.mxu0 %v4216
        %4705 = vmatmul.bf16.gmra.mxu0 %v527
        %v4706 = vpop.f32.mrf.mxu0
        %v4707 = vadd.f32 %v4694, %v4706
        %v4708 = vpop.f32.mrf.mxu0
        %4709 = vdwg.mxu0
        %4710 = vmatpush.bf16.msra.mxu0 %v4276
        %4711 = vmatpush.bf16.msra.mxu0 %v4272
        %4712 = vmatpush.bf16.msra.mxu0 %v4268
        %4713 = vmatpush.bf16.msra.mxu0 %v4264
        %4714 = vmatpush.bf16.msra.mxu0 %v4260
        %4715 = vmatpush.bf16.msra.mxu0 %v4256
        %4716 = vmatpush.bf16.msra.mxu0 %v4252
        %4717 = vmatpush.bf16.msra.mxu0 %v4248
        %4718 = vmatmul.bf16.gmra.mxu0 %v528
        %v4719 = vpop.f32.mrf.mxu0
        %v4720 = vadd.f32 %v4707, %v4719
        %v4721 = vpop.f32.mrf.mxu0
        %4722 = vdwg.mxu0
        %4723 = vmatpush.bf16.msra.mxu0 %v4308
        %4724 = vmatpush.bf16.msra.mxu0 %v4304
        %4725 = vmatpush.bf16.msra.mxu0 %v4300
        %4726 = vmatpush.bf16.msra.mxu0 %v4296
        %4727 = vmatpush.bf16.msra.mxu0 %v4292
        %4728 = vmatpush.bf16.msra.mxu0 %v4288
        %4729 = vmatpush.bf16.msra.mxu0 %v4284
        %4730 = vmatpush.bf16.msra.mxu0 %v4280
        %4731 = vmatmul.bf16.gmra.mxu0 %v529
        %v4732 = vpop.f32.mrf.mxu0
        %v4733 = vadd.f32 %v4720, %v4732
        %v4734 = vpop.f32.mrf.mxu0
        %4735 = vdwg.mxu0
        %4736 = vmatpush.bf16.msra.mxu0 %v4149
        %4737 = vmatpush.bf16.msra.mxu0 %v4145
        %4738 = vmatpush.bf16.msra.mxu0 %v4141
        %4739 = vmatpush.bf16.msra.mxu0 %v4137
        %4740 = vmatpush.bf16.msra.mxu0 %v4133
        %4741 = vmatpush.bf16.msra.mxu0 %v4129
        %4742 = vmatpush.bf16.msra.mxu0 %v4125
        %4743 = vmatpush.bf16.msra.mxu0 %v4121
        %4744 = vmatmul.bf16.gmra.mxu0 %v524
        %v4745 = vpop.f32.mrf.mxu0
        %v4746 = vadd.f32 %v3541, %v4745
        %v4747 = vpop.f32.mrf.mxu0
        %4748 = vdwg.mxu0
        %4749 = vmatpush.bf16.msra.mxu0 %v4181
        %4750 = vmatpush.bf16.msra.mxu0 %v4177
        %4751 = vmatpush.bf16.msra.mxu0 %v4173
        %4752 = vmatpush.bf16.msra.mxu0 %v4169
        %4753 = vmatpush.bf16.msra.mxu0 %v4165
        %4754 = vmatpush.bf16.msra.mxu0 %v4161
        %4755 = vmatpush.bf16.msra.mxu0 %v4157
        %4756 = vmatpush.bf16.msra.mxu0 %v4153
        %4757 = vmatmul.bf16.gmra.mxu0 %v525
        %v4758 = vpop.f32.mrf.mxu0
        %v4759 = vadd.f32 %v4746, %v4758
        %v4760 = vpop.f32.mrf.mxu0
        %4761 = vdwg.mxu0
        %4762 = vmatpush.bf16.msra.mxu0 %v4213
        %4763 = vmatpush.bf16.msra.mxu0 %v4209
        %4764 = vmatpush.bf16.msra.mxu0 %v4205
        %4765 = vmatpush.bf16.msra.mxu0 %v4201
        %4766 = vmatpush.bf16.msra.mxu0 %v4197
        %4767 = vmatpush.bf16.msra.mxu0 %v4193
        %4768 = vmatpush.bf16.msra.mxu0 %v4189
        %4769 = vmatpush.bf16.msra.mxu0 %v4185
        %4770 = vmatmul.bf16.gmra.mxu0 %v526
        %v4771 = vpop.f32.mrf.mxu0
        %v4772 = vadd.f32 %v4759, %v4771
        %v4773 = vpop.f32.mrf.mxu0
        %4774 = vdwg.mxu0
        %4775 = vmatpush.bf16.msra.mxu0 %v4245
        %4776 = vmatpush.bf16.msra.mxu0 %v4241
        %4777 = vmatpush.bf16.msra.mxu0 %v4237
        %4778 = vmatpush.bf16.msra.mxu0 %v4233
        %4779 = vmatpush.bf16.msra.mxu0 %v4229
        %4780 = vmatpush.bf16.msra.mxu0 %v4225
        %4781 = vmatpush.bf16.msra.mxu0 %v4221
        %4782 = vmatpush.bf16.msra.mxu0 %v4217
        %4783 = vmatmul.bf16.gmra.mxu0 %v527
        %v4784 = vpop.f32.mrf.mxu0
        %v4785 = vadd.f32 %v4772, %v4784
        %v4786 = vpop.f32.mrf.mxu0
        %4787 = vdwg.mxu0
        %4788 = vmatpush.bf16.msra.mxu0 %v4277
        %4789 = vmatpush.bf16.msra.mxu0 %v4273
        %4790 = vmatpush.bf16.msra.mxu0 %v4269
        %4791 = vmatpush.bf16.msra.mxu0 %v4265
        %4792 = vmatpush.bf16.msra.mxu0 %v4261
        %4793 = vmatpush.bf16.msra.mxu0 %v4257
        %4794 = vmatpush.bf16.msra.mxu0 %v4253
        %4795 = vmatpush.bf16.msra.mxu0 %v4249
        %4796 = vmatmul.bf16.gmra.mxu0 %v528
        %v4797 = vpop.f32.mrf.mxu0
        %v4798 = vadd.f32 %v4785, %v4797
        %v4799 = vpop.f32.mrf.mxu0
        %4800 = vdwg.mxu0
        %4801 = vmatpush.bf16.msra.mxu0 %v4309
        %4802 = vmatpush.bf16.msra.mxu0 %v4305
        %4803 = vmatpush.bf16.msra.mxu0 %v4301
        %4804 = vmatpush.bf16.msra.mxu0 %v4297
        %4805 = vmatpush.bf16.msra.mxu0 %v4293
        %4806 = vmatpush.bf16.msra.mxu0 %v4289
        %4807 = vmatpush.bf16.msra.mxu0 %v4285
        %4808 = vmatpush.bf16.msra.mxu0 %v4281
        %4809 = vmatmul.bf16.gmra.mxu0 %v529
        %v4810 = vpop.f32.mrf.mxu0
        %v4811 = vadd.f32 %v4798, %v4810
        %v4812 = vpop.f32.mrf.mxu0
        %4813 = vdwg.mxu0
        %v4814 = vmax.f32 %v4577, 0.0
        %v4815 = vmax.f32 %v4655, 0.0
        %v4816 = vmax.f32 %v4733, 0.0
        %v4817 = vmax.f32 %v4811, 0.0
        %v4818 = vperm.slane %v305, 2
        %v4819 = vperm.slane %v305, 6
        %v4820 = vperm.slane %v306, 2
        %v4821 = vperm.slane %v306, 6
        %v4826 = vperm.slane %v4818, 2
        %v4827 = vperm.slane %v4819, 2
        %v4828 = vperm.slane %v4820, 2
        %v4829 = vperm.slane %v4821, 2
        %v4830 = vmul.f32 %v4814, %v4826
        %v4831 = vmul.f32 %v4815, %v4827
        %v4832 = vmul.f32 %v4816, %v4828
        %v4833 = vmul.f32 %v4817, %v4829
        %v4834 = vadd.f32 %v4830, %v4831
        %v4835 = vadd.f32 %v4834, %v4832
        %v4836 = vadd.f32 %v4835, %v4833
        %4837 = vadd.xlane.f32.xlu0 %v4836
        %v4838 = vpop.xlane.xlu0 %4837
        %s4839 = scalar_lea.vmem %s256, 4608 [#allocation5]
        %v4840 = vld [vmem:[%s4839] sm:$0xff]
        %v4841 = vld [vmem:[%s4839 + $0x8] sm:$0xff]
        %v4842 = vld [vmem:[%s4839 + $0x10] sm:$0xff]
        %v4843 = vld [vmem:[%s4839 + $0x18] sm:$0xff]
        %v4844 = vld [vmem:[%s4839 + $0x20] sm:$0xff]
        %v4845 = vld [vmem:[%s4839 + $0x28] sm:$0xff]
        %v4846 = vld [vmem:[%s4839 + $0x30] sm:$0xff]
        %v4847 = vld [vmem:[%s4839 + $0x38] sm:$0xff]
        %v4848 = vld [vmem:[%s4839 + $0x40] sm:$0xff]
        %v4849 = vld [vmem:[%s4839 + $0x48] sm:$0xff]
        %v4850 = vld [vmem:[%s4839 + $0x50] sm:$0xff]
        %v4851 = vld [vmem:[%s4839 + $0x58] sm:$0xff]
        %v4852 = vld [vmem:[%s4839 + $0x60] sm:$0xff]
        %v4853 = vld [vmem:[%s4839 + $0x68] sm:$0xff]
        %v4854 = vld [vmem:[%s4839 + $0x70] sm:$0xff]
        %v4855 = vld [vmem:[%s4839 + $0x78] sm:$0xff]
        %v4856 = vld [vmem:[%s4839 + $0x80] sm:$0xff]
        %v4857 = vld [vmem:[%s4839 + $0x88] sm:$0xff]
        %v4858 = vld [vmem:[%s4839 + $0x90] sm:$0xff]
        %v4859 = vld [vmem:[%s4839 + $0x98] sm:$0xff]
        %v4860 = vld [vmem:[%s4839 + $0xa0] sm:$0xff]
        %v4861 = vld [vmem:[%s4839 + $0xa8] sm:$0xff]
        %v4862 = vld [vmem:[%s4839 + $0xb0] sm:$0xff]
        %v4863 = vld [vmem:[%s4839 + $0xb8] sm:$0xff]
        %v4864 = vld [vmem:[%s4839 + $0xc0] sm:$0xff]
        %v4865 = vld [vmem:[%s4839 + $0xc8] sm:$0xff]
        %v4866 = vld [vmem:[%s4839 + $0xd0] sm:$0xff]
        %v4867 = vld [vmem:[%s4839 + $0xd8] sm:$0xff]
        %v4868 = vld [vmem:[%s4839 + $0xe0] sm:$0xff]
        %v4869 = vld [vmem:[%s4839 + $0xe8] sm:$0xff]
        %v4870 = vld [vmem:[%s4839 + $0xf0] sm:$0xff]
        %v4871 = vld [vmem:[%s4839 + $0xf8] sm:$0xff]
        %v4872 = vld [vmem:[%s4839 + $0x100] sm:$0xff]
        %v4873 = vld [vmem:[%s4839 + $0x108] sm:$0xff]
        %v4874 = vld [vmem:[%s4839 + $0x110] sm:$0xff]
        %v4875 = vld [vmem:[%s4839 + $0x118] sm:$0xff]
        %v4876 = vld [vmem:[%s4839 + $0x120] sm:$0xff]
        %v4877 = vld [vmem:[%s4839 + $0x128] sm:$0xff]
        %v4878 = vld [vmem:[%s4839 + $0x130] sm:$0xff]
        %v4879 = vld [vmem:[%s4839 + $0x138] sm:$0xff]
        %v4880 = vld [vmem:[%s4839 + $0x140] sm:$0xff]
        %v4881 = vld [vmem:[%s4839 + $0x148] sm:$0xff]
        %v4882 = vld [vmem:[%s4839 + $0x150] sm:$0xff]
        %v4883 = vld [vmem:[%s4839 + $0x158] sm:$0xff]
        %v4884 = vld [vmem:[%s4839 + $0x160] sm:$0xff]
        %v4885 = vld [vmem:[%s4839 + $0x168] sm:$0xff]
        %v4886 = vld [vmem:[%s4839 + $0x170] sm:$0xff]
        %v4887 = vld [vmem:[%s4839 + $0x178] sm:$0xff]
        %v4888 = vld [vmem:[%s4839 + $0x180] sm:$0xff]
        %v4889 = vld [vmem:[%s4839 + $0x188] sm:$0xff]
        %v4890 = vld [vmem:[%s4839 + $0x190] sm:$0xff]
        %v4891 = vld [vmem:[%s4839 + $0x198] sm:$0xff]
        %v4892 = vld [vmem:[%s4839 + $0x1a0] sm:$0xff]
        %v4893 = vld [vmem:[%s4839 + $0x1a8] sm:$0xff]
        %v4894 = vld [vmem:[%s4839 + $0x1b0] sm:$0xff]
        %v4895 = vld [vmem:[%s4839 + $0x1b8] sm:$0xff]
        %v4896 = vld [vmem:[%s4839 + $0x1c0] sm:$0xff]
        %v4897 = vld [vmem:[%s4839 + $0x1c8] sm:$0xff]
        %v4898 = vld [vmem:[%s4839 + $0x1d0] sm:$0xff]
        %v4899 = vld [vmem:[%s4839 + $0x1d8] sm:$0xff]
        %v4900 = vld [vmem:[%s4839 + $0x1e0] sm:$0xff]
        %v4901 = vld [vmem:[%s4839 + $0x1e8] sm:$0xff]
        %v4902 = vld [vmem:[%s4839 + $0x1f0] sm:$0xff]
        %v4903 = vld [vmem:[%s4839 + $0x1f8] sm:$0xff]
        %v4904 = vld [vmem:[%s4839 + $0x200] sm:$0xff]
        %v4905 = vld [vmem:[%s4839 + $0x208] sm:$0xff]
        %v4906 = vld [vmem:[%s4839 + $0x210] sm:$0xff]
        %v4907 = vld [vmem:[%s4839 + $0x218] sm:$0xff]
        %v4908 = vld [vmem:[%s4839 + $0x220] sm:$0xff]
        %v4909 = vld [vmem:[%s4839 + $0x228] sm:$0xff]
        %v4910 = vld [vmem:[%s4839 + $0x230] sm:$0xff]
        %v4911 = vld [vmem:[%s4839 + $0x238] sm:$0xff]
        %v4912 = vld [vmem:[%s4839 + $0x240] sm:$0xff]
        %v4913 = vld [vmem:[%s4839 + $0x248] sm:$0xff]
        %v4914 = vld [vmem:[%s4839 + $0x250] sm:$0xff]
        %v4915 = vld [vmem:[%s4839 + $0x258] sm:$0xff]
        %v4916 = vld [vmem:[%s4839 + $0x260] sm:$0xff]
        %v4917 = vld [vmem:[%s4839 + $0x268] sm:$0xff]
        %v4918 = vld [vmem:[%s4839 + $0x270] sm:$0xff]
        %v4919 = vld [vmem:[%s4839 + $0x278] sm:$0xff]
        %v4920 = vld [vmem:[%s4839 + $0x280] sm:$0xff]
        %v4921 = vld [vmem:[%s4839 + $0x288] sm:$0xff]
        %v4922 = vld [vmem:[%s4839 + $0x290] sm:$0xff]
        %v4923 = vld [vmem:[%s4839 + $0x298] sm:$0xff]
        %v4924 = vld [vmem:[%s4839 + $0x2a0] sm:$0xff]
        %v4925 = vld [vmem:[%s4839 + $0x2a8] sm:$0xff]
        %v4926 = vld [vmem:[%s4839 + $0x2b0] sm:$0xff]
        %v4927 = vld [vmem:[%s4839 + $0x2b8] sm:$0xff]
        %v4928 = vld [vmem:[%s4839 + $0x2c0] sm:$0xff]
        %v4929 = vld [vmem:[%s4839 + $0x2c8] sm:$0xff]
        %v4930 = vld [vmem:[%s4839 + $0x2d0] sm:$0xff]
        %v4931 = vld [vmem:[%s4839 + $0x2d8] sm:$0xff]
        %v4932 = vld [vmem:[%s4839 + $0x2e0] sm:$0xff]
        %v4933 = vld [vmem:[%s4839 + $0x2e8] sm:$0xff]
        %v4934 = vld [vmem:[%s4839 + $0x2f0] sm:$0xff]
        %v4935 = vld [vmem:[%s4839 + $0x2f8] sm:$0xff]
        %v4936 = vld [vmem:[%s4839 + $0x300] sm:$0xff]
        %v4937 = vld [vmem:[%s4839 + $0x308] sm:$0xff]
        %v4938 = vld [vmem:[%s4839 + $0x310] sm:$0xff]
        %v4939 = vld [vmem:[%s4839 + $0x318] sm:$0xff]
        %v4940 = vld [vmem:[%s4839 + $0x320] sm:$0xff]
        %v4941 = vld [vmem:[%s4839 + $0x328] sm:$0xff]
        %v4942 = vld [vmem:[%s4839 + $0x330] sm:$0xff]
        %v4943 = vld [vmem:[%s4839 + $0x338] sm:$0xff]
        %v4944 = vld [vmem:[%s4839 + $0x340] sm:$0xff]
        %v4945 = vld [vmem:[%s4839 + $0x348] sm:$0xff]
        %v4946 = vld [vmem:[%s4839 + $0x350] sm:$0xff]
        %v4947 = vld [vmem:[%s4839 + $0x358] sm:$0xff]
        %v4948 = vld [vmem:[%s4839 + $0x360] sm:$0xff]
        %v4949 = vld [vmem:[%s4839 + $0x368] sm:$0xff]
        %v4950 = vld [vmem:[%s4839 + $0x370] sm:$0xff]
        %v4951 = vld [vmem:[%s4839 + $0x378] sm:$0xff]
        %v4952 = vld [vmem:[%s4839 + $0x380] sm:$0xff]
        %v4953 = vld [vmem:[%s4839 + $0x388] sm:$0xff]
        %v4954 = vld [vmem:[%s4839 + $0x390] sm:$0xff]
        %v4955 = vld [vmem:[%s4839 + $0x398] sm:$0xff]
        %v4956 = vld [vmem:[%s4839 + $0x3a0] sm:$0xff]
        %v4957 = vld [vmem:[%s4839 + $0x3a8] sm:$0xff]
        %v4958 = vld [vmem:[%s4839 + $0x3b0] sm:$0xff]
        %v4959 = vld [vmem:[%s4839 + $0x3b8] sm:$0xff]
        %v4960 = vld [vmem:[%s4839 + $0x3c0] sm:$0xff]
        %v4961 = vld [vmem:[%s4839 + $0x3c8] sm:$0xff]
        %v4962 = vld [vmem:[%s4839 + $0x3d0] sm:$0xff]
        %v4963 = vld [vmem:[%s4839 + $0x3d8] sm:$0xff]
        %v4964 = vld [vmem:[%s4839 + $0x3e0] sm:$0xff]
        %v4965 = vld [vmem:[%s4839 + $0x3e8] sm:$0xff]
        %v4966 = vld [vmem:[%s4839 + $0x3f0] sm:$0xff]
        %v4967 = vld [vmem:[%s4839 + $0x3f8] sm:$0xff]
        %v4968 = vld [vmem:[%s4839 + $0x400] sm:$0xff]
        %v4969 = vld [vmem:[%s4839 + $0x408] sm:$0xff]
        %v4970 = vld [vmem:[%s4839 + $0x410] sm:$0xff]
        %v4971 = vld [vmem:[%s4839 + $0x418] sm:$0xff]
        %v4972 = vld [vmem:[%s4839 + $0x420] sm:$0xff]
        %v4973 = vld [vmem:[%s4839 + $0x428] sm:$0xff]
        %v4974 = vld [vmem:[%s4839 + $0x430] sm:$0xff]
        %v4975 = vld [vmem:[%s4839 + $0x438] sm:$0xff]
        %v4976 = vld [vmem:[%s4839 + $0x440] sm:$0xff]
        %v4977 = vld [vmem:[%s4839 + $0x448] sm:$0xff]
        %v4978 = vld [vmem:[%s4839 + $0x450] sm:$0xff]
        %v4979 = vld [vmem:[%s4839 + $0x458] sm:$0xff]
        %v4980 = vld [vmem:[%s4839 + $0x460] sm:$0xff]
        %v4981 = vld [vmem:[%s4839 + $0x468] sm:$0xff]
        %v4982 = vld [vmem:[%s4839 + $0x470] sm:$0xff]
        %v4983 = vld [vmem:[%s4839 + $0x478] sm:$0xff]
        %v4984 = vld [vmem:[%s4839 + $0x480] sm:$0xff]
        %v4985 = vld [vmem:[%s4839 + $0x488] sm:$0xff]
        %v4986 = vld [vmem:[%s4839 + $0x490] sm:$0xff]
        %v4987 = vld [vmem:[%s4839 + $0x498] sm:$0xff]
        %v4988 = vld [vmem:[%s4839 + $0x4a0] sm:$0xff]
        %v4989 = vld [vmem:[%s4839 + $0x4a8] sm:$0xff]
        %v4990 = vld [vmem:[%s4839 + $0x4b0] sm:$0xff]
        %v4991 = vld [vmem:[%s4839 + $0x4b8] sm:$0xff]
        %v4992 = vld [vmem:[%s4839 + $0x4c0] sm:$0xff]
        %v4993 = vld [vmem:[%s4839 + $0x4c8] sm:$0xff]
        %v4994 = vld [vmem:[%s4839 + $0x4d0] sm:$0xff]
        %v4995 = vld [vmem:[%s4839 + $0x4d8] sm:$0xff]
        %v4996 = vld [vmem:[%s4839 + $0x4e0] sm:$0xff]
        %v4997 = vld [vmem:[%s4839 + $0x4e8] sm:$0xff]
        %v4998 = vld [vmem:[%s4839 + $0x4f0] sm:$0xff]
        %v4999 = vld [vmem:[%s4839 + $0x4f8] sm:$0xff]
        %v5000 = vld [vmem:[%s4839 + $0x500] sm:$0xff]
        %v5001 = vld [vmem:[%s4839 + $0x508] sm:$0xff]
        %v5002 = vld [vmem:[%s4839 + $0x510] sm:$0xff]
        %v5003 = vld [vmem:[%s4839 + $0x518] sm:$0xff]
        %v5004 = vld [vmem:[%s4839 + $0x520] sm:$0xff]
        %v5005 = vld [vmem:[%s4839 + $0x528] sm:$0xff]
        %v5006 = vld [vmem:[%s4839 + $0x530] sm:$0xff]
        %v5007 = vld [vmem:[%s4839 + $0x538] sm:$0xff]
        %v5008 = vld [vmem:[%s4839 + $0x540] sm:$0xff]
        %v5009 = vld [vmem:[%s4839 + $0x548] sm:$0xff]
        %v5010 = vld [vmem:[%s4839 + $0x550] sm:$0xff]
        %v5011 = vld [vmem:[%s4839 + $0x558] sm:$0xff]
        %v5012 = vld [vmem:[%s4839 + $0x560] sm:$0xff]
        %v5013 = vld [vmem:[%s4839 + $0x568] sm:$0xff]
        %v5014 = vld [vmem:[%s4839 + $0x570] sm:$0xff]
        %v5015 = vld [vmem:[%s4839 + $0x578] sm:$0xff]
        %v5016 = vld [vmem:[%s4839 + $0x580] sm:$0xff]
        %v5017 = vld [vmem:[%s4839 + $0x588] sm:$0xff]
        %v5018 = vld [vmem:[%s4839 + $0x590] sm:$0xff]
        %v5019 = vld [vmem:[%s4839 + $0x598] sm:$0xff]
        %v5020 = vld [vmem:[%s4839 + $0x5a0] sm:$0xff]
        %v5021 = vld [vmem:[%s4839 + $0x5a8] sm:$0xff]
        %v5022 = vld [vmem:[%s4839 + $0x5b0] sm:$0xff]
        %v5023 = vld [vmem:[%s4839 + $0x5b8] sm:$0xff]
        %v5024 = vld [vmem:[%s4839 + $0x5c0] sm:$0xff]
        %v5025 = vld [vmem:[%s4839 + $0x5c8] sm:$0xff]
        %v5026 = vld [vmem:[%s4839 + $0x5d0] sm:$0xff]
        %v5027 = vld [vmem:[%s4839 + $0x5d8] sm:$0xff]
        %v5028 = vld [vmem:[%s4839 + $0x5e0] sm:$0xff]
        %v5029 = vld [vmem:[%s4839 + $0x5e8] sm:$0xff]
        %v5030 = vld [vmem:[%s4839 + $0x5f0] sm:$0xff]
        %v5031 = vld [vmem:[%s4839 + $0x5f8] sm:$0xff]
        %v5032 = vperm.slane %v301, 3
        %v5033 = vperm.slane %v301, 7
        %v5034 = vperm.slane %v302, 3
        %v5035 = vperm.slane %v302, 7
        %v5040 = vperm.slane %v5032, 3
        %v5041 = vperm.slane %v5033, 3
        %v5042 = vperm.slane %v5034, 3
        %v5043 = vperm.slane %v5035, 3
        %v5236 = vunpack.c.l.b16 %v4840
        %v5237 = vunpack.c.h.b16 %v4840
        %v5238 = vunpack.c.l.b16 %v4841
        %v5239 = vunpack.c.h.b16 %v4841
        %v5240 = vunpack.c.l.b16 %v4842
        %v5241 = vunpack.c.h.b16 %v4842
        %v5242 = vunpack.c.l.b16 %v4843
        %v5243 = vunpack.c.h.b16 %v4843
        %v5244 = vunpack.c.l.b16 %v4844
        %v5245 = vunpack.c.h.b16 %v4844
        %v5246 = vunpack.c.l.b16 %v4845
        %v5247 = vunpack.c.h.b16 %v4845
        %v5248 = vunpack.c.l.b16 %v4846
        %v5249 = vunpack.c.h.b16 %v4846
        %v5250 = vunpack.c.l.b16 %v4847
        %v5251 = vunpack.c.h.b16 %v4847
        %v5252 = vunpack.c.l.b16 %v4848
        %v5253 = vunpack.c.h.b16 %v4848
        %v5254 = vunpack.c.l.b16 %v4849
        %v5255 = vunpack.c.h.b16 %v4849
        %v5256 = vunpack.c.l.b16 %v4850
        %v5257 = vunpack.c.h.b16 %v4850
        %v5258 = vunpack.c.l.b16 %v4851
        %v5259 = vunpack.c.h.b16 %v4851
        %v5260 = vunpack.c.l.b16 %v4852
        %v5261 = vunpack.c.h.b16 %v4852
        %v5262 = vunpack.c.l.b16 %v4853
        %v5263 = vunpack.c.h.b16 %v4853
        %v5264 = vunpack.c.l.b16 %v4854
        %v5265 = vunpack.c.h.b16 %v4854
        %v5266 = vunpack.c.l.b16 %v4855
        %v5267 = vunpack.c.h.b16 %v4855
        %v5268 = vunpack.c.l.b16 %v4856
        %v5269 = vunpack.c.h.b16 %v4856
        %v5270 = vunpack.c.l.b16 %v4857
        %v5271 = vunpack.c.h.b16 %v4857
        %v5272 = vunpack.c.l.b16 %v4858
        %v5273 = vunpack.c.h.b16 %v4858
        %v5274 = vunpack.c.l.b16 %v4859
        %v5275 = vunpack.c.h.b16 %v4859
        %v5276 = vunpack.c.l.b16 %v4860
        %v5277 = vunpack.c.h.b16 %v4860
        %v5278 = vunpack.c.l.b16 %v4861
        %v5279 = vunpack.c.h.b16 %v4861
        %v5280 = vunpack.c.l.b16 %v4862
        %v5281 = vunpack.c.h.b16 %v4862
        %v5282 = vunpack.c.l.b16 %v4863
        %v5283 = vunpack.c.h.b16 %v4863
        %v5284 = vunpack.c.l.b16 %v4864
        %v5285 = vunpack.c.h.b16 %v4864
        %v5286 = vunpack.c.l.b16 %v4865
        %v5287 = vunpack.c.h.b16 %v4865
        %v5288 = vunpack.c.l.b16 %v4866
        %v5289 = vunpack.c.h.b16 %v4866
        %v5290 = vunpack.c.l.b16 %v4867
        %v5291 = vunpack.c.h.b16 %v4867
        %v5292 = vunpack.c.l.b16 %v4868
        %v5293 = vunpack.c.h.b16 %v4868
        %v5294 = vunpack.c.l.b16 %v4869
        %v5295 = vunpack.c.h.b16 %v4869
        %v5296 = vunpack.c.l.b16 %v4870
        %v5297 = vunpack.c.h.b16 %v4870
        %v5298 = vunpack.c.l.b16 %v4871
        %v5299 = vunpack.c.h.b16 %v4871
        %v5300 = vunpack.c.l.b16 %v4872
        %v5301 = vunpack.c.h.b16 %v4872
        %v5302 = vunpack.c.l.b16 %v4873
        %v5303 = vunpack.c.h.b16 %v4873
        %v5304 = vunpack.c.l.b16 %v4874
        %v5305 = vunpack.c.h.b16 %v4874
        %v5306 = vunpack.c.l.b16 %v4875
        %v5307 = vunpack.c.h.b16 %v4875
        %v5308 = vunpack.c.l.b16 %v4876
        %v5309 = vunpack.c.h.b16 %v4876
        %v5310 = vunpack.c.l.b16 %v4877
        %v5311 = vunpack.c.h.b16 %v4877
        %v5312 = vunpack.c.l.b16 %v4878
        %v5313 = vunpack.c.h.b16 %v4878
        %v5314 = vunpack.c.l.b16 %v4879
        %v5315 = vunpack.c.h.b16 %v4879
        %v5316 = vunpack.c.l.b16 %v4880
        %v5317 = vunpack.c.h.b16 %v4880
        %v5318 = vunpack.c.l.b16 %v4881
        %v5319 = vunpack.c.h.b16 %v4881
        %v5320 = vunpack.c.l.b16 %v4882
        %v5321 = vunpack.c.h.b16 %v4882
        %v5322 = vunpack.c.l.b16 %v4883
        %v5323 = vunpack.c.h.b16 %v4883
        %v5324 = vunpack.c.l.b16 %v4884
        %v5325 = vunpack.c.h.b16 %v4884
        %v5326 = vunpack.c.l.b16 %v4885
        %v5327 = vunpack.c.h.b16 %v4885
        %v5328 = vunpack.c.l.b16 %v4886
        %v5329 = vunpack.c.h.b16 %v4886
        %v5330 = vunpack.c.l.b16 %v4887
        %v5331 = vunpack.c.h.b16 %v4887
        %v5332 = vunpack.c.l.b16 %v4888
        %v5333 = vunpack.c.h.b16 %v4888
        %v5334 = vunpack.c.l.b16 %v4889
        %v5335 = vunpack.c.h.b16 %v4889
        %v5336 = vunpack.c.l.b16 %v4890
        %v5337 = vunpack.c.h.b16 %v4890
        %v5338 = vunpack.c.l.b16 %v4891
        %v5339 = vunpack.c.h.b16 %v4891
        %v5340 = vunpack.c.l.b16 %v4892
        %v5341 = vunpack.c.h.b16 %v4892
        %v5342 = vunpack.c.l.b16 %v4893
        %v5343 = vunpack.c.h.b16 %v4893
        %v5344 = vunpack.c.l.b16 %v4894
        %v5345 = vunpack.c.h.b16 %v4894
        %v5346 = vunpack.c.l.b16 %v4895
        %v5347 = vunpack.c.h.b16 %v4895
        %v5348 = vunpack.c.l.b16 %v4896
        %v5349 = vunpack.c.h.b16 %v4896
        %v5350 = vunpack.c.l.b16 %v4897
        %v5351 = vunpack.c.h.b16 %v4897
        %v5352 = vunpack.c.l.b16 %v4898
        %v5353 = vunpack.c.h.b16 %v4898
        %v5354 = vunpack.c.l.b16 %v4899
        %v5355 = vunpack.c.h.b16 %v4899
        %v5356 = vunpack.c.l.b16 %v4900
        %v5357 = vunpack.c.h.b16 %v4900
        %v5358 = vunpack.c.l.b16 %v4901
        %v5359 = vunpack.c.h.b16 %v4901
        %v5360 = vunpack.c.l.b16 %v4902
        %v5361 = vunpack.c.h.b16 %v4902
        %v5362 = vunpack.c.l.b16 %v4903
        %v5363 = vunpack.c.h.b16 %v4903
        %v5364 = vunpack.c.l.b16 %v4904
        %v5365 = vunpack.c.h.b16 %v4904
        %v5366 = vunpack.c.l.b16 %v4905
        %v5367 = vunpack.c.h.b16 %v4905
        %v5368 = vunpack.c.l.b16 %v4906
        %v5369 = vunpack.c.h.b16 %v4906
        %v5370 = vunpack.c.l.b16 %v4907
        %v5371 = vunpack.c.h.b16 %v4907
        %v5372 = vunpack.c.l.b16 %v4908
        %v5373 = vunpack.c.h.b16 %v4908
        %v5374 = vunpack.c.l.b16 %v4909
        %v5375 = vunpack.c.h.b16 %v4909
        %v5376 = vunpack.c.l.b16 %v4910
        %v5377 = vunpack.c.h.b16 %v4910
        %v5378 = vunpack.c.l.b16 %v4911
        %v5379 = vunpack.c.h.b16 %v4911
        %v5380 = vunpack.c.l.b16 %v4912
        %v5381 = vunpack.c.h.b16 %v4912
        %v5382 = vunpack.c.l.b16 %v4913
        %v5383 = vunpack.c.h.b16 %v4913
        %v5384 = vunpack.c.l.b16 %v4914
        %v5385 = vunpack.c.h.b16 %v4914
        %v5386 = vunpack.c.l.b16 %v4915
        %v5387 = vunpack.c.h.b16 %v4915
        %v5388 = vunpack.c.l.b16 %v4916
        %v5389 = vunpack.c.h.b16 %v4916
        %v5390 = vunpack.c.l.b16 %v4917
        %v5391 = vunpack.c.h.b16 %v4917
        %v5392 = vunpack.c.l.b16 %v4918
        %v5393 = vunpack.c.h.b16 %v4918
        %v5394 = vunpack.c.l.b16 %v4919
        %v5395 = vunpack.c.h.b16 %v4919
        %v5396 = vunpack.c.l.b16 %v4920
        %v5397 = vunpack.c.h.b16 %v4920
        %v5398 = vunpack.c.l.b16 %v4921
        %v5399 = vunpack.c.h.b16 %v4921
        %v5400 = vunpack.c.l.b16 %v4922
        %v5401 = vunpack.c.h.b16 %v4922
        %v5402 = vunpack.c.l.b16 %v4923
        %v5403 = vunpack.c.h.b16 %v4923
        %v5404 = vunpack.c.l.b16 %v4924
        %v5405 = vunpack.c.h.b16 %v4924
        %v5406 = vunpack.c.l.b16 %v4925
        %v5407 = vunpack.c.h.b16 %v4925
        %v5408 = vunpack.c.l.b16 %v4926
        %v5409 = vunpack.c.h.b16 %v4926
        %v5410 = vunpack.c.l.b16 %v4927
        %v5411 = vunpack.c.h.b16 %v4927
        %v5412 = vunpack.c.l.b16 %v4928
        %v5413 = vunpack.c.h.b16 %v4928
        %v5414 = vunpack.c.l.b16 %v4929
        %v5415 = vunpack.c.h.b16 %v4929
        %v5416 = vunpack.c.l.b16 %v4930
        %v5417 = vunpack.c.h.b16 %v4930
        %v5418 = vunpack.c.l.b16 %v4931
        %v5419 = vunpack.c.h.b16 %v4931
        %v5420 = vunpack.c.l.b16 %v4932
        %v5421 = vunpack.c.h.b16 %v4932
        %v5422 = vunpack.c.l.b16 %v4933
        %v5423 = vunpack.c.h.b16 %v4933
        %v5424 = vunpack.c.l.b16 %v4934
        %v5425 = vunpack.c.h.b16 %v4934
        %v5426 = vunpack.c.l.b16 %v4935
        %v5427 = vunpack.c.h.b16 %v4935
        %v5428 = vunpack.c.l.b16 %v4936
        %v5429 = vunpack.c.h.b16 %v4936
        %v5430 = vunpack.c.l.b16 %v4937
        %v5431 = vunpack.c.h.b16 %v4937
        %v5432 = vunpack.c.l.b16 %v4938
        %v5433 = vunpack.c.h.b16 %v4938
        %v5434 = vunpack.c.l.b16 %v4939
        %v5435 = vunpack.c.h.b16 %v4939
        %v5436 = vunpack.c.l.b16 %v4940
        %v5437 = vunpack.c.h.b16 %v4940
        %v5438 = vunpack.c.l.b16 %v4941
        %v5439 = vunpack.c.h.b16 %v4941
        %v5440 = vunpack.c.l.b16 %v4942
        %v5441 = vunpack.c.h.b16 %v4942
        %v5442 = vunpack.c.l.b16 %v4943
        %v5443 = vunpack.c.h.b16 %v4943
        %v5444 = vunpack.c.l.b16 %v4944
        %v5445 = vunpack.c.h.b16 %v4944
        %v5446 = vunpack.c.l.b16 %v4945
        %v5447 = vunpack.c.h.b16 %v4945
        %v5448 = vunpack.c.l.b16 %v4946
        %v5449 = vunpack.c.h.b16 %v4946
        %v5450 = vunpack.c.l.b16 %v4947
        %v5451 = vunpack.c.h.b16 %v4947
        %v5452 = vunpack.c.l.b16 %v4948
        %v5453 = vunpack.c.h.b16 %v4948
        %v5454 = vunpack.c.l.b16 %v4949
        %v5455 = vunpack.c.h.b16 %v4949
        %v5456 = vunpack.c.l.b16 %v4950
        %v5457 = vunpack.c.h.b16 %v4950
        %v5458 = vunpack.c.l.b16 %v4951
        %v5459 = vunpack.c.h.b16 %v4951
        %v5460 = vunpack.c.l.b16 %v4952
        %v5461 = vunpack.c.h.b16 %v4952
        %v5462 = vunpack.c.l.b16 %v4953
        %v5463 = vunpack.c.h.b16 %v4953
        %v5464 = vunpack.c.l.b16 %v4954
        %v5465 = vunpack.c.h.b16 %v4954
        %v5466 = vunpack.c.l.b16 %v4955
        %v5467 = vunpack.c.h.b16 %v4955
        %v5468 = vunpack.c.l.b16 %v4956
        %v5469 = vunpack.c.h.b16 %v4956
        %v5470 = vunpack.c.l.b16 %v4957
        %v5471 = vunpack.c.h.b16 %v4957
        %v5472 = vunpack.c.l.b16 %v4958
        %v5473 = vunpack.c.h.b16 %v4958
        %v5474 = vunpack.c.l.b16 %v4959
        %v5475 = vunpack.c.h.b16 %v4959
        %v5476 = vunpack.c.l.b16 %v4960
        %v5477 = vunpack.c.h.b16 %v4960
        %v5478 = vunpack.c.l.b16 %v4961
        %v5479 = vunpack.c.h.b16 %v4961
        %v5480 = vunpack.c.l.b16 %v4962
        %v5481 = vunpack.c.h.b16 %v4962
        %v5482 = vunpack.c.l.b16 %v4963
        %v5483 = vunpack.c.h.b16 %v4963
        %v5484 = vunpack.c.l.b16 %v4964
        %v5485 = vunpack.c.h.b16 %v4964
        %v5486 = vunpack.c.l.b16 %v4965
        %v5487 = vunpack.c.h.b16 %v4965
        %v5488 = vunpack.c.l.b16 %v4966
        %v5489 = vunpack.c.h.b16 %v4966
        %v5490 = vunpack.c.l.b16 %v4967
        %v5491 = vunpack.c.h.b16 %v4967
        %v5492 = vunpack.c.l.b16 %v4968
        %v5493 = vunpack.c.h.b16 %v4968
        %v5494 = vunpack.c.l.b16 %v4969
        %v5495 = vunpack.c.h.b16 %v4969
        %v5496 = vunpack.c.l.b16 %v4970
        %v5497 = vunpack.c.h.b16 %v4970
        %v5498 = vunpack.c.l.b16 %v4971
        %v5499 = vunpack.c.h.b16 %v4971
        %v5500 = vunpack.c.l.b16 %v4972
        %v5501 = vunpack.c.h.b16 %v4972
        %v5502 = vunpack.c.l.b16 %v4973
        %v5503 = vunpack.c.h.b16 %v4973
        %v5504 = vunpack.c.l.b16 %v4974
        %v5505 = vunpack.c.h.b16 %v4974
        %v5506 = vunpack.c.l.b16 %v4975
        %v5507 = vunpack.c.h.b16 %v4975
        %v5508 = vunpack.c.l.b16 %v4976
        %v5509 = vunpack.c.h.b16 %v4976
        %v5510 = vunpack.c.l.b16 %v4977
        %v5511 = vunpack.c.h.b16 %v4977
        %v5512 = vunpack.c.l.b16 %v4978
        %v5513 = vunpack.c.h.b16 %v4978
        %v5514 = vunpack.c.l.b16 %v4979
        %v5515 = vunpack.c.h.b16 %v4979
        %v5516 = vunpack.c.l.b16 %v4980
        %v5517 = vunpack.c.h.b16 %v4980
        %v5518 = vunpack.c.l.b16 %v4981
        %v5519 = vunpack.c.h.b16 %v4981
        %v5520 = vunpack.c.l.b16 %v4982
        %v5521 = vunpack.c.h.b16 %v4982
        %v5522 = vunpack.c.l.b16 %v4983
        %v5523 = vunpack.c.h.b16 %v4983
        %v5524 = vunpack.c.l.b16 %v4984
        %v5525 = vunpack.c.h.b16 %v4984
        %v5526 = vunpack.c.l.b16 %v4985
        %v5527 = vunpack.c.h.b16 %v4985
        %v5528 = vunpack.c.l.b16 %v4986
        %v5529 = vunpack.c.h.b16 %v4986
        %v5530 = vunpack.c.l.b16 %v4987
        %v5531 = vunpack.c.h.b16 %v4987
        %v5532 = vunpack.c.l.b16 %v4988
        %v5533 = vunpack.c.h.b16 %v4988
        %v5534 = vunpack.c.l.b16 %v4989
        %v5535 = vunpack.c.h.b16 %v4989
        %v5536 = vunpack.c.l.b16 %v4990
        %v5537 = vunpack.c.h.b16 %v4990
        %v5538 = vunpack.c.l.b16 %v4991
        %v5539 = vunpack.c.h.b16 %v4991
        %v5540 = vunpack.c.l.b16 %v4992
        %v5541 = vunpack.c.h.b16 %v4992
        %v5542 = vunpack.c.l.b16 %v4993
        %v5543 = vunpack.c.h.b16 %v4993
        %v5544 = vunpack.c.l.b16 %v4994
        %v5545 = vunpack.c.h.b16 %v4994
        %v5546 = vunpack.c.l.b16 %v4995
        %v5547 = vunpack.c.h.b16 %v4995
        %v5548 = vunpack.c.l.b16 %v4996
        %v5549 = vunpack.c.h.b16 %v4996
        %v5550 = vunpack.c.l.b16 %v4997
        %v5551 = vunpack.c.h.b16 %v4997
        %v5552 = vunpack.c.l.b16 %v4998
        %v5553 = vunpack.c.h.b16 %v4998
        %v5554 = vunpack.c.l.b16 %v4999
        %v5555 = vunpack.c.h.b16 %v4999
        %v5556 = vunpack.c.l.b16 %v5000
        %v5557 = vunpack.c.h.b16 %v5000
        %v5558 = vunpack.c.l.b16 %v5001
        %v5559 = vunpack.c.h.b16 %v5001
        %v5560 = vunpack.c.l.b16 %v5002
        %v5561 = vunpack.c.h.b16 %v5002
        %v5562 = vunpack.c.l.b16 %v5003
        %v5563 = vunpack.c.h.b16 %v5003
        %v5564 = vunpack.c.l.b16 %v5004
        %v5565 = vunpack.c.h.b16 %v5004
        %v5566 = vunpack.c.l.b16 %v5005
        %v5567 = vunpack.c.h.b16 %v5005
        %v5568 = vunpack.c.l.b16 %v5006
        %v5569 = vunpack.c.h.b16 %v5006
        %v5570 = vunpack.c.l.b16 %v5007
        %v5571 = vunpack.c.h.b16 %v5007
        %v5572 = vunpack.c.l.b16 %v5008
        %v5573 = vunpack.c.h.b16 %v5008
        %v5574 = vunpack.c.l.b16 %v5009
        %v5575 = vunpack.c.h.b16 %v5009
        %v5576 = vunpack.c.l.b16 %v5010
        %v5577 = vunpack.c.h.b16 %v5010
        %v5578 = vunpack.c.l.b16 %v5011
        %v5579 = vunpack.c.h.b16 %v5011
        %v5580 = vunpack.c.l.b16 %v5012
        %v5581 = vunpack.c.h.b16 %v5012
        %v5582 = vunpack.c.l.b16 %v5013
        %v5583 = vunpack.c.h.b16 %v5013
        %v5584 = vunpack.c.l.b16 %v5014
        %v5585 = vunpack.c.h.b16 %v5014
        %v5586 = vunpack.c.l.b16 %v5015
        %v5587 = vunpack.c.h.b16 %v5015
        %v5588 = vunpack.c.l.b16 %v5016
        %v5589 = vunpack.c.h.b16 %v5016
        %v5590 = vunpack.c.l.b16 %v5017
        %v5591 = vunpack.c.h.b16 %v5017
        %v5592 = vunpack.c.l.b16 %v5018
        %v5593 = vunpack.c.h.b16 %v5018
        %v5594 = vunpack.c.l.b16 %v5019
        %v5595 = vunpack.c.h.b16 %v5019
        %v5596 = vunpack.c.l.b16 %v5020
        %v5597 = vunpack.c.h.b16 %v5020
        %v5598 = vunpack.c.l.b16 %v5021
        %v5599 = vunpack.c.h.b16 %v5021
        %v5600 = vunpack.c.l.b16 %v5022
        %v5601 = vunpack.c.h.b16 %v5022
        %v5602 = vunpack.c.l.b16 %v5023
        %v5603 = vunpack.c.h.b16 %v5023
        %v5604 = vunpack.c.l.b16 %v5024
        %v5605 = vunpack.c.h.b16 %v5024
        %v5606 = vunpack.c.l.b16 %v5025
        %v5607 = vunpack.c.h.b16 %v5025
        %v5608 = vunpack.c.l.b16 %v5026
        %v5609 = vunpack.c.h.b16 %v5026
        %v5610 = vunpack.c.l.b16 %v5027
        %v5611 = vunpack.c.h.b16 %v5027
        %v5612 = vunpack.c.l.b16 %v5028
        %v5613 = vunpack.c.h.b16 %v5028
        %v5614 = vunpack.c.l.b16 %v5029
        %v5615 = vunpack.c.h.b16 %v5029
        %v5616 = vunpack.c.l.b16 %v5030
        %v5617 = vunpack.c.h.b16 %v5030
        %v5618 = vunpack.c.l.b16 %v5031
        %v5619 = vunpack.c.h.b16 %v5031
        %v5620 = vpack.c.b16 %v5240, %v5236
        %v5621 = vpack.c.b16 %v5241, %v5237
        %v5622 = vpack.c.b16 %v5242, %v5238
        %v5623 = vpack.c.b16 %v5243, %v5239
        %v5624 = vpack.c.b16 %v5248, %v5244
        %v5625 = vpack.c.b16 %v5249, %v5245
        %v5626 = vpack.c.b16 %v5250, %v5246
        %v5627 = vpack.c.b16 %v5251, %v5247
        %v5628 = vpack.c.b16 %v5256, %v5252
        %v5629 = vpack.c.b16 %v5257, %v5253
        %v5630 = vpack.c.b16 %v5258, %v5254
        %v5631 = vpack.c.b16 %v5259, %v5255
        %v5632 = vpack.c.b16 %v5264, %v5260
        %v5633 = vpack.c.b16 %v5265, %v5261
        %v5634 = vpack.c.b16 %v5266, %v5262
        %v5635 = vpack.c.b16 %v5267, %v5263
        %v5636 = vpack.c.b16 %v5272, %v5268
        %v5637 = vpack.c.b16 %v5273, %v5269
        %v5638 = vpack.c.b16 %v5274, %v5270
        %v5639 = vpack.c.b16 %v5275, %v5271
        %v5640 = vpack.c.b16 %v5280, %v5276
        %v5641 = vpack.c.b16 %v5281, %v5277
        %v5642 = vpack.c.b16 %v5282, %v5278
        %v5643 = vpack.c.b16 %v5283, %v5279
        %v5644 = vpack.c.b16 %v5288, %v5284
        %v5645 = vpack.c.b16 %v5289, %v5285
        %v5646 = vpack.c.b16 %v5290, %v5286
        %v5647 = vpack.c.b16 %v5291, %v5287
        %v5648 = vpack.c.b16 %v5296, %v5292
        %v5649 = vpack.c.b16 %v5297, %v5293
        %v5650 = vpack.c.b16 %v5298, %v5294
        %v5651 = vpack.c.b16 %v5299, %v5295
        %v5652 = vpack.c.b16 %v5304, %v5300
        %v5653 = vpack.c.b16 %v5305, %v5301
        %v5654 = vpack.c.b16 %v5306, %v5302
        %v5655 = vpack.c.b16 %v5307, %v5303
        %v5656 = vpack.c.b16 %v5312, %v5308
        %v5657 = vpack.c.b16 %v5313, %v5309
        %v5658 = vpack.c.b16 %v5314, %v5310
        %v5659 = vpack.c.b16 %v5315, %v5311
        %v5660 = vpack.c.b16 %v5320, %v5316
        %v5661 = vpack.c.b16 %v5321, %v5317
        %v5662 = vpack.c.b16 %v5322, %v5318
        %v5663 = vpack.c.b16 %v5323, %v5319
        %v5664 = vpack.c.b16 %v5328, %v5324
        %v5665 = vpack.c.b16 %v5329, %v5325
        %v5666 = vpack.c.b16 %v5330, %v5326
        %v5667 = vpack.c.b16 %v5331, %v5327
        %v5668 = vpack.c.b16 %v5336, %v5332
        %v5669 = vpack.c.b16 %v5337, %v5333
        %v5670 = vpack.c.b16 %v5338, %v5334
        %v5671 = vpack.c.b16 %v5339, %v5335
        %v5672 = vpack.c.b16 %v5344, %v5340
        %v5673 = vpack.c.b16 %v5345, %v5341
        %v5674 = vpack.c.b16 %v5346, %v5342
        %v5675 = vpack.c.b16 %v5347, %v5343
        %v5676 = vpack.c.b16 %v5352, %v5348
        %v5677 = vpack.c.b16 %v5353, %v5349
        %v5678 = vpack.c.b16 %v5354, %v5350
        %v5679 = vpack.c.b16 %v5355, %v5351
        %v5680 = vpack.c.b16 %v5360, %v5356
        %v5681 = vpack.c.b16 %v5361, %v5357
        %v5682 = vpack.c.b16 %v5362, %v5358
        %v5683 = vpack.c.b16 %v5363, %v5359
        %v5684 = vpack.c.b16 %v5368, %v5364
        %v5685 = vpack.c.b16 %v5369, %v5365
        %v5686 = vpack.c.b16 %v5370, %v5366
        %v5687 = vpack.c.b16 %v5371, %v5367
        %v5688 = vpack.c.b16 %v5376, %v5372
        %v5689 = vpack.c.b16 %v5377, %v5373
        %v5690 = vpack.c.b16 %v5378, %v5374
        %v5691 = vpack.c.b16 %v5379, %v5375
        %v5692 = vpack.c.b16 %v5384, %v5380
        %v5693 = vpack.c.b16 %v5385, %v5381
        %v5694 = vpack.c.b16 %v5386, %v5382
        %v5695 = vpack.c.b16 %v5387, %v5383
        %v5696 = vpack.c.b16 %v5392, %v5388
        %v5697 = vpack.c.b16 %v5393, %v5389
        %v5698 = vpack.c.b16 %v5394, %v5390
        %v5699 = vpack.c.b16 %v5395, %v5391
        %v5700 = vpack.c.b16 %v5400, %v5396
        %v5701 = vpack.c.b16 %v5401, %v5397
        %v5702 = vpack.c.b16 %v5402, %v5398
        %v5703 = vpack.c.b16 %v5403, %v5399
        %v5704 = vpack.c.b16 %v5408, %v5404
        %v5705 = vpack.c.b16 %v5409, %v5405
        %v5706 = vpack.c.b16 %v5410, %v5406
        %v5707 = vpack.c.b16 %v5411, %v5407
        %v5708 = vpack.c.b16 %v5416, %v5412
        %v5709 = vpack.c.b16 %v5417, %v5413
        %v5710 = vpack.c.b16 %v5418, %v5414
        %v5711 = vpack.c.b16 %v5419, %v5415
        %v5712 = vpack.c.b16 %v5424, %v5420
        %v5713 = vpack.c.b16 %v5425, %v5421
        %v5714 = vpack.c.b16 %v5426, %v5422
        %v5715 = vpack.c.b16 %v5427, %v5423
        %v5716 = vpack.c.b16 %v5432, %v5428
        %v5717 = vpack.c.b16 %v5433, %v5429
        %v5718 = vpack.c.b16 %v5434, %v5430
        %v5719 = vpack.c.b16 %v5435, %v5431
        %v5720 = vpack.c.b16 %v5440, %v5436
        %v5721 = vpack.c.b16 %v5441, %v5437
        %v5722 = vpack.c.b16 %v5442, %v5438
        %v5723 = vpack.c.b16 %v5443, %v5439
        %v5724 = vpack.c.b16 %v5448, %v5444
        %v5725 = vpack.c.b16 %v5449, %v5445
        %v5726 = vpack.c.b16 %v5450, %v5446
        %v5727 = vpack.c.b16 %v5451, %v5447
        %v5728 = vpack.c.b16 %v5456, %v5452
        %v5729 = vpack.c.b16 %v5457, %v5453
        %v5730 = vpack.c.b16 %v5458, %v5454
        %v5731 = vpack.c.b16 %v5459, %v5455
        %v5732 = vpack.c.b16 %v5464, %v5460
        %v5733 = vpack.c.b16 %v5465, %v5461
        %v5734 = vpack.c.b16 %v5466, %v5462
        %v5735 = vpack.c.b16 %v5467, %v5463
        %v5736 = vpack.c.b16 %v5472, %v5468
        %v5737 = vpack.c.b16 %v5473, %v5469
        %v5738 = vpack.c.b16 %v5474, %v5470
        %v5739 = vpack.c.b16 %v5475, %v5471
        %v5740 = vpack.c.b16 %v5480, %v5476
        %v5741 = vpack.c.b16 %v5481, %v5477
        %v5742 = vpack.c.b16 %v5482, %v5478
        %v5743 = vpack.c.b16 %v5483, %v5479
        %v5744 = vpack.c.b16 %v5488, %v5484
        %v5745 = vpack.c.b16 %v5489, %v5485
        %v5746 = vpack.c.b16 %v5490, %v5486
        %v5747 = vpack.c.b16 %v5491, %v5487
        %v5748 = vpack.c.b16 %v5496, %v5492
        %v5749 = vpack.c.b16 %v5497, %v5493
        %v5750 = vpack.c.b16 %v5498, %v5494
        %v5751 = vpack.c.b16 %v5499, %v5495
        %v5752 = vpack.c.b16 %v5504, %v5500
        %v5753 = vpack.c.b16 %v5505, %v5501
        %v5754 = vpack.c.b16 %v5506, %v5502
        %v5755 = vpack.c.b16 %v5507, %v5503
        %v5756 = vpack.c.b16 %v5512, %v5508
        %v5757 = vpack.c.b16 %v5513, %v5509
        %v5758 = vpack.c.b16 %v5514, %v5510
        %v5759 = vpack.c.b16 %v5515, %v5511
        %v5760 = vpack.c.b16 %v5520, %v5516
        %v5761 = vpack.c.b16 %v5521, %v5517
        %v5762 = vpack.c.b16 %v5522, %v5518
        %v5763 = vpack.c.b16 %v5523, %v5519
        %v5764 = vpack.c.b16 %v5528, %v5524
        %v5765 = vpack.c.b16 %v5529, %v5525
        %v5766 = vpack.c.b16 %v5530, %v5526
        %v5767 = vpack.c.b16 %v5531, %v5527
        %v5768 = vpack.c.b16 %v5536, %v5532
        %v5769 = vpack.c.b16 %v5537, %v5533
        %v5770 = vpack.c.b16 %v5538, %v5534
        %v5771 = vpack.c.b16 %v5539, %v5535
        %v5772 = vpack.c.b16 %v5544, %v5540
        %v5773 = vpack.c.b16 %v5545, %v5541
        %v5774 = vpack.c.b16 %v5546, %v5542
        %v5775 = vpack.c.b16 %v5547, %v5543
        %v5776 = vpack.c.b16 %v5552, %v5548
        %v5777 = vpack.c.b16 %v5553, %v5549
        %v5778 = vpack.c.b16 %v5554, %v5550
        %v5779 = vpack.c.b16 %v5555, %v5551
        %v5780 = vpack.c.b16 %v5560, %v5556
        %v5781 = vpack.c.b16 %v5561, %v5557
        %v5782 = vpack.c.b16 %v5562, %v5558
        %v5783 = vpack.c.b16 %v5563, %v5559
        %v5784 = vpack.c.b16 %v5568, %v5564
        %v5785 = vpack.c.b16 %v5569, %v5565
        %v5786 = vpack.c.b16 %v5570, %v5566
        %v5787 = vpack.c.b16 %v5571, %v5567
        %v5788 = vpack.c.b16 %v5576, %v5572
        %v5789 = vpack.c.b16 %v5577, %v5573
        %v5790 = vpack.c.b16 %v5578, %v5574
        %v5791 = vpack.c.b16 %v5579, %v5575
        %v5792 = vpack.c.b16 %v5584, %v5580
        %v5793 = vpack.c.b16 %v5585, %v5581
        %v5794 = vpack.c.b16 %v5586, %v5582
        %v5795 = vpack.c.b16 %v5587, %v5583
        %v5796 = vpack.c.b16 %v5592, %v5588
        %v5797 = vpack.c.b16 %v5593, %v5589
        %v5798 = vpack.c.b16 %v5594, %v5590
        %v5799 = vpack.c.b16 %v5595, %v5591
        %v5800 = vpack.c.b16 %v5600, %v5596
        %v5801 = vpack.c.b16 %v5601, %v5597
        %v5802 = vpack.c.b16 %v5602, %v5598
        %v5803 = vpack.c.b16 %v5603, %v5599
        %v5804 = vpack.c.b16 %v5608, %v5604
        %v5805 = vpack.c.b16 %v5609, %v5605
        %v5806 = vpack.c.b16 %v5610, %v5606
        %v5807 = vpack.c.b16 %v5611, %v5607
        %v5808 = vpack.c.b16 %v5616, %v5612
        %v5809 = vpack.c.b16 %v5617, %v5613
        %v5810 = vpack.c.b16 %v5618, %v5614
        %v5811 = vpack.c.b16 %v5619, %v5615
        %6004 = vmatpush.bf16.msra.mxu0 %v5648
        %6005 = vmatpush.bf16.msra.mxu0 %v5644
        %6006 = vmatpush.bf16.msra.mxu0 %v5640
        %6007 = vmatpush.bf16.msra.mxu0 %v5636
        %6008 = vmatpush.bf16.msra.mxu0 %v5632
        %6009 = vmatpush.bf16.msra.mxu0 %v5628
        %6010 = vmatpush.bf16.msra.mxu0 %v5624
        %6011 = vmatpush.bf16.msra.mxu0 %v5620
        %6012 = vmatmul.bf16.gmra.mxu0 %v524
        %v6013 = vpop.f32.mrf.mxu0
        %v6014 = vadd.f32 %v5040, %v6013
        %v6015 = vpop.f32.mrf.mxu0
        %6016 = vdwg.mxu0
        %6017 = vmatpush.bf16.msra.mxu0 %v5680
        %6018 = vmatpush.bf16.msra.mxu0 %v5676
        %6019 = vmatpush.bf16.msra.mxu0 %v5672
        %6020 = vmatpush.bf16.msra.mxu0 %v5668
        %6021 = vmatpush.bf16.msra.mxu0 %v5664
        %6022 = vmatpush.bf16.msra.mxu0 %v5660
        %6023 = vmatpush.bf16.msra.mxu0 %v5656
        %6024 = vmatpush.bf16.msra.mxu0 %v5652
        %6025 = vmatmul.bf16.gmra.mxu0 %v525
        %v6026 = vpop.f32.mrf.mxu0
        %v6027 = vadd.f32 %v6014, %v6026
        %v6028 = vpop.f32.mrf.mxu0
        %6029 = vdwg.mxu0
        %6030 = vmatpush.bf16.msra.mxu0 %v5712
        %6031 = vmatpush.bf16.msra.mxu0 %v5708
        %6032 = vmatpush.bf16.msra.mxu0 %v5704
        %6033 = vmatpush.bf16.msra.mxu0 %v5700
        %6034 = vmatpush.bf16.msra.mxu0 %v5696
        %6035 = vmatpush.bf16.msra.mxu0 %v5692
        %6036 = vmatpush.bf16.msra.mxu0 %v5688
        %6037 = vmatpush.bf16.msra.mxu0 %v5684
        %6038 = vmatmul.bf16.gmra.mxu0 %v526
        %v6039 = vpop.f32.mrf.mxu0
        %v6040 = vadd.f32 %v6027, %v6039
        %v6041 = vpop.f32.mrf.mxu0
        %6042 = vdwg.mxu0
        %6043 = vmatpush.bf16.msra.mxu0 %v5744
        %6044 = vmatpush.bf16.msra.mxu0 %v5740
        %6045 = vmatpush.bf16.msra.mxu0 %v5736
        %6046 = vmatpush.bf16.msra.mxu0 %v5732
        %6047 = vmatpush.bf16.msra.mxu0 %v5728
        %6048 = vmatpush.bf16.msra.mxu0 %v5724
        %6049 = vmatpush.bf16.msra.mxu0 %v5720
        %6050 = vmatpush.bf16.msra.mxu0 %v5716
        %6051 = vmatmul.bf16.gmra.mxu0 %v527
        %v6052 = vpop.f32.mrf.mxu0
        %v6053 = vadd.f32 %v6040, %v6052
        %v6054 = vpop.f32.mrf.mxu0
        %6055 = vdwg.mxu0
        %6056 = vmatpush.bf16.msra.mxu0 %v5776
        %6057 = vmatpush.bf16.msra.mxu0 %v5772
        %6058 = vmatpush.bf16.msra.mxu0 %v5768
        %6059 = vmatpush.bf16.msra.mxu0 %v5764
        %6060 = vmatpush.bf16.msra.mxu0 %v5760
        %6061 = vmatpush.bf16.msra.mxu0 %v5756
        %6062 = vmatpush.bf16.msra.mxu0 %v5752
        %6063 = vmatpush.bf16.msra.mxu0 %v5748
        %6064 = vmatmul.bf16.gmra.mxu0 %v528
        %v6065 = vpop.f32.mrf.mxu0
        %v6066 = vadd.f32 %v6053, %v6065
        %v6067 = vpop.f32.mrf.mxu0
        %6068 = vdwg.mxu0
        %6069 = vmatpush.bf16.msra.mxu0 %v5808
        %6070 = vmatpush.bf16.msra.mxu0 %v5804
        %6071 = vmatpush.bf16.msra.mxu0 %v5800
        %6072 = vmatpush.bf16.msra.mxu0 %v5796
        %6073 = vmatpush.bf16.msra.mxu0 %v5792
        %6074 = vmatpush.bf16.msra.mxu0 %v5788
        %6075 = vmatpush.bf16.msra.mxu0 %v5784
        %6076 = vmatpush.bf16.msra.mxu0 %v5780
        %6077 = vmatmul.bf16.gmra.mxu0 %v529
        %v6078 = vpop.f32.mrf.mxu0
        %v6079 = vadd.f32 %v6066, %v6078
        %v6080 = vpop.f32.mrf.mxu0
        %6081 = vdwg.mxu0
        %6082 = vmatpush.bf16.msra.mxu0 %v5649
        %6083 = vmatpush.bf16.msra.mxu0 %v5645
        %6084 = vmatpush.bf16.msra.mxu0 %v5641
        %6085 = vmatpush.bf16.msra.mxu0 %v5637
        %6086 = vmatpush.bf16.msra.mxu0 %v5633
        %6087 = vmatpush.bf16.msra.mxu0 %v5629
        %6088 = vmatpush.bf16.msra.mxu0 %v5625
        %6089 = vmatpush.bf16.msra.mxu0 %v5621
        %6090 = vmatmul.bf16.gmra.mxu0 %v524
        %v6091 = vpop.f32.mrf.mxu0
        %v6092 = vadd.f32 %v5041, %v6091
        %v6093 = vpop.f32.mrf.mxu0
        %6094 = vdwg.mxu0
        %6095 = vmatpush.bf16.msra.mxu0 %v5681
        %6096 = vmatpush.bf16.msra.mxu0 %v5677
        %6097 = vmatpush.bf16.msra.mxu0 %v5673
        %6098 = vmatpush.bf16.msra.mxu0 %v5669
        %6099 = vmatpush.bf16.msra.mxu0 %v5665
        %6100 = vmatpush.bf16.msra.mxu0 %v5661
        %6101 = vmatpush.bf16.msra.mxu0 %v5657
        %6102 = vmatpush.bf16.msra.mxu0 %v5653
        %6103 = vmatmul.bf16.gmra.mxu0 %v525
        %v6104 = vpop.f32.mrf.mxu0
        %v6105 = vadd.f32 %v6092, %v6104
        %v6106 = vpop.f32.mrf.mxu0
        %6107 = vdwg.mxu0
        %6108 = vmatpush.bf16.msra.mxu0 %v5713
        %6109 = vmatpush.bf16.msra.mxu0 %v5709
        %6110 = vmatpush.bf16.msra.mxu0 %v5705
        %6111 = vmatpush.bf16.msra.mxu0 %v5701
        %6112 = vmatpush.bf16.msra.mxu0 %v5697
        %6113 = vmatpush.bf16.msra.mxu0 %v5693
        %6114 = vmatpush.bf16.msra.mxu0 %v5689
        %6115 = vmatpush.bf16.msra.mxu0 %v5685
        %6116 = vmatmul.bf16.gmra.mxu0 %v526
        %v6117 = vpop.f32.mrf.mxu0
        %v6118 = vadd.f32 %v6105, %v6117
        %v6119 = vpop.f32.mrf.mxu0
        %6120 = vdwg.mxu0
        %6121 = vmatpush.bf16.msra.mxu0 %v5745
        %6122 = vmatpush.bf16.msra.mxu0 %v5741
        %6123 = vmatpush.bf16.msra.mxu0 %v5737
        %6124 = vmatpush.bf16.msra.mxu0 %v5733
        %6125 = vmatpush.bf16.msra.mxu0 %v5729
        %6126 = vmatpush.bf16.msra.mxu0 %v5725
        %6127 = vmatpush.bf16.msra.mxu0 %v5721
        %6128 = vmatpush.bf16.msra.mxu0 %v5717
        %6129 = vmatmul.bf16.gmra.mxu0 %v527
        %v6130 = vpop.f32.mrf.mxu0
        %v6131 = vadd.f32 %v6118, %v6130
        %v6132 = vpop.f32.mrf.mxu0
        %6133 = vdwg.mxu0
        %6134 = vmatpush.bf16.msra.mxu0 %v5777
        %6135 = vmatpush.bf16.msra.mxu0 %v5773
        %6136 = vmatpush.bf16.msra.mxu0 %v5769
        %6137 = vmatpush.bf16.msra.mxu0 %v5765
        %6138 = vmatpush.bf16.msra.mxu0 %v5761
        %6139 = vmatpush.bf16.msra.mxu0 %v5757
        %6140 = vmatpush.bf16.msra.mxu0 %v5753
        %6141 = vmatpush.bf16.msra.mxu0 %v5749
        %6142 = vmatmul.bf16.gmra.mxu0 %v528
        %v6143 = vpop.f32.mrf.mxu0
        %v6144 = vadd.f32 %v6131, %v6143
        %v6145 = vpop.f32.mrf.mxu0
        %6146 = vdwg.mxu0
        %6147 = vmatpush.bf16.msra.mxu0 %v5809
        %6148 = vmatpush.bf16.msra.mxu0 %v5805
        %6149 = vmatpush.bf16.msra.mxu0 %v5801
        %6150 = vmatpush.bf16.msra.mxu0 %v5797
        %6151 = vmatpush.bf16.msra.mxu0 %v5793
        %6152 = vmatpush.bf16.msra.mxu0 %v5789
        %6153 = vmatpush.bf16.msra.mxu0 %v5785
        %6154 = vmatpush.bf16.msra.mxu0 %v5781
        %6155 = vmatmul.bf16.gmra.mxu0 %v529
        %v6156 = vpop.f32.mrf.mxu0
        %v6157 = vadd.f32 %v6144, %v6156
        %v6158 = vpop.f32.mrf.mxu0
        %6159 = vdwg.mxu0
        %6160 = vmatpush.bf16.msra.mxu0 %v5650
        %6161 = vmatpush.bf16.msra.mxu0 %v5646
        %6162 = vmatpush.bf16.msra.mxu0 %v5642
        %6163 = vmatpush.bf16.msra.mxu0 %v5638
        %6164 = vmatpush.bf16.msra.mxu0 %v5634
        %6165 = vmatpush.bf16.msra.mxu0 %v5630
        %6166 = vmatpush.bf16.msra.mxu0 %v5626
        %6167 = vmatpush.bf16.msra.mxu0 %v5622
        %6168 = vmatmul.bf16.gmra.mxu0 %v524
        %v6169 = vpop.f32.mrf.mxu0
        %v6170 = vadd.f32 %v5042, %v6169
        %v6171 = vpop.f32.mrf.mxu0
        %6172 = vdwg.mxu0
        %6173 = vmatpush.bf16.msra.mxu0 %v5682
        %6174 = vmatpush.bf16.msra.mxu0 %v5678
        %6175 = vmatpush.bf16.msra.mxu0 %v5674
        %6176 = vmatpush.bf16.msra.mxu0 %v5670
        %6177 = vmatpush.bf16.msra.mxu0 %v5666
        %6178 = vmatpush.bf16.msra.mxu0 %v5662
        %6179 = vmatpush.bf16.msra.mxu0 %v5658
        %6180 = vmatpush.bf16.msra.mxu0 %v5654
        %6181 = vmatmul.bf16.gmra.mxu0 %v525
        %v6182 = vpop.f32.mrf.mxu0
        %v6183 = vadd.f32 %v6170, %v6182
        %v6184 = vpop.f32.mrf.mxu0
        %6185 = vdwg.mxu0
        %6186 = vmatpush.bf16.msra.mxu0 %v5714
        %6187 = vmatpush.bf16.msra.mxu0 %v5710
        %6188 = vmatpush.bf16.msra.mxu0 %v5706
        %6189 = vmatpush.bf16.msra.mxu0 %v5702
        %6190 = vmatpush.bf16.msra.mxu0 %v5698
        %6191 = vmatpush.bf16.msra.mxu0 %v5694
        %6192 = vmatpush.bf16.msra.mxu0 %v5690
        %6193 = vmatpush.bf16.msra.mxu0 %v5686
        %6194 = vmatmul.bf16.gmra.mxu0 %v526
        %v6195 = vpop.f32.mrf.mxu0
        %v6196 = vadd.f32 %v6183, %v6195
        %v6197 = vpop.f32.mrf.mxu0
        %6198 = vdwg.mxu0
        %6199 = vmatpush.bf16.msra.mxu0 %v5746
        %6200 = vmatpush.bf16.msra.mxu0 %v5742
        %6201 = vmatpush.bf16.msra.mxu0 %v5738
        %6202 = vmatpush.bf16.msra.mxu0 %v5734
        %6203 = vmatpush.bf16.msra.mxu0 %v5730
        %6204 = vmatpush.bf16.msra.mxu0 %v5726
        %6205 = vmatpush.bf16.msra.mxu0 %v5722
        %6206 = vmatpush.bf16.msra.mxu0 %v5718
        %6207 = vmatmul.bf16.gmra.mxu0 %v527
        %v6208 = vpop.f32.mrf.mxu0
        %v6209 = vadd.f32 %v6196, %v6208
        %v6210 = vpop.f32.mrf.mxu0
        %6211 = vdwg.mxu0
        %6212 = vmatpush.bf16.msra.mxu0 %v5778
        %6213 = vmatpush.bf16.msra.mxu0 %v5774
        %6214 = vmatpush.bf16.msra.mxu0 %v5770
        %6215 = vmatpush.bf16.msra.mxu0 %v5766
        %6216 = vmatpush.bf16.msra.mxu0 %v5762
        %6217 = vmatpush.bf16.msra.mxu0 %v5758
        %6218 = vmatpush.bf16.msra.mxu0 %v5754
        %6219 = vmatpush.bf16.msra.mxu0 %v5750
        %6220 = vmatmul.bf16.gmra.mxu0 %v528
        %v6221 = vpop.f32.mrf.mxu0
        %v6222 = vadd.f32 %v6209, %v6221
        %v6223 = vpop.f32.mrf.mxu0
        %6224 = vdwg.mxu0
        %6225 = vmatpush.bf16.msra.mxu0 %v5810
        %6226 = vmatpush.bf16.msra.mxu0 %v5806
        %6227 = vmatpush.bf16.msra.mxu0 %v5802
        %6228 = vmatpush.bf16.msra.mxu0 %v5798
        %6229 = vmatpush.bf16.msra.mxu0 %v5794
        %6230 = vmatpush.bf16.msra.mxu0 %v5790
        %6231 = vmatpush.bf16.msra.mxu0 %v5786
        %6232 = vmatpush.bf16.msra.mxu0 %v5782
        %6233 = vmatmul.bf16.gmra.mxu0 %v529
        %v6234 = vpop.f32.mrf.mxu0
        %v6235 = vadd.f32 %v6222, %v6234
        %v6236 = vpop.f32.mrf.mxu0
        %6237 = vdwg.mxu0
        %6238 = vmatpush.bf16.msra.mxu0 %v5651
        %6239 = vmatpush.bf16.msra.mxu0 %v5647
        %6240 = vmatpush.bf16.msra.mxu0 %v5643
        %6241 = vmatpush.bf16.msra.mxu0 %v5639
        %6242 = vmatpush.bf16.msra.mxu0 %v5635
        %6243 = vmatpush.bf16.msra.mxu0 %v5631
        %6244 = vmatpush.bf16.msra.mxu0 %v5627
        %6245 = vmatpush.bf16.msra.mxu0 %v5623
        %6246 = vmatmul.bf16.gmra.mxu0 %v524
        %v6247 = vpop.f32.mrf.mxu0
        %v6248 = vadd.f32 %v5043, %v6247
        %v6249 = vpop.f32.mrf.mxu0
        %6250 = vdwg.mxu0
        %6251 = vmatpush.bf16.msra.mxu0 %v5683
        %6252 = vmatpush.bf16.msra.mxu0 %v5679
        %6253 = vmatpush.bf16.msra.mxu0 %v5675
        %6254 = vmatpush.bf16.msra.mxu0 %v5671
        %6255 = vmatpush.bf16.msra.mxu0 %v5667
        %6256 = vmatpush.bf16.msra.mxu0 %v5663
        %6257 = vmatpush.bf16.msra.mxu0 %v5659
        %6258 = vmatpush.bf16.msra.mxu0 %v5655
        %6259 = vmatmul.bf16.gmra.mxu0 %v525
        %v6260 = vpop.f32.mrf.mxu0
        %v6261 = vadd.f32 %v6248, %v6260
        %v6262 = vpop.f32.mrf.mxu0
        %6263 = vdwg.mxu0
        %6264 = vmatpush.bf16.msra.mxu0 %v5715
        %6265 = vmatpush.bf16.msra.mxu0 %v5711
        %6266 = vmatpush.bf16.msra.mxu0 %v5707
        %6267 = vmatpush.bf16.msra.mxu0 %v5703
        %6268 = vmatpush.bf16.msra.mxu0 %v5699
        %6269 = vmatpush.bf16.msra.mxu0 %v5695
        %6270 = vmatpush.bf16.msra.mxu0 %v5691
        %6271 = vmatpush.bf16.msra.mxu0 %v5687
        %6272 = vmatmul.bf16.gmra.mxu0 %v526
        %v6273 = vpop.f32.mrf.mxu0
        %v6274 = vadd.f32 %v6261, %v6273
        %v6275 = vpop.f32.mrf.mxu0
        %6276 = vdwg.mxu0
        %6277 = vmatpush.bf16.msra.mxu0 %v5747
        %6278 = vmatpush.bf16.msra.mxu0 %v5743
        %6279 = vmatpush.bf16.msra.mxu0 %v5739
        %6280 = vmatpush.bf16.msra.mxu0 %v5735
        %6281 = vmatpush.bf16.msra.mxu0 %v5731
        %6282 = vmatpush.bf16.msra.mxu0 %v5727
        %6283 = vmatpush.bf16.msra.mxu0 %v5723
        %6284 = vmatpush.bf16.msra.mxu0 %v5719
        %6285 = vmatmul.bf16.gmra.mxu0 %v527
        %v6286 = vpop.f32.mrf.mxu0
        %v6287 = vadd.f32 %v6274, %v6286
        %v6288 = vpop.f32.mrf.mxu0
        %6289 = vdwg.mxu0
        %6290 = vmatpush.bf16.msra.mxu0 %v5779
        %6291 = vmatpush.bf16.msra.mxu0 %v5775
        %6292 = vmatpush.bf16.msra.mxu0 %v5771
        %6293 = vmatpush.bf16.msra.mxu0 %v5767
        %6294 = vmatpush.bf16.msra.mxu0 %v5763
        %6295 = vmatpush.bf16.msra.mxu0 %v5759
        %6296 = vmatpush.bf16.msra.mxu0 %v5755
        %6297 = vmatpush.bf16.msra.mxu0 %v5751
        %6298 = vmatmul.bf16.gmra.mxu0 %v528
        %v6299 = vpop.f32.mrf.mxu0
        %v6300 = vadd.f32 %v6287, %v6299
        %v6301 = vpop.f32.mrf.mxu0
        %6302 = vdwg.mxu0
        %6303 = vmatpush.bf16.msra.mxu0 %v5811
        %6304 = vmatpush.bf16.msra.mxu0 %v5807
        %6305 = vmatpush.bf16.msra.mxu0 %v5803
        %6306 = vmatpush.bf16.msra.mxu0 %v5799
        %6307 = vmatpush.bf16.msra.mxu0 %v5795
        %6308 = vmatpush.bf16.msra.mxu0 %v5791
        %6309 = vmatpush.bf16.msra.mxu0 %v5787
        %6310 = vmatpush.bf16.msra.mxu0 %v5783
        %6311 = vmatmul.bf16.gmra.mxu0 %v529
        %v6312 = vpop.f32.mrf.mxu0
        %v6313 = vadd.f32 %v6300, %v6312
        %v6314 = vpop.f32.mrf.mxu0
        %6315 = vdwg.mxu0
        %v6316 = vmax.f32 %v6079, 0.0
        %v6317 = vmax.f32 %v6157, 0.0
        %v6318 = vmax.f32 %v6235, 0.0
        %v6319 = vmax.f32 %v6313, 0.0
        %v6320 = vperm.slane %v305, 3
        %v6321 = vperm.slane %v305, 7
        %v6322 = vperm.slane %v306, 3
        %v6323 = vperm.slane %v306, 7
        %v6328 = vperm.slane %v6320, 3
        %v6329 = vperm.slane %v6321, 3
        %v6330 = vperm.slane %v6322, 3
        %v6331 = vperm.slane %v6323, 3
        %v6332 = vmul.f32 %v6316, %v6328
        %v6333 = vmul.f32 %v6317, %v6329
        %v6334 = vmul.f32 %v6318, %v6330
        %v6335 = vmul.f32 %v6319, %v6331
        %v6336 = vadd.f32 %v6332, %v6333
        %v6337 = vadd.f32 %v6336, %v6334
        %v6338 = vadd.f32 %v6337, %v6335
        %6339 = vadd.xlane.f32.xlu0 %v6338
        %v6340 = vpop.xlane.xlu0 %6339
        %v6342 = vlaneseq
        %v6343 = vand.u32 %v6342, 127
        %v6344 = vperm.slane %v1834, %v6343
        %v6347 = vperm.slane %v3336, %v6343
        %v6350 = vperm.slane %v4838, %v6343
        %v6353 = vperm.slane %v6340, %v6343
        %vm6355 = vcmask 1040384
        %v6356 = vsel %vm6355, %v6344, %v6347
        %vm6357 = vcmask 1041408
        %v6358 = vsel %vm6357, %v6356, %v6350
        %vm6359 = vcmask 1042432
        %v6360 = vsel %vm6359, %v6358, %v6353
        %6362 = vset.pattern.permute.xlu0 0
        %6363 = vperm.xlu0 %6362, %v308
        %v6364 = vpop.permute.xlu0 %6363
        %v6366 = vadd.f32 %v6360, %v6364
        %vm6367 = vcmask 60416
        %6368 = vst.msk [vmem:[%s293] sm:$0xf] %vm6367, %v6366
        %s6369 = sand.u32 %s142, 1
        %s6370 = scalar_lea.sflag [#allocation4], %s6369
        %s6371 = sand.u32 %s142, 1
        %s6372 = smul.addr %s6371, 4
        %s6373 = scalar_lea.vmem [#allocation10], %s6372
        // Predicated region
        $region57: #{tpu_custom_call.1} parent=39 // pred_check
          %p6374 = pneg %p152
        $region58: #{tpu_custom_call.1} parent=39 // pred_check_branch
          %6376 = sbr.rel (%p6374) target = $region60
        $region59: #{tpu_custom_call.1} parent=39 // pred_region
          %6378 = vsyncadd %s6370, 0
          %s6379 = smul.addr %s24, 4
          %s6380 = scalar_lea.hbm %s5, %s6379
          %s6382 = sshll.u32 %s6373, 4
          %s6383 = int_to_ptr.vmem [resolvable:$true] %s6382
          %s6384 = sshll.u32 %s6380, 4
          %s6385 = int_to_ptr.hbm [resolvable:$true] %s6384
          %6387 = dma.vmem_to_hbm [thread:$0]  %s6383, 64, %s6385, %s6370
        $region60: #{tpu_custom_call.1} parent=39 // pred_fallthru
          _
      $region40: #{tpu_custom_call.1} parent=5 // pred_fallthru
        _
      %p6388 = scmp.le.s32.totalorder 2, %s19
      // Predicated region
      $region61: #{tpu_custom_call.1} parent=5 // pred_check
        %p6389 = pneg %p6388
      $region62: #{tpu_custom_call.1} parent=5 // pred_check_branch
        %6391 = sbr.rel (%p6389) target = $region64
      $region63: #{tpu_custom_call.1} parent=5 // pred_region
        %s6392 = ssub.s32 %s19, 2
        // Predicated region
        $region65: #{tpu_custom_call.1} parent=63 // pred_check
          %p6393 = pneg %p158
        $region66: #{tpu_custom_call.1} parent=63 // pred_check_branch
          %6395 = sbr.rel (%p6393) target = $region68
        $region67: #{tpu_custom_call.1} parent=63 // pred_region
          %s6396 = sand.u32 %s143, 1
          %s6397 = scalar_lea.sflag [#allocation4], %s6396
          %s6398 = sand.u32 %s143, 1
          %s6399 = smul.addr %s6398, 4
          %s6400 = scalar_lea.vmem [#allocation10], %s6399
          %6402 = dma.done %s6397, 64
        $region68: #{tpu_custom_call.1} parent=63 // pred_fallthru
          _
      $region64: #{tpu_custom_call.1} parent=5 // pred_fallthru
        _
    $region6: #{tpu_custom_call.1} parent=1 // loop_footer
      %s23 = sadd.s32 1, %s19
    $region7: #{tpu_custom_call.1} parent=1 // loop_footer_branch
      %18 = sbr.rel target = $region3
    $region8: #{tpu_custom_call.1} parent=1 // loop_exit
      _
    %6403 = vsyncpa [#allocation3], 1
    %s6404 = scalar_lea.sflag [#allocation3], 1
    %6405 = vsyncpa %s6404, 1
    %6406 = vsyncpa [#allocation6], 1
    %s6407 = scalar_lea.sflag [#allocation6], 1
    %6408 = vsyncpa %s6407, 1
    %6409 = vsyncpa [#allocation9], 1
    %6410 = vsyncpa [#allocation4], 1
    %s6411 = scalar_lea.sflag [#allocation4], 1
    %6412 = vsyncpa %s6411, 1

</llo_original>
